<compile_context>
chip_gen: v7x
topology: tpu7x:2x2x1
jax: 0.10.0
libtpu: 0.0.40
codegen_flags: <defaults>
</compile_context>

<pallas_src>
import jax
import jax.numpy as jnp
from jax.experimental import pallas as pl
from jax.experimental.pallas import tpu as pltpu

EPS = 1e-5  # PyTorch BatchNorm2d default


# ----------------------------------------------------------------------------
# Small helpers
# ----------------------------------------------------------------------------
def _round_up(v, m):
    return (v + m - 1) // m * m


def _vmem_capacity_bytes():
    try:
        return int(getattr(pltpu.get_tpu_info(), "vmem_capacity_bytes",
                           64 * 1024 * 1024))
    except Exception:
        return 64 * 1024 * 1024


def _vmem_limit(footprint, cap):
    return int(min(int(0.9 * cap), max(32 * 1024 * 1024, 2 * int(footprint))))


def _fold_bn(gamma, beta, mean, var, eps=EPS):
    scale = gamma / jnp.sqrt(var + eps)
    bias = beta - mean * scale
    return scale, bias


def _prep_bias(bias_vec, cout_pad):
    return jnp.pad(bias_vec, (0, cout_pad - bias_vec.shape[0])
                   ).reshape(1, cout_pad).astype(jnp.float32)


def _prep_w_spatial(w_oihw, scale, cin_pad, cout_pad, dtype):
    """OIHW 3x3 weight -> (9, cin_pad, cout_pad), BN scale folded, tap-major."""
    cout, cin = w_oihw.shape[0], w_oihw.shape[1]
    w = jnp.transpose(w_oihw, (2, 3, 1, 0)).reshape(9, cin, cout)
    w = w * scale[None, None, :]
    w = jnp.pad(w, ((0, 0), (0, cin_pad - cin), (0, cout_pad - cout)))
    return w.astype(dtype)


def _prep_w_matmul(w_oihw, scale, cin_pad, cout_pad, dtype):
    """OIHW 3x3 weight -> (9*cin_pad, cout_pad) for the im2col matmul path."""
    w3 = _prep_w_spatial(w_oihw, scale, cin_pad, cout_pad, dtype)
    return w3.reshape(9 * cin_pad, cout_pad)


def _extract_patches_3x3(x_nhwc, stride):
    """(N*Ho*Wo, 9*C) im2col patches for a 3x3 / pad-1 conv (fallback path)."""
    N, H, W, C = x_nhwc.shape
    Ho = (H - 1) // stride + 1
    Wo = (W - 1) // stride + 1
    xp = jnp.pad(x_nhwc, ((0, 0), (1, 1), (1, 1), (0, 0)))
    taps = []
    for kh in range(3):
        for kw in range(3):
            sl = xp[:, kh:kh + stride * (Ho - 1) + 1:stride,
                       kw:kw + stride * (Wo - 1) + 1:stride, :]
            taps.append(sl.reshape(N * Ho * Wo, C))
    return jnp.concatenate(taps, axis=-1), (N, Ho, Wo)


# ----------------------------------------------------------------------------
# Kernel 1: spatial 3x3 stride-1 conv with in-kernel tap formation
# ----------------------------------------------------------------------------
def _make_spatial_kernel(apply_relu, mode):
    """out = relu?( sum_t tap_t @ W_t + bias [+ xs @ Ws | + residual] ).

    x_ref : (1, Ho+2, Wo8+2, C)  zero-padded NHWC image block (one batch item)
    w_ref : (9, C, tn)           conv weight, BN scale folded, tap-major
    b_ref : (1, tn)              f32 folded BN bias
    o_ref : (1, Ho, Wo8, tn)
    """
    def compute(x_ref, w_ref, b_ref, o_ref, xs_ref=None, ws_ref=None,
                res_ref=None):
        Ho, Wo8, tn = o_ref.shape[1], o_ref.shape[2], o_ref.shape[3]
        C = x_ref.shape[3]
        acc = jnp.zeros((Ho * Wo8, tn), jnp.float32)
        for t in range(9):
            kh, kw = divmod(t, 3)
            tap = x_ref[0, kh:kh + Ho, kw:kw + Wo8, :].reshape(Ho * Wo8, C)
            acc = acc + jnp.dot(tap, w_ref[t],
                                preferred_element_type=jnp.float32)
        acc = acc + b_ref[...].astype(jnp.float32)
        if mode == "proj":
            xs = xs_ref[0].reshape(Ho * Wo8, xs_ref.shape[3])
            acc = acc + jnp.dot(xs, ws_ref[...],
                                preferred_element_type=jnp.float32)
        elif mode == "res":
            acc = acc + res_ref[0].reshape(Ho * Wo8, tn).astype(jnp.float32)
        if apply_relu:
            acc = jnp.maximum(acc, 0.0)
        o_ref[0] = acc.reshape(Ho, Wo8, tn).astype(o_ref.dtype)

    if mode == "proj":
        def kernel(x_ref, w_ref, b_ref, xs_ref, ws_ref, o_ref):
            compute(x_ref, w_ref, b_ref, o_ref, xs_ref=xs_ref, ws_ref=ws_ref)
    elif mode == "res":
        def kernel(x_ref, w_ref, b_ref, res_ref, o_ref):
            compute(x_ref, w_ref, b_ref, o_ref, res_ref=res_ref)
    else:
        def kernel(x_ref, w_ref, b_ref, o_ref):
            compute(x_ref, w_ref, b_ref, o_ref)
    return kernel


def _spatial_footprint(Hp, Wp, C, Ho, Wo8, tn, dtype, mode, cs):
    ib = jnp.dtype(dtype).itemsize
    f = 2 * Hp * Wp * C * ib          # image block (double-buffered)
    f += 2 * 9 * C * tn * ib          # weights (budgeted double-buffered)
    f += 2 * tn * 4                   # bias
    f += 2 * Ho * Wo8 * tn * ib       # output block
    f += Ho * Wo8 * tn * 4            # f32 accumulator
    f += 2 * Ho * Wo8 * C * ib        # tap temporaries
    if mode == "proj":
        f += 2 * Ho * Wo8 * cs * ib + 2 * cs * tn * ib
    elif mode == "res":
        f += 2 * Ho * Wo8 * tn * ib
    return f


def _spatial_path_ok(Ho, Wo, cin_pad, cout_pad, dtype, mode, cs):
    Wo8 = _round_up(Wo, 8)
    tn = 256 if cout_pad % 256 == 0 else 128
    fp = _spatial_footprint(Ho + 2, Wo8 + 2, cin_pad, Ho, Wo8, tn, dtype,
                            mode, cs)
    return fp <= int(0.45 * _vmem_capacity_bytes())


def _spatial_conv(x_pad, w, b, *, relu, xs=None, ws=None, res=None):
    N, Hp, Wp, C = x_pad.shape
    Ho, Wo8 = Hp - 2, Wp - 2
    coutp = w.shape[2]
    tn = 256 if coutp % 256 == 0 else 128
    mode = "proj" if xs is not None else ("res" if res is not None else "none")
    kernel = _make_spatial_kernel(relu, mode)

    in_specs = [
        pl.BlockSpec((1, Hp, Wp, C), lambda n, j: (n, 0, 0, 0)),   # image
        pl.BlockSpec((9, C, tn), lambda n, j: (0, 0, j)),          # weights
        pl.BlockSpec((1, tn), lambda n, j: (0, j)),                # bias
    ]
    args = [x_pad, w, b]
    extra_k = 0
    if mode == "proj":
        cs = xs.shape[3]
        extra_k = cs
        in_specs += [
            pl.BlockSpec((1, Ho, Wo8, cs), lambda n, j: (n, 0, 0, 0)),
            pl.BlockSpec((cs, tn), lambda n, j: (0, j)),
        ]
        args += [xs, ws]
    elif mode == "res":
        in_specs.append(
            pl.BlockSpec((1, Ho, Wo8, tn), lambda n, j: (n, 0, 0, j)))
        args.append(res)

    out_dtype = x_pad.dtype
    cap = _vmem_capacity_bytes()
    fp = _spatial_footprint(Hp, Wp, C, Ho, Wo8, tn, out_dtype, mode, extra_k)
    flops = 2 * N * Ho * Wo8 * (9 * C + extra_k) * coutp
    nbytes = sum(int(a.size) * a.dtype.itemsize for a in args)
    nbytes += N * Ho * Wo8 * coutp * jnp.dtype(out_dtype).itemsize

    return pl.pallas_call(
        kernel,
        out_shape=jax.ShapeDtypeStruct((N, Ho, Wo8, coutp), out_dtype),
        grid=(N, coutp // tn),
        in_specs=in_specs,
        out_specs=pl.BlockSpec((1, Ho, Wo8, tn), lambda n, j: (n, 0, 0, j)),
        compiler_params=pltpu.CompilerParams(
            dimension_semantics=("parallel", "parallel"),
            vmem_limit_bytes=_vmem_limit(fp, cap)),
        cost_estimate=pl.CostEstimate(flops=int(flops), transcendentals=0,
                                      bytes_accessed=int(nbytes)),
    )(*args)


# ----------------------------------------------------------------------------
# Kernel 2: (M, K) @ (K, Coutp) patch matmul (stride-2 conv1 / VMEM fallback)
# ----------------------------------------------------------------------------
def _make_matmul_kernel(apply_relu, mode):
    def finish(acc, b_ref, o_ref):
        acc = acc + b_ref[...].astype(jnp.float32)
        if apply_relu:
            acc = jnp.maximum(acc, 0.0)
        o_ref[...] = acc.astype(o_ref.dtype)

    if mode == "proj":
        def kernel(x_ref, w_ref, b_ref, xs_ref, ws_ref, o_ref):
            acc = jnp.dot(x_ref[...], w_ref[...],
                          preferred_element_type=jnp.float32)
            acc = acc + jnp.dot(xs_ref[...], ws_ref[...],
                                preferred_element_type=jnp.float32)
            finish(acc, b_ref, o_ref)
    elif mode == "res":
        def kernel(x_ref, w_ref, b_ref, res_ref, o_ref):
            acc = jnp.dot(x_ref[...], w_ref[...],
                          preferred_element_type=jnp.float32)
            acc = acc + res_ref[...].astype(jnp.float32)
            finish(acc, b_ref, o_ref)
    else:
        def kernel(x_ref, w_ref, b_ref, o_ref):
            acc = jnp.dot(x_ref[...], w_ref[...],
                          preferred_element_type=jnp.float32)
            finish(acc, b_ref, o_ref)
    return kernel


def _matmul_conv(x2d, w, b, *, relu, xs=None, ws=None, res=None):
    M, K = x2d.shape
    coutp = w.shape[1]
    mode = "proj" if xs is not None else ("res" if res is not None else "none")
    cs = xs.shape[1] if xs is not None else 0
    cap = _vmem_capacity_bytes()
    budget = int(0.45 * cap)
    ib = x2d.dtype.itemsize

    def footprint(tm):
        f = 2 * tm * K * ib + 2 * K * coutp * ib + 2 * coutp * 4
        f += 2 * tm * coutp * ib + tm * coutp * 4
        if mode == "proj":
            f += 2 * tm * cs * ib + 2 * cs * coutp * ib
        elif mode == "res":
            f += 2 * tm * coutp * ib
        return f

    tm_even = tm_any = tm_small = None
    for c in (1024, 512, 256, 128, 64, 32, 16, 8):
        if c <= M and M % c == 0:
            tm_small = c
            if footprint(c) <= budget:
                if tm_any is None:
                    tm_any = c
                steps = M // c
                if tm_even is None and steps >= 2 and steps % 2 == 0:
                    tm_even = c
    tm = tm_even or tm_any or tm_small or M

    kernel = _make_matmul_kernel(relu, mode)
    in_specs = [
        pl.BlockSpec((tm, K), lambda i: (i, 0)),
        pl.BlockSpec((K, coutp), lambda i: (0, 0)),
        pl.BlockSpec((1, coutp), lambda i: (0, 0)),
    ]
    args = [x2d, w, b]
    if mode == "proj":
        in_specs += [pl.BlockSpec((tm, cs), lambda i: (i, 0)),
                     pl.BlockSpec((cs, coutp), lambda i: (0, 0))]
        args += [xs, ws]
    elif mode == "res":
        in_specs.append(pl.BlockSpec((tm, coutp), lambda i: (i, 0)))
        args.append(res)

    flops = 2 * M * (K + cs) * coutp
    nbytes = sum(int(a.size) * a.dtype.itemsize for a in args)
    nbytes += M * coutp * x2d.dtype.itemsize

    return pl.pallas_call(
        kernel,
        out_shape=jax.ShapeDtypeStruct((M, coutp), x2d.dtype),
        grid=(M // tm,),
        in_specs=in_specs,
        out_specs=pl.BlockSpec((tm, coutp), lambda i: (i, 0)),
        compiler_params=pltpu.CompilerParams(
            dimension_semantics=("parallel",),
            vmem_limit_bytes=_vmem_limit(footprint(tm), cap)),
        cost_estimate=pl.CostEstimate(flops=int(flops), transcendentals=0,
                                      bytes_accessed=int(nbytes)),
    )(*args)


# ----------------------------------------------------------------------------
# conv3x3 + folded BN (+ shortcut/residual) (+ ReLU) dispatcher
# ----------------------------------------------------------------------------
def _conv3x3(x_valid, w_oihw, scale, bias_vec, *, stride, cin_pad, cout_pad,
             relu, dtype, xs=None, ws=None, res=None):
    """Returns (N, Ho, Wo8, cout_pad).  Columns >= Wo are alignment padding
    (may be junk); channels >= real Cout are exact zeros."""
    N, H, W, C = x_valid.shape
    Ho = (H - 1) // stride + 1
    Wo = (W - 1) // stride + 1
    Wo8 = _round_up(Wo, 8)
    b = _prep_bias(bias_vec, cout_pad)
    mode = "proj" if xs is not None else ("res" if res is not None else "none")
    cs = xs.shape[-1] if xs is not None else 0

    if stride == 1 and _spatial_path_ok(Ho, Wo, cin_pad, cout_pad, dtype,
                                        mode, cs):
        w = _prep_w_spatial(w_oihw, scale, cin_pad, cout_pad, dtype)
        xp = jnp.pad(x_valid.astype(dtype),
                     ((0, 0), (1, 1), (1, 1 + Wo8 - W), (0, cin_pad - C)))
        xs_p = ws_p = res_p = None
        if mode == "proj":
            xs_p = jnp.pad(xs.astype(dtype),
                           ((0, 0), (0, 0), (0, Wo8 - Wo), (0, 0)))
            ws_p = ws.astype(dtype)
        elif mode == "res":
            res_p = jnp.pad(res.astype(dtype),
                            ((0, 0), (0, 0), (0, Wo8 - Wo),
                             (0, cout_pad - res.shape[-1])))
        return _spatial_conv(xp, w, b, relu=relu, xs=xs_p, ws=ws_p, res=res_p)

    # Fallback: wrapper-side im2col + one big matmul (stride-2 conv1, or
    # images too large to keep resident in VMEM).
    # TODO(synk): a 4-phase decomposition of the strided input would let the
    #   spatial kernel handle stride-2 as well and cut this im2col traffic.
    xv = jnp.pad(x_valid.astype(dtype),
                 ((0, 0), (0, 0), (0, 0), (0, cin_pad - C)))
    patches, _ = _extract_patches_3x3(xv, stride)
    wm = _prep_w_matmul(w_oihw, scale, cin_pad, cout_pad, dtype)
    M = patches.shape[0]
    xs2 = ws2 = res2 = None
    if mode == "proj":
        xs2 = xs.astype(dtype).reshape(M, cs)
        ws2 = ws.astype(dtype)
    elif mode == "res":
        res2 = jnp.pad(res.astype(dtype),
                       ((0, 0), (0, 0), (0, 0),
                        (0, cout_pad - res.shape[-1]))).reshape(M, cout_pad)
    out2d = _matmul_conv(patches, wm, b, relu=relu, xs=xs2, ws=ws2, res=res2)
    out = out2d.reshape(N, Ho, Wo, cout_pad)
    if Wo8 != Wo:
        out = jnp.pad(out, ((0, 0), (0, 0), (0, Wo8 - Wo), (0, 0)))
    return out


# ----------------------------------------------------------------------------
# BasicBlock forward (eval-mode BN)
# ----------------------------------------------------------------------------
def basic_block_forward(x_nchw, params, stride, compute_dtype=jnp.float32):
    x = jnp.transpose(x_nchw, (0, 2, 3, 1))            # NCHW -> NHWC
    N, H, W, cin = x.shape
    planes = params["conv1_w"].shape[0]
    coutp = _round_up(planes, 128)
    Ho = (H - 1) // stride + 1
    Wo = (W - 1) // stride + 1

    xc = x.astype(compute_dtype)                        # cast before any pads
    s1, b1 = _fold_bn(*params["bn1"])
    s2, b2 = _fold_bn(*params["bn2"])

    # ---- conv1 (3x3, stride) + bn1 + relu --------------------------------
    out1 = _conv3x3(xc, params["conv1_w"], s1, b1, stride=stride,
                    cin_pad=cin, cout_pad=coutp, relu=True,
                    dtype=compute_dtype)
    out1 = out1[:, :, :Wo, :]            # drop W-alignment junk columns

    # ---- conv2 (3x3, stride 1) + bn2 + shortcut + relu -------------------
    if stride != 1 or cin != planes:
        ss, bs = _fold_bn(*params["sc_bn"])
        ws = params["sc_conv_w"][:, :, 0, 0].T * ss[None, :]      # (cin, planes)
        ws = jnp.pad(ws, ((0, 0), (0, coutp - planes)))
        xs = xc[:, ::stride, ::stride, :]                         # (N, Ho, Wo, cin)
        out = _conv3x3(out1, params["conv2_w"], s2, b2 + bs, stride=1,
                       cin_pad=coutp, cout_pad=coutp, relu=True,
                       dtype=compute_dtype, xs=xs, ws=ws)
    else:
        out = _conv3x3(out1, params["conv2_w"], s2, b2, stride=1,
                       cin_pad=coutp, cout_pad=coutp, relu=True,
                       dtype=compute_dtype, res=xc)

    out = out[:, :, :Wo, :planes]
    return jnp.transpose(out, (0, 3, 1, 2)).astype(x_nchw.dtype)  # -> NCHW


# ----------------------------------------------------------------------------
# Pure-JAX reference for verification
# ----------------------------------------------------------------------------
def reference_forward(x, params, stride):
    def conv(inp, w, s, pad):
        return jax.lax.conv_general_dilated(
            inp, w, (s, s), [(pad, pad), (pad, pad)],
            dimension_numbers=("NCHW", "OIHW", "NCHW"))

    def bn(inp, gamma, beta, mean, var):
        inv = 1.0 / jnp.sqrt(var + EPS)
        return ((inp - mean[None, :, None, None]) * inv[None, :, None, None]
                * gamma[None, :, None, None] + beta[None, :, None, None])

    out = jax.nn.relu(bn(conv(x, params["conv1_w"], stride, 1), *params["bn1"]))
    out = bn(conv(out, params["conv2_w"], 1, 1), *params["bn2"])
    planes = params["conv1_w"].shape[0]
    if stride != 1 or x.shape[1] != planes:
        sc = bn(conv(x, params["sc_conv_w"], stride, 0), *params["sc_bn"])
    else:
        sc = x
    return jax.nn.relu(out + sc)


# ----------------------------------------------------------------------------
# Deterministic parameter construction (PyTorch OIHW weight layout)
# ----------------------------------------------------------------------------
def make_params(key, in_planes, planes, stride):
    ks = jax.random.split(key, 16)

    def bn_params(k0, k1, k2, k3, c):
        gamma = jax.random.uniform(k0, (c,), jnp.float32, 0.5, 1.5)
        beta = 0.1 * jax.random.normal(k1, (c,), jnp.float32)
        mean = 0.1 * jax.random.normal(k2, (c,), jnp.float32)
        var = jax.random.uniform(k3, (c,), jnp.float32, 0.5, 1.5)
        return (gamma, beta, mean, var)

    params = {
        "conv1_w": 0.1 * jax.random.normal(
            ks[0], (planes, in_planes, 3, 3), jnp.float32),
        "bn1": bn_params(ks[1], ks[2], ks[3], ks[4], planes),
        "conv2_w": 0.1 * jax.random.normal(
            ks[5], (planes, planes, 3, 3), jnp.float32),
        "bn2": bn_params(ks[6], ks[7], ks[8], ks[9], planes),
    }
    if stride != 1 or in_planes != planes:
        params["sc_conv_w"] = 0.1 * jax.random.normal(
            ks[10], (planes, in_planes, 1, 1), jnp.float32)
        params["sc_bn"] = bn_params(ks[11], ks[12], ks[13], ks[14], planes)
    return params


if __name__ == "__main__":
    key = jax.random.PRNGKey(0)
    kx, kp1, kp2 = jax.random.split(key, 3)

    # input in PyTorch NCHW convention
    x = jax.random.normal(kx, (2, 4, 16, 16), jnp.float32)

    # case 1: identity shortcut (stride=1, in_planes == planes) -- fp32
    params1 = make_params(kp1, in_planes=4, planes=4, stride=1)
    out1 = jax.block_until_ready(basic_block_forward(x, params1, stride=1))
    ref1 = reference_forward(x, params1, 1)
    assert out1.shape == (2, 4, 16, 16)
    assert jnp.allclose(out1, ref1, atol=1e-4, rtol=1e-4), "mismatch (stride=1)"

    # case 2: projection shortcut (stride=2, 4 -> 8 channels) -- fp32
    params2 = make_params(kp2, in_planes=4, planes=8, stride=2)
    out2 = jax.block_until_ready(basic_block_forward(x, params2, stride=2))
    ref2 = reference_forward(x, params2, 2)
    assert out2.shape == (2, 8, 8, 8)
    assert jnp.allclose(out2, ref2, atol=1e-4, rtol=1e-4), "mismatch (stride=2)"

    # bf16 data-movement path (fp32 MXU accumulation) -- looser tolerance
    out1_bf = jax.block_until_ready(
        basic_block_forward(x, params1, 1, compute_dtype=jnp.bfloat16))
    out2_bf = jax.block_until_ready(
        basic_block_forward(x, params2, 2, compute_dtype=jnp.bfloat16))
    assert jnp.allclose(out1_bf, ref1, atol=2e-1, rtol=2e-1), \
        "bf16 mismatch (stride=1)"
    assert jnp.allclose(out2_bf, ref2, atol=2e-1, rtol=2e-1), \
        "bf16 mismatch (stride=2)"

    print("KERNEL_OK")
</pallas_src>

<mosaic_0001>
module attributes {stable_mosaic.version = 11 : i64} {
  func.func @kernel(%arg0: i32, %arg1: i32, %arg2: memref<1x18x18x4xf32, #tpu.memory_space<vmem>>, %arg3: memref<9x4x128xf32, #tpu.memory_space<vmem>>, %arg4: memref<1x128xf32, #tpu.memory_space<vmem>>, %arg5: memref<1x16x16x128xf32, #tpu.memory_space<vmem>>) attributes {dimension_semantics = [#tpu.dimension_semantics<parallel>, #tpu.dimension_semantics<parallel>], iteration_bounds = array<i64: 2, 1>, scalar_prefetch = 0 : i64, scratch_operands = 0 : i64, tpu.core_type = #tpu.core_type<tc>, window_params = [{transform_indices = @transform_0, window_bounds = array<i64: 1, 18, 18, 4>}, {transform_indices = @transform_1, window_bounds = array<i64: 9, 4, 128>}, {transform_indices = @transform_2, window_bounds = array<i64: 1, 128>}, {transform_indices = @transform_3, window_bounds = array<i64: 1, 16, 16, 128>}]} {
    %cst = arith.constant 0.000000e+00 : f32
    %0 = vector.broadcast %cst : f32 to vector<256x128xf32>
    %c0 = arith.constant 0 : index
    %c0_0 = arith.constant 0 : index
    %c0_1 = arith.constant 0 : index
    %c0_2 = arith.constant 0 : index
    %1 = vector.load %arg2[%c0, %c0_0, %c0_1, %c0_2] : memref<1x18x18x4xf32, #tpu.memory_space<vmem>>, vector<1x16x16x4xf32>
    %2 = vector.shape_cast %1 : vector<1x16x16x4xf32> to vector<16x16x4xf32>
    %3 = vector.shape_cast %2 : vector<16x16x4xf32> to vector<256x4xf32>
    %c0_3 = arith.constant 0 : index
    %c0_4 = arith.constant 0 : index
    %c0_5 = arith.constant 0 : index
    %4 = vector.load %arg3[%c0_3, %c0_4, %c0_5] : memref<9x4x128xf32, #tpu.memory_space<vmem>>, vector<1x4x128xf32>
    %5 = vector.shape_cast %4 : vector<1x4x128xf32> to vector<4x128xf32>
    %cst_6 = arith.constant dense<0.000000e+00> : vector<256x128xf32>
    %6 = tpu.matmul %3, %5, %cst_6 {dimension_numbers = #tpu.dot_dimension_numbers<[1], [0], [0], [1], [0, 0, 1, 1], [], []>} : vector<256x4xf32>, vector<4x128xf32>, vector<256x128xf32> -> vector<256x128xf32>
    %7 = arith.addf %0, %6 : vector<256x128xf32>
    %c0_7 = arith.constant 0 : index
    %c0_8 = arith.constant 0 : index
    %c1 = arith.constant 1 : index
    %c0_9 = arith.constant 0 : index
    %8 = vector.load %arg2[%c0_7, %c0_8, %c1, %c0_9] : memref<1x18x18x4xf32, #tpu.memory_space<vmem>>, vector<1x16x16x4xf32>
    %9 = vector.shape_cast %8 : vector<1x16x16x4xf32> to vector<16x16x4xf32>
    %10 = vector.shape_cast %9 : vector<16x16x4xf32> to vector<256x4xf32>
    %c1_10 = arith.constant 1 : index
    %c0_11 = arith.constant 0 : index
    %c0_12 = arith.constant 0 : index
    %11 = vector.load %arg3[%c1_10, %c0_11, %c0_12] : memref<9x4x128xf32, #tpu.memory_space<vmem>>, vector<1x4x128xf32>
    %12 = vector.shape_cast %11 : vector<1x4x128xf32> to vector<4x128xf32>
    %cst_13 = arith.constant dense<0.000000e+00> : vector<256x128xf32>
    %13 = tpu.matmul %10, %12, %cst_13 {dimension_numbers = #tpu.dot_dimension_numbers<[1], [0], [0], [1], [0, 0, 1, 1], [], []>} : vector<256x4xf32>, vector<4x128xf32>, vector<256x128xf32> -> vector<256x128xf32>
    %14 = arith.addf %7, %13 : vector<256x128xf32>
    %c0_14 = arith.constant 0 : index
    %c0_15 = arith.constant 0 : index
    %c2 = arith.constant 2 : index
    %c0_16 = arith.constant 0 : index
    %15 = vector.load %arg2[%c0_14, %c0_15, %c2, %c0_16] : memref<1x18x18x4xf32, #tpu.memory_space<vmem>>, vector<1x16x16x4xf32>
    %16 = vector.shape_cast %15 : vector<1x16x16x4xf32> to vector<16x16x4xf32>
    %17 = vector.shape_cast %16 : vector<16x16x4xf32> to vector<256x4xf32>
    %c2_17 = arith.constant 2 : index
    %c0_18 = arith.constant 0 : index
    %c0_19 = arith.constant 0 : index
    %18 = vector.load %arg3[%c2_17, %c0_18, %c0_19] : memref<9x4x128xf32, #tpu.memory_space<vmem>>, vector<1x4x128xf32>
    %19 = vector.shape_cast %18 : vector<1x4x128xf32> to vector<4x128xf32>
    %cst_20 = arith.constant dense<0.000000e+00> : vector<256x128xf32>
    %20 = tpu.matmul %17, %19, %cst_20 {dimension_numbers = #tpu.dot_dimension_numbers<[1], [0], [0], [1], [0, 0, 1, 1], [], []>} : vector<256x4xf32>, vector<4x128xf32>, vector<256x128xf32> -> vector<256x128xf32>
    %21 = arith.addf %14, %20 : vector<256x128xf32>
    %c0_21 = arith.constant 0 : index
    %c1_22 = arith.constant 1 : index
    %c0_23 = arith.constant 0 : index
    %c0_24 = arith.constant 0 : index
    %22 = vector.load %arg2[%c0_21, %c1_22, %c0_23, %c0_24] : memref<1x18x18x4xf32, #tpu.memory_space<vmem>>, vector<1x16x16x4xf32>
    %23 = vector.shape_cast %22 : vector<1x16x16x4xf32> to vector<16x16x4xf32>
    %24 = vector.shape_cast %23 : vector<16x16x4xf32> to vector<256x4xf32>
    %c3 = arith.constant 3 : index
    %c0_25 = arith.constant 0 : index
    %c0_26 = arith.constant 0 : index
    %25 = vector.load %arg3[%c3, %c0_25, %c0_26] : memref<9x4x128xf32, #tpu.memory_space<vmem>>, vector<1x4x128xf32>
    %26 = vector.shape_cast %25 : vector<1x4x128xf32> to vector<4x128xf32>
    %cst_27 = arith.constant dense<0.000000e+00> : vector<256x128xf32>
    %27 = tpu.matmul %24, %26, %cst_27 {dimension_numbers = #tpu.dot_dimension_numbers<[1], [0], [0], [1], [0, 0, 1, 1], [], []>} : vector<256x4xf32>, vector<4x128xf32>, vector<256x128xf32> -> vector<256x128xf32>
    %28 = arith.addf %21, %27 : vector<256x128xf32>
    %c0_28 = arith.constant 0 : index
    %c1_29 = arith.constant 1 : index
    %c1_30 = arith.constant 1 : index
    %c0_31 = arith.constant 0 : index
    %29 = vector.load %arg2[%c0_28, %c1_29, %c1_30, %c0_31] : memref<1x18x18x4xf32, #tpu.memory_space<vmem>>, vector<1x16x16x4xf32>
    %30 = vector.shape_cast %29 : vector<1x16x16x4xf32> to vector<16x16x4xf32>
    %31 = vector.shape_cast %30 : vector<16x16x4xf32> to vector<256x4xf32>
    %c4 = arith.constant 4 : index
    %c0_32 = arith.constant 0 : index
    %c0_33 = arith.constant 0 : index
    %32 = vector.load %arg3[%c4, %c0_32, %c0_33] : memref<9x4x128xf32, #tpu.memory_space<vmem>>, vector<1x4x128xf32>
    %33 = vector.shape_cast %32 : vector<1x4x128xf32> to vector<4x128xf32>
    %cst_34 = arith.constant dense<0.000000e+00> : vector<256x128xf32>
    %34 = tpu.matmul %31, %33, %cst_34 {dimension_numbers = #tpu.dot_dimension_numbers<[1], [0], [0], [1], [0, 0, 1, 1], [], []>} : vector<256x4xf32>, vector<4x128xf32>, vector<256x128xf32> -> vector<256x128xf32>
    %35 = arith.addf %28, %34 : vector<256x128xf32>
    %c0_35 = arith.constant 0 : index
    %c1_36 = arith.constant 1 : index
    %c2_37 = arith.constant 2 : index
    %c0_38 = arith.constant 0 : index
    %36 = vector.load %arg2[%c0_35, %c1_36, %c2_37, %c0_38] : memref<1x18x18x4xf32, #tpu.memory_space<vmem>>, vector<1x16x16x4xf32>
    %37 = vector.shape_cast %36 : vector<1x16x16x4xf32> to vector<16x16x4xf32>
    %38 = vector.shape_cast %37 : vector<16x16x4xf32> to vector<256x4xf32>
    %c5 = arith.constant 5 : index
    %c0_39 = arith.constant 0 : index
    %c0_40 = arith.constant 0 : index
    %39 = vector.load %arg3[%c5, %c0_39, %c0_40] : memref<9x4x128xf32, #tpu.memory_space<vmem>>, vector<1x4x128xf32>
    %40 = vector.shape_cast %39 : vector<1x4x128xf32> to vector<4x128xf32>
    %cst_41 = arith.constant dense<0.000000e+00> : vector<256x128xf32>
    %41 = tpu.matmul %38, %40, %cst_41 {dimension_numbers = #tpu.dot_dimension_numbers<[1], [0], [0], [1], [0, 0, 1, 1], [], []>} : vector<256x4xf32>, vector<4x128xf32>, vector<256x128xf32> -> vector<256x128xf32>
    %42 = arith.addf %35, %41 : vector<256x128xf32>
    %c0_42 = arith.constant 0 : index
    %c2_43 = arith.constant 2 : index
    %c0_44 = arith.constant 0 : index
    %c0_45 = arith.constant 0 : index
    %43 = vector.load %arg2[%c0_42, %c2_43, %c0_44, %c0_45] : memref<1x18x18x4xf32, #tpu.memory_space<vmem>>, vector<1x16x16x4xf32>
    %44 = vector.shape_cast %43 : vector<1x16x16x4xf32> to vector<16x16x4xf32>
    %45 = vector.shape_cast %44 : vector<16x16x4xf32> to vector<256x4xf32>
    %c6 = arith.constant 6 : index
    %c0_46 = arith.constant 0 : index
    %c0_47 = arith.constant 0 : index
    %46 = vector.load %arg3[%c6, %c0_46, %c0_47] : memref<9x4x128xf32, #tpu.memory_space<vmem>>, vector<1x4x128xf32>
    %47 = vector.shape_cast %46 : vector<1x4x128xf32> to vector<4x128xf32>
    %cst_48 = arith.constant dense<0.000000e+00> : vector<256x128xf32>
    %48 = tpu.matmul %45, %47, %cst_48 {dimension_numbers = #tpu.dot_dimension_numbers<[1], [0], [0], [1], [0, 0, 1, 1], [], []>} : vector<256x4xf32>, vector<4x128xf32>, vector<256x128xf32> -> vector<256x128xf32>
    %49 = arith.addf %42, %48 : vector<256x128xf32>
    %c0_49 = arith.constant 0 : index
    %c2_50 = arith.constant 2 : index
    %c1_51 = arith.constant 1 : index
    %c0_52 = arith.constant 0 : index
    %50 = vector.load %arg2[%c0_49, %c2_50, %c1_51, %c0_52] : memref<1x18x18x4xf32, #tpu.memory_space<vmem>>, vector<1x16x16x4xf32>
    %51 = vector.shape_cast %50 : vector<1x16x16x4xf32> to vector<16x16x4xf32>
    %52 = vector.shape_cast %51 : vector<16x16x4xf32> to vector<256x4xf32>
    %c7 = arith.constant 7 : index
    %c0_53 = arith.constant 0 : index
    %c0_54 = arith.constant 0 : index
    %53 = vector.load %arg3[%c7, %c0_53, %c0_54] : memref<9x4x128xf32, #tpu.memory_space<vmem>>, vector<1x4x128xf32>
    %54 = vector.shape_cast %53 : vector<1x4x128xf32> to vector<4x128xf32>
    %cst_55 = arith.constant dense<0.000000e+00> : vector<256x128xf32>
    %55 = tpu.matmul %52, %54, %cst_55 {dimension_numbers = #tpu.dot_dimension_numbers<[1], [0], [0], [1], [0, 0, 1, 1], [], []>} : vector<256x4xf32>, vector<4x128xf32>, vector<256x128xf32> -> vector<256x128xf32>
    %56 = arith.addf %49, %55 : vector<256x128xf32>
    %c0_56 = arith.constant 0 : index
    %c2_57 = arith.constant 2 : index
    %c2_58 = arith.constant 2 : index
    %c0_59 = arith.constant 0 : index
    %57 = vector.load %arg2[%c0_56, %c2_57, %c2_58, %c0_59] : memref<1x18x18x4xf32, #tpu.memory_space<vmem>>, vector<1x16x16x4xf32>
    %58 = vector.shape_cast %57 : vector<1x16x16x4xf32> to vector<16x16x4xf32>
    %59 = vector.shape_cast %58 : vector<16x16x4xf32> to vector<256x4xf32>
    %c8 = arith.constant 8 : index
    %c0_60 = arith.constant 0 : index
    %c0_61 = arith.constant 0 : index
    %60 = vector.load %arg3[%c8, %c0_60, %c0_61] : memref<9x4x128xf32, #tpu.memory_space<vmem>>, vector<1x4x128xf32>
    %61 = vector.shape_cast %60 : vector<1x4x128xf32> to vector<4x128xf32>
    %cst_62 = arith.constant dense<0.000000e+00> : vector<256x128xf32>
    %62 = tpu.matmul %59, %61, %cst_62 {dimension_numbers = #tpu.dot_dimension_numbers<[1], [0], [0], [1], [0, 0, 1, 1], [], []>} : vector<256x4xf32>, vector<4x128xf32>, vector<256x128xf32> -> vector<256x128xf32>
    %63 = arith.addf %56, %62 : vector<256x128xf32>
    %c0_63 = arith.constant 0 : index
    %c0_64 = arith.constant 0 : index
    %64 = vector.load %arg4[%c0_63, %c0_64] : memref<1x128xf32, #tpu.memory_space<vmem>>, vector<1x128xf32>
    %65 = vector.broadcast %64 : vector<1x128xf32> to vector<256x128xf32>
    %66 = arith.addf %63, %65 : vector<256x128xf32>
    %cst_65 = arith.constant 0.000000e+00 : f32
    %67 = vector.broadcast %cst_65 : f32 to vector<256x128xf32>
    %68 = arith.maximumf %66, %67 : vector<256x128xf32>
    %69 = vector.shape_cast %68 : vector<256x128xf32> to vector<16x16x128xf32>
    %c0_66 = arith.constant 0 : index
    %c0_67 = arith.constant 0 : index
    %c0_68 = arith.constant 0 : index
    %c0_69 = arith.constant 0 : index
    %70 = vector.load %arg5[%c0_66, %c0_67, %c0_68, %c0_69] : memref<1x16x16x128xf32, #tpu.memory_space<vmem>>, vector<1x16x16x128xf32>
    %71 = vector.shape_cast %70 : vector<1x16x16x128xf32> to vector<16x16x128xf32>
    %72 = vector.shape_cast %69 : vector<16x16x128xf32> to vector<1x16x16x128xf32>
    tpu.vector_store %arg5[%c0_66, %c0_67, %c0_68, %c0_69], %72 {strides = array<i32>} : memref<1x16x16x128xf32, #tpu.memory_space<vmem>>, vector<1x16x16x128xf32>,
    return
  }
  func.func @transform_0(%arg0: i32, %arg1: i32) -> (i32, i32, i32, i32) {
    %c0_i32 = arith.constant 0 : i32
    %c0_i32_0 = arith.constant 0 : i32
    %c0_i32_1 = arith.constant 0 : i32
    %c0_i32_2 = arith.constant 0 : i32
    return %arg0, %c0_i32, %c0_i32_0, %c0_i32_1 : i32, i32, i32, i32
  }
  func.func @transform_1(%arg0: i32, %arg1: i32) -> (i32, i32, i32) {
    %c0_i32 = arith.constant 0 : i32
    %c0_i32_0 = arith.constant 0 : i32
    %c0_i32_1 = arith.constant 0 : i32
    return %c0_i32, %c0_i32_0, %arg1 : i32, i32, i32
  }
  func.func @transform_2(%arg0: i32, %arg1: i32) -> (i32, i32) {
    %c0_i32 = arith.constant 0 : i32
    %c0_i32_0 = arith.constant 0 : i32
    return %c0_i32, %arg1 : i32, i32
  }
  func.func @transform_3(%arg0: i32, %arg1: i32) -> (i32, i32, i32, i32) {
    %c0_i32 = arith.constant 0 : i32
    %c0_i32_0 = arith.constant 0 : i32
    %c0_i32_1 = arith.constant 0 : i32
    return %arg0, %c0_i32, %c0_i32_0, %arg1 : i32, i32, i32, i32
  }
}

</mosaic_0001>

<llo_original>
// kernel: tpu_custom_call.1
$region0: #{tpu_custom_call.1}
  #allocation0 [shape = 'u32[]', space=smem, size = 0x4, offset = 0x4, fixed_abs, tag = 'smem constant byte address 0x4 - core index']
  #allocation1 [shape = 'u32[144,128]{1,0:T(1,128)}', space=vmem, size = 0x12000, scoped, tag = 'internal scratch']
  %s0 = inlined_call_operand.vmem [shape: f32[2,18,18,4], index: 0, kind: input, shape index: {}]
  %s1 = inlined_call_operand.vmem [shape: f32[9,4,128], index: 1, kind: input, shape index: {}]
  %s2 = inlined_call_operand.vmem [shape: f32[1,128], index: 2, kind: input, shape index: {}]
  %s3 = inlined_call_operand.hbm [shape: f32[2,16,16,128], index: 3, kind: output, shape index: {}]
  %s4 = sld [smem:[#allocation0]]
  $region45: #{tpu_custom_call.1} parent=0
    _
  %s6 = ssub.s32 1, %s4
  %s7 = scalar_select 0, %s6, %s4
  $region1: #{tpu_custom_call.1} parent=0
    #allocation2 [shape = 'u8[262144]{0}', space=vmem, size = 0x40000, scoped, tag = 'output window, operand 0']
    #allocation3 [shape = 's32[2]{0}', space=sflag, size = 0x8, scoped, tag = 'scoped memory for tpu_custom_call.1']
    %8 = vsyncpa [#allocation3], 0
    %s9 = scalar_lea.sflag [#allocation3], 1
    %10 = vsyncpa %s9, 0
    loop: start=0, step=1, limit=4
    $region2: #{tpu_custom_call.1} parent=1 // loop_pre_header
      _
    $region3: #{tpu_custom_call.1} parent=1 // loop_header
      %s12 = sphi 0, %s16
      %p13 = scmp.ge.s32.totalorder %s12, 4
      %s19 = sphi 0, %s31
      %s20 = sphi 0, %s27
      %s21 = sphi 0, %s19
      %s22 = sphi 0, %s20
      %s23 = sphi 0, %s21
      %s24 = sphi 0, %s22
      %s34 = sphi 0, %s36
      %s37 = sphi 0, %s34
      %s38 = sphi 0, %s37
      %s54 = sphi 0, %s38
      %s60 = sphi 0, %s62
      %s63 = sphi 0, %s60
      %s64 = sphi 0, %s63
      %s80 = sphi 0, %s64
      %s86 = sphi 0, %s88
      %s89 = sphi 0, %s86
      %s90 = sphi 0, %s89
      %s106 = sphi 0, %s90
      %s114 = sphi 0, %s116
      %s117 = sphi 0, %s114
      %s118 = sphi 0, %s117
      %s134 = sphi 0, %s118
    $region4: #{tpu_custom_call.1} parent=1 // loop_header_branch
      %15 = sbr.rel (%p13) target = $region8
    $region5: #{tpu_custom_call.1} parent=1 // loop_body
      %s17 = ssub.s32 %s12, 1
      %s18 = ssub.s32 %s12, 2
      %s25 = sadd.s32 1, %s20
      %p26 = scmp.ge.s32.totalorder %s25, 1
      %s27 = scalar_select %p26, 0, %s25
      %s28 = sadd.s32 1, %s19
      %s29 = scalar_select %p26, %s28, %s19
      %p30 = scmp.ge.s32.totalorder %s29, 2
      %s31 = scalar_select %p30, 0, %s29
      %s32 = ssub.s32 %s19, %s31
      %p33 = scmp.eq.s32.totalorder %s32, 0
      %s35 = sadd.s32 %s34, 1
      %s36 = scalar_select %p33, %s34, %s35
      %p39 = pneg %p33
      %p40 = scmp.eq.s32.totalorder %s12, 1
      %p41 = por %p39, %p40
      %p42 = scmp.ne.s32.totalorder %s34, %s37
      %p43 = scmp.eq.s32.totalorder %s12, 0
      %p44 = por %p42, %p43
      %p45 = scmp.ne.s32.totalorder %s34, %s37
      %p46 = scmp.eq.s32.totalorder %s17, 1
      %p47 = por %p45, %p46
      %p48 = scmp.ne.s32.totalorder %s37, %s38
      %p49 = scmp.eq.s32.totalorder %s17, 0
      %p50 = por %p48, %p49
      %p51 = scmp.ne.s32.totalorder %s37, %s38
      %p52 = scmp.eq.s32.totalorder %s18, 1
      %p53 = por %p51, %p52
      %p55 = scmp.ne.s32.totalorder %s38, %s54
      %p56 = scmp.eq.s32.totalorder %s18, 0
      %p57 = por %p55, %p56
      %s58 = ssub.s32 %s20, %s27
      %p59 = scmp.eq.s32.totalorder %s58, 0
      %s61 = sadd.s32 %s60, 1
      %s62 = scalar_select %p59, %s60, %s61
      %p65 = pneg %p59
      %p66 = scmp.eq.s32.totalorder %s12, 1
      %p67 = por %p65, %p66
      %p68 = scmp.ne.s32.totalorder %s60, %s63
      %p69 = scmp.eq.s32.totalorder %s12, 0
      %p70 = por %p68, %p69
      %p71 = scmp.ne.s32.totalorder %s60, %s63
      %p72 = scmp.eq.s32.totalorder %s17, 1
      %p73 = por %p71, %p72
      %p74 = scmp.ne.s32.totalorder %s63, %s64
      %p75 = scmp.eq.s32.totalorder %s17, 0
      %p76 = por %p74, %p75
      %p77 = scmp.ne.s32.totalorder %s63, %s64
      %p78 = scmp.eq.s32.totalorder %s18, 1
      %p79 = por %p77, %p78
      %p81 = scmp.ne.s32.totalorder %s64, %s80
      %p82 = scmp.eq.s32.totalorder %s18, 0
      %p83 = por %p81, %p82
      %s84 = ssub.s32 %s20, %s27
      %p85 = scmp.eq.s32.totalorder %s84, 0
      %s87 = sadd.s32 %s86, 1
      %s88 = scalar_select %p85, %s86, %s87
      %p91 = pneg %p85
      %p92 = scmp.eq.s32.totalorder %s12, 1
      %p93 = por %p91, %p92
      %p94 = scmp.ne.s32.totalorder %s86, %s89
      %p95 = scmp.eq.s32.totalorder %s12, 0
      %p96 = por %p94, %p95
      %p97 = scmp.ne.s32.totalorder %s86, %s89
      %p98 = scmp.eq.s32.totalorder %s17, 1
      %p99 = por %p97, %p98
      %p100 = scmp.ne.s32.totalorder %s89, %s90
      %p101 = scmp.eq.s32.totalorder %s17, 0
      %p102 = por %p100, %p101
      %p103 = scmp.ne.s32.totalorder %s89, %s90
      %p104 = scmp.eq.s32.totalorder %s18, 1
      %p105 = por %p103, %p104
      %p107 = scmp.ne.s32.totalorder %s90, %s106
      %p108 = scmp.eq.s32.totalorder %s18, 0
      %p109 = por %p107, %p108
      %s110 = ssub.s32 %s19, %s31
      %s111 = ssub.s32 %s20, %s27
      %s112 = sor.u32 %s110, %s111
      %p113 = scmp.eq.s32.totalorder %s112, 0
      %s115 = sadd.s32 %s114, 1
      %s116 = scalar_select %p113, %s114, %s115
      %p119 = pneg %p113
      %p120 = scmp.eq.s32.totalorder %s12, 1
      %p121 = por %p119, %p120
      %p122 = scmp.ne.s32.totalorder %s114, %s117
      %p123 = scmp.eq.s32.totalorder %s12, 0
      %p124 = por %p122, %p123
      %p125 = scmp.ne.s32.totalorder %s114, %s117
      %p126 = scmp.eq.s32.totalorder %s17, 1
      %p127 = por %p125, %p126
      %p128 = scmp.ne.s32.totalorder %s117, %s118
      %p129 = scmp.eq.s32.totalorder %s17, 0
      %p130 = por %p128, %p129
      %p131 = scmp.ne.s32.totalorder %s117, %s118
      %p132 = scmp.eq.s32.totalorder %s18, 1
      %p133 = por %p131, %p132
      %p135 = scmp.ne.s32.totalorder %s118, %s134
      %p136 = scmp.eq.s32.totalorder %s18, 0
      %p137 = por %p135, %p136
      %p138 = scmp.le.s32.totalorder 1, %s12
      %p139 = scmp.lt.s32.totalorder %s12, 3
      %p140 = pnand %p138, %p139
      %p141 = pneg %p140
      // Predicated region
      $region9: #{tpu_custom_call.1} parent=5 // pred_check
        _
      $region10: #{tpu_custom_call.1} parent=5 // pred_check_branch
        %143 = sbr.rel (%p140) target = $region12
      $region11: #{tpu_custom_call.1} parent=5 // pred_region
        %s144 = ssub.s32 %s12, 1
        // Predicated region
        $region13: #{tpu_custom_call.1} parent=11 // pred_check
          %p145 = pneg %p76
        $region14: #{tpu_custom_call.1} parent=11 // pred_check_branch
          %147 = sbr.rel (%p145) target = $region16
        $region15: #{tpu_custom_call.1} parent=11 // pred_region
          %p148 = scmp.lt.s32.totalorder %s22, 0
          %s149 = scalar_select %p148, %s22, 0
          %s150 = smul.addr %s149, 4
          %s151 = scalar_lea.vmem %s1, %s150
        $region16: #{tpu_custom_call.1} parent=11 // pred_fallthru
          _
        // Predicated region
        $region17: #{tpu_custom_call.1} parent=11 // pred_check
          %p152 = pneg %p102
        $region18: #{tpu_custom_call.1} parent=11 // pred_check_branch
          %154 = sbr.rel (%p152) target = $region20
        $region19: #{tpu_custom_call.1} parent=11 // pred_region
          %p155 = scmp.lt.s32.totalorder %s22, 0
          %s156 = scalar_select %p155, %s22, 0
          %s157 = scalar_lea.vmem %s2, %s156
        $region20: #{tpu_custom_call.1} parent=11 // pred_fallthru
          _
      $region12: #{tpu_custom_call.1} parent=5 // pred_fallthru
        _
      %p158 = scmp.lt.s32.totalorder %s12, 2
      // Predicated region
      $region21: #{tpu_custom_call.1} parent=5 // pred_check
        %p159 = pneg %p158
      $region22: #{tpu_custom_call.1} parent=5 // pred_check_branch
        %161 = sbr.rel (%p159) target = $region24
      $region23: #{tpu_custom_call.1} parent=5 // pred_region
        // Predicated region
        $region25: #{tpu_custom_call.1} parent=23 // pred_check
          %p162 = pneg %p44
        $region26: #{tpu_custom_call.1} parent=23 // pred_check_branch
          %164 = sbr.rel (%p162) target = $region28
        $region27: #{tpu_custom_call.1} parent=23 // pred_region
          %p165 = scmp.lt.s32.totalorder %s19, 1
          %s166 = scalar_select %p165, %s19, 1
          %s167 = smul.addr %s166, 54
          %s168 = smul.addr %s167, 8
          %s169 = scalar_lea.vmem %s0, %s168
        $region28: #{tpu_custom_call.1} parent=23 // pred_fallthru
          _
      $region24: #{tpu_custom_call.1} parent=5 // pred_fallthru
        _
      %p170 = scmp.le.s32.totalorder 1, %s12
      %p171 = scmp.lt.s32.totalorder %s12, 3
      %p172 = pnand %p170, %p171
      %p173 = pneg %p172
      // Predicated region
      $region29: #{tpu_custom_call.1} parent=5 // pred_check
        _
      $region30: #{tpu_custom_call.1} parent=5 // pred_check_branch
        %175 = sbr.rel (%p172) target = $region32
      $region31: #{tpu_custom_call.1} parent=5 // pred_region
        %s176 = ssub.s32 %s12, 1
        %p177 = scmp.lt.s32.totalorder %s21, 1
        %s178 = scalar_select %p177, %s21, 1
        %s179 = smul.addr %s178, 54
        %s180 = smul.addr %s179, 8
        %s181 = scalar_lea.vmem %s0, %s180
        %p182 = pneg %p50
        %p183 = pneg %p47
        %p184 = scmp.lt.s32.totalorder %s22, 0
        %s185 = scalar_select %p184, %s22, 0
        %s186 = smul.addr %s185, 4
        %s187 = scalar_lea.vmem %s1, %s186
        %p188 = pneg %p76
        %p189 = pneg %p73
        %p190 = scmp.lt.s32.totalorder %s22, 0
        %s191 = scalar_select %p190, %s22, 0
        %s192 = scalar_lea.vmem %s2, %s191
        %p193 = pneg %p102
        %p194 = pneg %p99
        %p195 = pneg %p130
        %p196 = pneg %p127
        %s197 = sand.u32 %s117, 1
        %s198 = scalar_lea.sflag [#allocation3], %s197
        %s199 = sand.u32 %s117, 1
        %s200 = smul.addr %s199, 256
        %s201 = scalar_lea.vmem [#allocation2], %s200
        %p202 = scmp.lt.s32.totalorder %s21, 1
        %s203 = scalar_select %p202, %s21, 1
        %s204 = smul.addr %s203, 54
        %s205 = smul.addr %s204, 8
        %s206 = scalar_lea.vmem %s0, %s205
        %p207 = scmp.lt.s32.totalorder %s22, 0
        %s208 = scalar_select %p207, %s22, 0
        %s209 = smul.addr %s208, 4
        %s210 = scalar_lea.vmem %s1, %s209
        %p211 = scmp.lt.s32.totalorder %s22, 0
        %s212 = scalar_select %p211, %s22, 0
        %s213 = scalar_lea.vmem %s2, %s212
        %v214 = vld [vmem:[%s206] sm:$0xff]
        %v215 = vld [vmem:[%s206 + $0x8] sm:$0xff]
        %v216 = vld [vmem:[%s206 + $0x18] sm:$0xff]
        %v217 = vld [vmem:[%s206 + $0x20] sm:$0xff]
        %v218 = vld [vmem:[%s206 + $0x30] sm:$0xff]
        %v219 = vld [vmem:[%s206 + $0x38] sm:$0xff]
        %v220 = vld [vmem:[%s206 + $0x48] sm:$0xff]
        %v221 = vld [vmem:[%s206 + $0x50] sm:$0xff]
        %v222 = vld [vmem:[%s206 + $0x60] sm:$0xff]
        %v223 = vld [vmem:[%s206 + $0x68] sm:$0xff]
        %v224 = vld [vmem:[%s206 + $0x78] sm:$0xff]
        %v225 = vld [vmem:[%s206 + $0x80] sm:$0xff]
        %v226 = vld [vmem:[%s206 + $0x90] sm:$0xff]
        %v227 = vld [vmem:[%s206 + $0x98] sm:$0xff]
        %v228 = vld [vmem:[%s206 + $0xa8] sm:$0xff]
        %v229 = vld [vmem:[%s206 + $0xb0] sm:$0xff]
        %v230 = vld [vmem:[%s206 + $0xc0] sm:$0xff]
        %v231 = vld [vmem:[%s206 + $0xc8] sm:$0xff]
        %v232 = vld [vmem:[%s206 + $0xd8] sm:$0xff]
        %v233 = vld [vmem:[%s206 + $0xe0] sm:$0xff]
        %v234 = vld [vmem:[%s206 + $0xf0] sm:$0xff]
        %v235 = vld [vmem:[%s206 + $0xf8] sm:$0xff]
        %v236 = vld [vmem:[%s206 + $0x108] sm:$0xff]
        %v237 = vld [vmem:[%s206 + $0x110] sm:$0xff]
        %v238 = vld [vmem:[%s206 + $0x120] sm:$0xff]
        %v239 = vld [vmem:[%s206 + $0x128] sm:$0xff]
        %v240 = vld [vmem:[%s206 + $0x138] sm:$0xff]
        %v241 = vld [vmem:[%s206 + $0x140] sm:$0xff]
        %v242 = vld [vmem:[%s206 + $0x150] sm:$0xff]
        %v243 = vld [vmem:[%s206 + $0x158] sm:$0xff]
        %v244 = vld [vmem:[%s206 + $0x168] sm:$0xff]
        %v245 = vld [vmem:[%s206 + $0x170] sm:$0xff]
        %v246 = vld [vmem:[%s210] sm:$0xf]
        %v247 = vld [vmem:[%s206 + $0x1] sm:$0xff]
        %v248 = vld [vmem:[%s206 + $0x9] sm:$0xff]
        %v249 = vld [vmem:[%s206 + $0x19] sm:$0xff]
        %v250 = vld [vmem:[%s206 + $0x21] sm:$0xff]
        %v251 = vld [vmem:[%s206 + $0x31] sm:$0xff]
        %v252 = vld [vmem:[%s206 + $0x39] sm:$0xff]
        %v253 = vld [vmem:[%s206 + $0x49] sm:$0xff]
        %v254 = vld [vmem:[%s206 + $0x51] sm:$0xff]
        %v255 = vld [vmem:[%s206 + $0x61] sm:$0xff]
        %v256 = vld [vmem:[%s206 + $0x69] sm:$0xff]
        %v257 = vld [vmem:[%s206 + $0x79] sm:$0xff]
        %v258 = vld [vmem:[%s206 + $0x81] sm:$0xff]
        %v259 = vld [vmem:[%s206 + $0x91] sm:$0xff]
        %v260 = vld [vmem:[%s206 + $0x99] sm:$0xff]
        %v261 = vld [vmem:[%s206 + $0xa9] sm:$0xff]
        %v262 = vld [vmem:[%s206 + $0xb1] sm:$0xff]
        %v263 = vld [vmem:[%s206 + $0xc1] sm:$0xff]
        %v264 = vld [vmem:[%s206 + $0xc9] sm:$0xff]
        %v265 = vld [vmem:[%s206 + $0xd9] sm:$0xff]
        %v266 = vld [vmem:[%s206 + $0xe1] sm:$0xff]
        %v267 = vld [vmem:[%s206 + $0xf1] sm:$0xff]
        %v268 = vld [vmem:[%s206 + $0xf9] sm:$0xff]
        %v269 = vld [vmem:[%s206 + $0x109] sm:$0xff]
        %v270 = vld [vmem:[%s206 + $0x111] sm:$0xff]
        %v271 = vld [vmem:[%s206 + $0x121] sm:$0xff]
        %v272 = vld [vmem:[%s206 + $0x129] sm:$0xff]
        %v273 = vld [vmem:[%s206 + $0x139] sm:$0xff]
        %v274 = vld [vmem:[%s206 + $0x141] sm:$0xff]
        %v275 = vld [vmem:[%s206 + $0x151] sm:$0xff]
        %v276 = vld [vmem:[%s206 + $0x159] sm:$0xff]
        %v277 = vld [vmem:[%s206 + $0x169] sm:$0xff]
        %v278 = vld [vmem:[%s206 + $0x171] sm:$0xff]
        %s279 = scalar_lea.vmem %s210, 4
        %v280 = vld [vmem:[%s279] sm:$0xf]
        %vm281 = vcmask 31744
        %v283 = vsel %vm281, %v247, 0
        %v286 = vsel %vm281, %v248, 0
        %v289 = vsel %vm281, %v249, 0
        %v292 = vsel %vm281, %v250, 0
        %v295 = vsel %vm281, %v251, 0
        %v298 = vsel %vm281, %v252, 0
        %v301 = vsel %vm281, %v253, 0
        %v304 = vsel %vm281, %v254, 0
        %v307 = vsel %vm281, %v255, 0
        %v310 = vsel %vm281, %v256, 0
        %v313 = vsel %vm281, %v257, 0
        %v316 = vsel %vm281, %v258, 0
        %v319 = vsel %vm281, %v259, 0
        %v322 = vsel %vm281, %v260, 0
        %v325 = vsel %vm281, %v261, 0
        %v328 = vsel %vm281, %v262, 0
        %v331 = vsel %vm281, %v263, 0
        %v334 = vsel %vm281, %v264, 0
        %v337 = vsel %vm281, %v265, 0
        %v340 = vsel %vm281, %v266, 0
        %v343 = vsel %vm281, %v267, 0
        %v346 = vsel %vm281, %v268, 0
        %v349 = vsel %vm281, %v269, 0
        %v352 = vsel %vm281, %v270, 0
        %v355 = vsel %vm281, %v271, 0
        %v358 = vsel %vm281, %v272, 0
        %v361 = vsel %vm281, %v273, 0
        %v364 = vsel %vm281, %v274, 0
        %v367 = vsel %vm281, %v275, 0
        %v370 = vsel %vm281, %v276, 0
        %v373 = vsel %vm281, %v277, 0
        %v376 = vsel %vm281, %v278, 0
        %vm378 = vcmask 1043456
        %v380 = vsel %vm378, %v280, 0
        %382 = vmatprep.subr.mxu0 0.0
        %383 = vmatpush1.msra.mxu0 %v380
        %384 = vmatprep.subr.mxu0 0.0
        %385 = vmatpush1.msra.mxu0 0.0
        %386 = vmatprep.subr.mxu0 0.0
        %387 = vmatpush1.msra.mxu0 0.0
        %388 = vmatprep.subr.mxu0 0.0
        %389 = vmatpush1.msra.mxu0 0.0
        %390 = vmatprep.subr.mxu0 0.0
        %391 = vmatpush1.msra.mxu0 0.0
        %392 = vmatprep.subr.mxu0 0.0
        %393 = vmatpush1.msra.mxu0 0.0
        %394 = vmatprep.subr.mxu0 0.0
        %395 = vmatpush1.msra.mxu0 0.0
        %396 = vmatprep.subr.mxu0 0.0
        %397 = vmatpush1.msra.mxu0 0.0
        %398 = vmatprep.subr.mxu0 0.0
        %399 = vmatpush1.msra.mxu0 0.0
        %400 = vmatprep.subr.mxu0 0.0
        %401 = vmatpush1.msra.mxu0 0.0
        %402 = vmatprep.subr.mxu0 0.0
        %403 = vmatpush1.msra.mxu0 0.0
        %404 = vmatprep.subr.mxu0 0.0
        %405 = vmatpush1.msra.mxu0 0.0
        %406 = vmatprep.subr.mxu0 0.0
        %407 = vmatpush1.msra.mxu0 0.0
        %408 = vmatprep.subr.mxu0 0.0
        %409 = vmatpush1.msra.mxu0 0.0
        %410 = vmatprep.subr.mxu0 0.0
        %411 = vmatpush1.msra.mxu0 0.0
        %412 = vmatprep.subr.mxu0 0.0
        %413 = vmatpush1.msra.mxu0 0.0
        %414 = vmatprep.subr.mxu0 0.0
        %415 = vmatpush1.msra.mxu0 0.0
        %416 = vmatprep.subr.mxu0 0.0
        %417 = vmatpush1.msra.mxu0 0.0
        %418 = vmatprep.subr.mxu0 0.0
        %419 = vmatpush1.msra.mxu0 0.0
        %420 = vmatprep.subr.mxu0 0.0
        %421 = vmatpush1.msra.mxu0 0.0
        %422 = vmatprep.subr.mxu0 0.0
        %423 = vmatpush1.msra.mxu0 0.0
        %424 = vmatprep.subr.mxu0 0.0
        %425 = vmatpush1.msra.mxu0 0.0
        %426 = vmatprep.subr.mxu0 0.0
        %427 = vmatpush1.msra.mxu0 0.0
        %428 = vmatprep.subr.mxu0 0.0
        %429 = vmatpush1.msra.mxu0 0.0
        %430 = vmatprep.subr.mxu0 0.0
        %431 = vmatpush1.msra.mxu0 0.0
        %432 = vmatprep.subr.mxu0 0.0
        %433 = vmatpush1.msra.mxu0 0.0
        %434 = vmatprep.subr.mxu0 0.0
        %435 = vmatpush1.msra.mxu0 0.0
        %436 = vmatprep.subr.mxu0 0.0
        %437 = vmatpush1.msra.mxu0 0.0
        %438 = vmatprep.subr.mxu0 0.0
        %439 = vmatpush1.msra.mxu0 0.0
        %440 = vmatprep.subr.mxu0 0.0
        %441 = vmatpush1.msra.mxu0 0.0
        %442 = vmatprep.subr.mxu0 0.0
        %443 = vmatpush1.msra.mxu0 0.0
        %444 = vmatprep.subr.mxu0 0.0
        %445 = vmatpush1.msra.mxu0 0.0
        %446 = vmatprep.mubr.f32.mxu0 0.0
        %447 = vmatmul.mubr.f32.gmra.mrb[0].mxu0 %v283
        %v448 = vpop.f32.mrb[0].mxu0
        %v449 = vadd.f32 0.0, %v448
        %v450 = vpop.f32.mrb[0].mxu0
        %451 = vmatprep.mubr.f32.mxu0 0.0
        %452 = vmatmul.mubr.f32.gmra.mrb[0].mxu0 %v286
        %v453 = vpop.f32.mrb[0].mxu0
        %v454 = vadd.f32 0.0, %v453
        %v455 = vpop.f32.mrb[0].mxu0
        %456 = vmatprep.mubr.f32.mxu0 0.0
        %457 = vmatmul.mubr.f32.gmra.mrb[0].mxu0 %v289
        %v458 = vpop.f32.mrb[0].mxu0
        %v459 = vadd.f32 0.0, %v458
        %v460 = vpop.f32.mrb[0].mxu0
        %461 = vmatprep.mubr.f32.mxu0 0.0
        %462 = vmatmul.mubr.f32.gmra.mrb[0].mxu0 %v292
        %v463 = vpop.f32.mrb[0].mxu0
        %v464 = vadd.f32 0.0, %v463
        %v465 = vpop.f32.mrb[0].mxu0
        %466 = vmatprep.mubr.f32.mxu0 0.0
        %467 = vmatmul.mubr.f32.gmra.mrb[0].mxu0 %v295
        %v468 = vpop.f32.mrb[0].mxu0
        %v469 = vadd.f32 0.0, %v468
        %v470 = vpop.f32.mrb[0].mxu0
        %471 = vmatprep.mubr.f32.mxu0 0.0
        %472 = vmatmul.mubr.f32.gmra.mrb[0].mxu0 %v298
        %v473 = vpop.f32.mrb[0].mxu0
        %v474 = vadd.f32 0.0, %v473
        %v475 = vpop.f32.mrb[0].mxu0
        %476 = vmatprep.mubr.f32.mxu0 0.0
        %477 = vmatmul.mubr.f32.gmra.mrb[0].mxu0 %v301
        %v478 = vpop.f32.mrb[0].mxu0
        %v479 = vadd.f32 0.0, %v478
        %v480 = vpop.f32.mrb[0].mxu0
        %481 = vmatprep.mubr.f32.mxu0 0.0
        %482 = vmatmul.mubr.f32.gmra.mrb[0].mxu0 %v304
        %v483 = vpop.f32.mrb[0].mxu0
        %v484 = vadd.f32 0.0, %v483
        %v485 = vpop.f32.mrb[0].mxu0
        %486 = vmatprep.mubr.f32.mxu0 0.0
        %487 = vmatmul.mubr.f32.gmra.mrb[0].mxu0 %v307
        %v488 = vpop.f32.mrb[0].mxu0
        %v489 = vadd.f32 0.0, %v488
        %v490 = vpop.f32.mrb[0].mxu0
        %491 = vmatprep.mubr.f32.mxu0 0.0
        %492 = vmatmul.mubr.f32.gmra.mrb[0].mxu0 %v310
        %v493 = vpop.f32.mrb[0].mxu0
        %v494 = vadd.f32 0.0, %v493
        %v495 = vpop.f32.mrb[0].mxu0
        %496 = vmatprep.mubr.f32.mxu0 0.0
        %497 = vmatmul.mubr.f32.gmra.mrb[0].mxu0 %v313
        %v498 = vpop.f32.mrb[0].mxu0
        %v499 = vadd.f32 0.0, %v498
        %v500 = vpop.f32.mrb[0].mxu0
        %501 = vmatprep.mubr.f32.mxu0 0.0
        %502 = vmatmul.mubr.f32.gmra.mrb[0].mxu0 %v316
        %v503 = vpop.f32.mrb[0].mxu0
        %v504 = vadd.f32 0.0, %v503
        %v505 = vpop.f32.mrb[0].mxu0
        %506 = vmatprep.mubr.f32.mxu0 0.0
        %507 = vmatmul.mubr.f32.gmra.mrb[0].mxu0 %v319
        %v508 = vpop.f32.mrb[0].mxu0
        %v509 = vadd.f32 0.0, %v508
        %v510 = vpop.f32.mrb[0].mxu0
        %511 = vmatprep.mubr.f32.mxu0 0.0
        %512 = vmatmul.mubr.f32.gmra.mrb[0].mxu0 %v322
        %v513 = vpop.f32.mrb[0].mxu0
        %v514 = vadd.f32 0.0, %v513
        %v515 = vpop.f32.mrb[0].mxu0
        %516 = vmatprep.mubr.f32.mxu0 0.0
        %517 = vmatmul.mubr.f32.gmra.mrb[0].mxu0 %v325
        %v518 = vpop.f32.mrb[0].mxu0
        %v519 = vadd.f32 0.0, %v518
        %v520 = vpop.f32.mrb[0].mxu0
        %521 = vmatprep.mubr.f32.mxu0 0.0
        %522 = vmatmul.mubr.f32.gmra.mrb[0].mxu0 %v328
        %v523 = vpop.f32.mrb[0].mxu0
        %v524 = vadd.f32 0.0, %v523
        %v525 = vpop.f32.mrb[0].mxu0
        %526 = vmatprep.mubr.f32.mxu0 0.0
        %527 = vmatmul.mubr.f32.gmra.mrb[0].mxu0 %v331
        %v528 = vpop.f32.mrb[0].mxu0
        %v529 = vadd.f32 0.0, %v528
        %v530 = vpop.f32.mrb[0].mxu0
        %531 = vmatprep.mubr.f32.mxu0 0.0
        %532 = vmatmul.mubr.f32.gmra.mrb[0].mxu0 %v334
        %v533 = vpop.f32.mrb[0].mxu0
        %v534 = vadd.f32 0.0, %v533
        %v535 = vpop.f32.mrb[0].mxu0
        %536 = vmatprep.mubr.f32.mxu0 0.0
        %537 = vmatmul.mubr.f32.gmra.mrb[0].mxu0 %v337
        %v538 = vpop.f32.mrb[0].mxu0
        %v539 = vadd.f32 0.0, %v538
        %v540 = vpop.f32.mrb[0].mxu0
        %541 = vmatprep.mubr.f32.mxu0 0.0
        %542 = vmatmul.mubr.f32.gmra.mrb[0].mxu0 %v340
        %v543 = vpop.f32.mrb[0].mxu0
        %v544 = vadd.f32 0.0, %v543
        %v545 = vpop.f32.mrb[0].mxu0
        %546 = vmatprep.mubr.f32.mxu0 0.0
        %547 = vmatmul.mubr.f32.gmra.mrb[0].mxu0 %v343
        %v548 = vpop.f32.mrb[0].mxu0
        %v549 = vadd.f32 0.0, %v548
        %v550 = vpop.f32.mrb[0].mxu0
        %551 = vmatprep.mubr.f32.mxu0 0.0
        %552 = vmatmul.mubr.f32.gmra.mrb[0].mxu0 %v346
        %v553 = vpop.f32.mrb[0].mxu0
        %v554 = vadd.f32 0.0, %v553
        %v555 = vpop.f32.mrb[0].mxu0
        %556 = vmatprep.mubr.f32.mxu0 0.0
        %557 = vmatmul.mubr.f32.gmra.mrb[0].mxu0 %v349
        %v558 = vpop.f32.mrb[0].mxu0
        %v559 = vadd.f32 0.0, %v558
        %v560 = vpop.f32.mrb[0].mxu0
        %561 = vmatprep.mubr.f32.mxu0 0.0
        %562 = vmatmul.mubr.f32.gmra.mrb[0].mxu0 %v352
        %v563 = vpop.f32.mrb[0].mxu0
        %v564 = vadd.f32 0.0, %v563
        %v565 = vpop.f32.mrb[0].mxu0
        %566 = vmatprep.mubr.f32.mxu0 0.0
        %567 = vmatmul.mubr.f32.gmra.mrb[0].mxu0 %v355
        %v568 = vpop.f32.mrb[0].mxu0
        %v569 = vadd.f32 0.0, %v568
        %v570 = vpop.f32.mrb[0].mxu0
        %571 = vmatprep.mubr.f32.mxu0 0.0
        %572 = vmatmul.mubr.f32.gmra.mrb[0].mxu0 %v358
        %v573 = vpop.f32.mrb[0].mxu0
        %v574 = vadd.f32 0.0, %v573
        %v575 = vpop.f32.mrb[0].mxu0
        %576 = vmatprep.mubr.f32.mxu0 0.0
        %577 = vmatmul.mubr.f32.gmra.mrb[0].mxu0 %v361
        %v578 = vpop.f32.mrb[0].mxu0
        %v579 = vadd.f32 0.0, %v578
        %v580 = vpop.f32.mrb[0].mxu0
        %581 = vmatprep.mubr.f32.mxu0 0.0
        %582 = vmatmul.mubr.f32.gmra.mrb[0].mxu0 %v364
        %v583 = vpop.f32.mrb[0].mxu0
        %v584 = vadd.f32 0.0, %v583
        %v585 = vpop.f32.mrb[0].mxu0
        %586 = vmatprep.mubr.f32.mxu0 0.0
        %587 = vmatmul.mubr.f32.gmra.mrb[0].mxu0 %v367
        %v588 = vpop.f32.mrb[0].mxu0
        %v589 = vadd.f32 0.0, %v588
        %v590 = vpop.f32.mrb[0].mxu0
        %591 = vmatprep.mubr.f32.mxu0 0.0
        %592 = vmatmul.mubr.f32.gmra.mrb[0].mxu0 %v370
        %v593 = vpop.f32.mrb[0].mxu0
        %v594 = vadd.f32 0.0, %v593
        %v595 = vpop.f32.mrb[0].mxu0
        %596 = vmatprep.mubr.f32.mxu0 0.0
        %597 = vmatmul.mubr.f32.gmra.mrb[0].mxu0 %v373
        %v598 = vpop.f32.mrb[0].mxu0
        %v599 = vadd.f32 0.0, %v598
        %v600 = vpop.f32.mrb[0].mxu0
        %601 = vmatprep.mubr.f32.mxu0 0.0
        %602 = vmatmul.mubr.f32.gmra.mrb[0].mxu0 %v376
        %v603 = vpop.f32.mrb[0].mxu0
        %v604 = vadd.f32 0.0, %v603
        %v605 = vpop.f32.mrb[0].mxu0
        %606 = vdwg.mxu0
        %v608 = vsel %vm281, %v214, 0
        %v611 = vsel %vm281, %v215, 0
        %v614 = vsel %vm281, %v216, 0
        %v617 = vsel %vm281, %v217, 0
        %v620 = vsel %vm281, %v218, 0
        %v623 = vsel %vm281, %v219, 0
        %v626 = vsel %vm281, %v220, 0
        %v629 = vsel %vm281, %v221, 0
        %v632 = vsel %vm281, %v222, 0
        %v635 = vsel %vm281, %v223, 0
        %v638 = vsel %vm281, %v224, 0
        %v641 = vsel %vm281, %v225, 0
        %v644 = vsel %vm281, %v226, 0
        %v647 = vsel %vm281, %v227, 0
        %v650 = vsel %vm281, %v228, 0
        %v653 = vsel %vm281, %v229, 0
        %v656 = vsel %vm281, %v230, 0
        %v659 = vsel %vm281, %v231, 0
        %v662 = vsel %vm281, %v232, 0
        %v665 = vsel %vm281, %v233, 0
        %v668 = vsel %vm281, %v234, 0
        %v671 = vsel %vm281, %v235, 0
        %v674 = vsel %vm281, %v236, 0
        %v677 = vsel %vm281, %v237, 0
        %v680 = vsel %vm281, %v238, 0
        %v683 = vsel %vm281, %v239, 0
        %v686 = vsel %vm281, %v240, 0
        %v689 = vsel %vm281, %v241, 0
        %v692 = vsel %vm281, %v242, 0
        %v695 = vsel %vm281, %v243, 0
        %v698 = vsel %vm281, %v244, 0
        %v701 = vsel %vm281, %v245, 0
        %v704 = vsel %vm378, %v246, 0
        %706 = vmatprep.subr.mxu0 0.0
        %707 = vmatpush1.msra.mxu0 %v704
        %708 = vmatprep.subr.mxu0 0.0
        %709 = vmatpush1.msra.mxu0 0.0
        %710 = vmatprep.subr.mxu0 0.0
        %711 = vmatpush1.msra.mxu0 0.0
        %712 = vmatprep.subr.mxu0 0.0
        %713 = vmatpush1.msra.mxu0 0.0
        %714 = vmatprep.subr.mxu0 0.0
        %715 = vmatpush1.msra.mxu0 0.0
        %716 = vmatprep.subr.mxu0 0.0
        %717 = vmatpush1.msra.mxu0 0.0
        %718 = vmatprep.subr.mxu0 0.0
        %719 = vmatpush1.msra.mxu0 0.0
        %720 = vmatprep.subr.mxu0 0.0
        %721 = vmatpush1.msra.mxu0 0.0
        %722 = vmatprep.subr.mxu0 0.0
        %723 = vmatpush1.msra.mxu0 0.0
        %724 = vmatprep.subr.mxu0 0.0
        %725 = vmatpush1.msra.mxu0 0.0
        %726 = vmatprep.subr.mxu0 0.0
        %727 = vmatpush1.msra.mxu0 0.0
        %728 = vmatprep.subr.mxu0 0.0
        %729 = vmatpush1.msra.mxu0 0.0
        %730 = vmatprep.subr.mxu0 0.0
        %731 = vmatpush1.msra.mxu0 0.0
        %732 = vmatprep.subr.mxu0 0.0
        %733 = vmatpush1.msra.mxu0 0.0
        %734 = vmatprep.subr.mxu0 0.0
        %735 = vmatpush1.msra.mxu0 0.0
        %736 = vmatprep.subr.mxu0 0.0
        %737 = vmatpush1.msra.mxu0 0.0
        %738 = vmatprep.subr.mxu0 0.0
        %739 = vmatpush1.msra.mxu0 0.0
        %740 = vmatprep.subr.mxu0 0.0
        %741 = vmatpush1.msra.mxu0 0.0
        %742 = vmatprep.subr.mxu0 0.0
        %743 = vmatpush1.msra.mxu0 0.0
        %744 = vmatprep.subr.mxu0 0.0
        %745 = vmatpush1.msra.mxu0 0.0
        %746 = vmatprep.subr.mxu0 0.0
        %747 = vmatpush1.msra.mxu0 0.0
        %748 = vmatprep.subr.mxu0 0.0
        %749 = vmatpush1.msra.mxu0 0.0
        %750 = vmatprep.subr.mxu0 0.0
        %751 = vmatpush1.msra.mxu0 0.0
        %752 = vmatprep.subr.mxu0 0.0
        %753 = vmatpush1.msra.mxu0 0.0
        %754 = vmatprep.subr.mxu0 0.0
        %755 = vmatpush1.msra.mxu0 0.0
        %756 = vmatprep.subr.mxu0 0.0
        %757 = vmatpush1.msra.mxu0 0.0
        %758 = vmatprep.subr.mxu0 0.0
        %759 = vmatpush1.msra.mxu0 0.0
        %760 = vmatprep.subr.mxu0 0.0
        %761 = vmatpush1.msra.mxu0 0.0
        %762 = vmatprep.subr.mxu0 0.0
        %763 = vmatpush1.msra.mxu0 0.0
        %764 = vmatprep.subr.mxu0 0.0
        %765 = vmatpush1.msra.mxu0 0.0
        %766 = vmatprep.subr.mxu0 0.0
        %767 = vmatpush1.msra.mxu0 0.0
        %768 = vmatprep.subr.mxu0 0.0
        %769 = vmatpush1.msra.mxu0 0.0
        %770 = vmatprep.mubr.f32.mxu0 0.0
        %771 = vmatmul.mubr.f32.gmra.mrb[0].mxu0 %v608
        %v772 = vpop.f32.mrb[0].mxu0
        %v773 = vadd.f32 %v449, %v772
        %v774 = vpop.f32.mrb[0].mxu0
        %775 = vmatprep.mubr.f32.mxu0 0.0
        %776 = vmatmul.mubr.f32.gmra.mrb[0].mxu0 %v611
        %v777 = vpop.f32.mrb[0].mxu0
        %v778 = vadd.f32 %v454, %v777
        %v779 = vpop.f32.mrb[0].mxu0
        %780 = vmatprep.mubr.f32.mxu0 0.0
        %781 = vmatmul.mubr.f32.gmra.mrb[0].mxu0 %v614
        %v782 = vpop.f32.mrb[0].mxu0
        %v783 = vadd.f32 %v459, %v782
        %v784 = vpop.f32.mrb[0].mxu0
        %785 = vmatprep.mubr.f32.mxu0 0.0
        %786 = vmatmul.mubr.f32.gmra.mrb[0].mxu0 %v617
        %v787 = vpop.f32.mrb[0].mxu0
        %v788 = vadd.f32 %v464, %v787
        %v789 = vpop.f32.mrb[0].mxu0
        %790 = vmatprep.mubr.f32.mxu0 0.0
        %791 = vmatmul.mubr.f32.gmra.mrb[0].mxu0 %v620
        %v792 = vpop.f32.mrb[0].mxu0
        %v793 = vadd.f32 %v469, %v792
        %v794 = vpop.f32.mrb[0].mxu0
        %795 = vmatprep.mubr.f32.mxu0 0.0
        %796 = vmatmul.mubr.f32.gmra.mrb[0].mxu0 %v623
        %v797 = vpop.f32.mrb[0].mxu0
        %v798 = vadd.f32 %v474, %v797
        %v799 = vpop.f32.mrb[0].mxu0
        %800 = vmatprep.mubr.f32.mxu0 0.0
        %801 = vmatmul.mubr.f32.gmra.mrb[0].mxu0 %v626
        %v802 = vpop.f32.mrb[0].mxu0
        %v803 = vadd.f32 %v479, %v802
        %v804 = vpop.f32.mrb[0].mxu0
        %805 = vmatprep.mubr.f32.mxu0 0.0
        %806 = vmatmul.mubr.f32.gmra.mrb[0].mxu0 %v629
        %v807 = vpop.f32.mrb[0].mxu0
        %v808 = vadd.f32 %v484, %v807
        %v809 = vpop.f32.mrb[0].mxu0
        %810 = vmatprep.mubr.f32.mxu0 0.0
        %811 = vmatmul.mubr.f32.gmra.mrb[0].mxu0 %v632
        %v812 = vpop.f32.mrb[0].mxu0
        %v813 = vadd.f32 %v489, %v812
        %v814 = vpop.f32.mrb[0].mxu0
        %815 = vmatprep.mubr.f32.mxu0 0.0
        %816 = vmatmul.mubr.f32.gmra.mrb[0].mxu0 %v635
        %v817 = vpop.f32.mrb[0].mxu0
        %v818 = vadd.f32 %v494, %v817
        %v819 = vpop.f32.mrb[0].mxu0
        %820 = vmatprep.mubr.f32.mxu0 0.0
        %821 = vmatmul.mubr.f32.gmra.mrb[0].mxu0 %v638
        %v822 = vpop.f32.mrb[0].mxu0
        %v823 = vadd.f32 %v499, %v822
        %v824 = vpop.f32.mrb[0].mxu0
        %825 = vmatprep.mubr.f32.mxu0 0.0
        %826 = vmatmul.mubr.f32.gmra.mrb[0].mxu0 %v641
        %v827 = vpop.f32.mrb[0].mxu0
        %v828 = vadd.f32 %v504, %v827
        %v829 = vpop.f32.mrb[0].mxu0
        %830 = vmatprep.mubr.f32.mxu0 0.0
        %831 = vmatmul.mubr.f32.gmra.mrb[0].mxu0 %v644
        %v832 = vpop.f32.mrb[0].mxu0
        %v833 = vadd.f32 %v509, %v832
        %v834 = vpop.f32.mrb[0].mxu0
        %835 = vmatprep.mubr.f32.mxu0 0.0
        %836 = vmatmul.mubr.f32.gmra.mrb[0].mxu0 %v647
        %v837 = vpop.f32.mrb[0].mxu0
        %v838 = vadd.f32 %v514, %v837
        %v839 = vpop.f32.mrb[0].mxu0
        %840 = vmatprep.mubr.f32.mxu0 0.0
        %841 = vmatmul.mubr.f32.gmra.mrb[0].mxu0 %v650
        %v842 = vpop.f32.mrb[0].mxu0
        %v843 = vadd.f32 %v519, %v842
        %v844 = vpop.f32.mrb[0].mxu0
        %845 = vmatprep.mubr.f32.mxu0 0.0
        %846 = vmatmul.mubr.f32.gmra.mrb[0].mxu0 %v653
        %v847 = vpop.f32.mrb[0].mxu0
        %v848 = vadd.f32 %v524, %v847
        %v849 = vpop.f32.mrb[0].mxu0
        %850 = vmatprep.mubr.f32.mxu0 0.0
        %851 = vmatmul.mubr.f32.gmra.mrb[0].mxu0 %v656
        %v852 = vpop.f32.mrb[0].mxu0
        %v853 = vadd.f32 %v529, %v852
        %v854 = vpop.f32.mrb[0].mxu0
        %855 = vmatprep.mubr.f32.mxu0 0.0
        %856 = vmatmul.mubr.f32.gmra.mrb[0].mxu0 %v659
        %v857 = vpop.f32.mrb[0].mxu0
        %v858 = vadd.f32 %v534, %v857
        %v859 = vpop.f32.mrb[0].mxu0
        %860 = vmatprep.mubr.f32.mxu0 0.0
        %861 = vmatmul.mubr.f32.gmra.mrb[0].mxu0 %v662
        %v862 = vpop.f32.mrb[0].mxu0
        %v863 = vadd.f32 %v539, %v862
        %v864 = vpop.f32.mrb[0].mxu0
        %865 = vmatprep.mubr.f32.mxu0 0.0
        %866 = vmatmul.mubr.f32.gmra.mrb[0].mxu0 %v665
        %v867 = vpop.f32.mrb[0].mxu0
        %v868 = vadd.f32 %v544, %v867
        %v869 = vpop.f32.mrb[0].mxu0
        %870 = vmatprep.mubr.f32.mxu0 0.0
        %871 = vmatmul.mubr.f32.gmra.mrb[0].mxu0 %v668
        %v872 = vpop.f32.mrb[0].mxu0
        %v873 = vadd.f32 %v549, %v872
        %v874 = vpop.f32.mrb[0].mxu0
        %875 = vmatprep.mubr.f32.mxu0 0.0
        %876 = vmatmul.mubr.f32.gmra.mrb[0].mxu0 %v671
        %v877 = vpop.f32.mrb[0].mxu0
        %v878 = vadd.f32 %v554, %v877
        %v879 = vpop.f32.mrb[0].mxu0
        %880 = vmatprep.mubr.f32.mxu0 0.0
        %881 = vmatmul.mubr.f32.gmra.mrb[0].mxu0 %v674
        %v882 = vpop.f32.mrb[0].mxu0
        %v883 = vadd.f32 %v559, %v882
        %v884 = vpop.f32.mrb[0].mxu0
        %885 = vmatprep.mubr.f32.mxu0 0.0
        %886 = vmatmul.mubr.f32.gmra.mrb[0].mxu0 %v677
        %v887 = vpop.f32.mrb[0].mxu0
        %v888 = vadd.f32 %v564, %v887
        %v889 = vpop.f32.mrb[0].mxu0
        %890 = vmatprep.mubr.f32.mxu0 0.0
        %891 = vmatmul.mubr.f32.gmra.mrb[0].mxu0 %v680
        %v892 = vpop.f32.mrb[0].mxu0
        %v893 = vadd.f32 %v569, %v892
        %v894 = vpop.f32.mrb[0].mxu0
        %895 = vmatprep.mubr.f32.mxu0 0.0
        %896 = vmatmul.mubr.f32.gmra.mrb[0].mxu0 %v683
        %v897 = vpop.f32.mrb[0].mxu0
        %v898 = vadd.f32 %v574, %v897
        %v899 = vpop.f32.mrb[0].mxu0
        %900 = vmatprep.mubr.f32.mxu0 0.0
        %901 = vmatmul.mubr.f32.gmra.mrb[0].mxu0 %v686
        %v902 = vpop.f32.mrb[0].mxu0
        %v903 = vadd.f32 %v579, %v902
        %v904 = vpop.f32.mrb[0].mxu0
        %905 = vmatprep.mubr.f32.mxu0 0.0
        %906 = vmatmul.mubr.f32.gmra.mrb[0].mxu0 %v689
        %v907 = vpop.f32.mrb[0].mxu0
        %v908 = vadd.f32 %v584, %v907
        %v909 = vpop.f32.mrb[0].mxu0
        %910 = vmatprep.mubr.f32.mxu0 0.0
        %911 = vmatmul.mubr.f32.gmra.mrb[0].mxu0 %v692
        %v912 = vpop.f32.mrb[0].mxu0
        %v913 = vadd.f32 %v589, %v912
        %v914 = vpop.f32.mrb[0].mxu0
        %915 = vmatprep.mubr.f32.mxu0 0.0
        %916 = vmatmul.mubr.f32.gmra.mrb[0].mxu0 %v695
        %v917 = vpop.f32.mrb[0].mxu0
        %v918 = vadd.f32 %v594, %v917
        %v919 = vpop.f32.mrb[0].mxu0
        %920 = vmatprep.mubr.f32.mxu0 0.0
        %921 = vmatmul.mubr.f32.gmra.mrb[0].mxu0 %v698
        %v922 = vpop.f32.mrb[0].mxu0
        %v923 = vadd.f32 %v599, %v922
        %v924 = vpop.f32.mrb[0].mxu0
        %925 = vmatprep.mubr.f32.mxu0 0.0
        %926 = vmatmul.mubr.f32.gmra.mrb[0].mxu0 %v701
        %v927 = vpop.f32.mrb[0].mxu0
        %v928 = vadd.f32 %v604, %v927
        %v929 = vpop.f32.mrb[0].mxu0
        %930 = vdwg.mxu0
        %v931 = vld [vmem:[%s206 + $0x2] sm:$0xff]
        %v932 = vld [vmem:[%s206 + $0xa] sm:$0xff]
        %v933 = vld [vmem:[%s206 + $0x1a] sm:$0xff]
        %v934 = vld [vmem:[%s206 + $0x22] sm:$0xff]
        %v935 = vld [vmem:[%s206 + $0x32] sm:$0xff]
        %v936 = vld [vmem:[%s206 + $0x3a] sm:$0xff]
        %v937 = vld [vmem:[%s206 + $0x4a] sm:$0xff]
        %v938 = vld [vmem:[%s206 + $0x52] sm:$0xff]
        %v939 = vld [vmem:[%s206 + $0x62] sm:$0xff]
        %v940 = vld [vmem:[%s206 + $0x6a] sm:$0xff]
        %v941 = vld [vmem:[%s206 + $0x7a] sm:$0xff]
        %v942 = vld [vmem:[%s206 + $0x82] sm:$0xff]
        %v943 = vld [vmem:[%s206 + $0x92] sm:$0xff]
        %v944 = vld [vmem:[%s206 + $0x9a] sm:$0xff]
        %v945 = vld [vmem:[%s206 + $0xaa] sm:$0xff]
        %v946 = vld [vmem:[%s206 + $0xb2] sm:$0xff]
        %v947 = vld [vmem:[%s206 + $0xc2] sm:$0xff]
        %v948 = vld [vmem:[%s206 + $0xca] sm:$0xff]
        %v949 = vld [vmem:[%s206 + $0xda] sm:$0xff]
        %v950 = vld [vmem:[%s206 + $0xe2] sm:$0xff]
        %v951 = vld [vmem:[%s206 + $0xf2] sm:$0xff]
        %v952 = vld [vmem:[%s206 + $0xfa] sm:$0xff]
        %v953 = vld [vmem:[%s206 + $0x10a] sm:$0xff]
        %v954 = vld [vmem:[%s206 + $0x112] sm:$0xff]
        %v955 = vld [vmem:[%s206 + $0x122] sm:$0xff]
        %v956 = vld [vmem:[%s206 + $0x12a] sm:$0xff]
        %v957 = vld [vmem:[%s206 + $0x13a] sm:$0xff]
        %v958 = vld [vmem:[%s206 + $0x142] sm:$0xff]
        %v959 = vld [vmem:[%s206 + $0x152] sm:$0xff]
        %v960 = vld [vmem:[%s206 + $0x15a] sm:$0xff]
        %v961 = vld [vmem:[%s206 + $0x16a] sm:$0xff]
        %v962 = vld [vmem:[%s206 + $0x172] sm:$0xff]
        %s963 = scalar_lea.vmem %s210, 8
        %v964 = vld [vmem:[%s963] sm:$0xf]
        %v966 = vsel %vm281, %v931, 0
        %v969 = vsel %vm281, %v932, 0
        %v972 = vsel %vm281, %v933, 0
        %v975 = vsel %vm281, %v934, 0
        %v978 = vsel %vm281, %v935, 0
        %v981 = vsel %vm281, %v936, 0
        %v984 = vsel %vm281, %v937, 0
        %v987 = vsel %vm281, %v938, 0
        %v990 = vsel %vm281, %v939, 0
        %v993 = vsel %vm281, %v940, 0
        %v996 = vsel %vm281, %v941, 0
        %v999 = vsel %vm281, %v942, 0
        %v1002 = vsel %vm281, %v943, 0
        %v1005 = vsel %vm281, %v944, 0
        %v1008 = vsel %vm281, %v945, 0
        %v1011 = vsel %vm281, %v946, 0
        %v1014 = vsel %vm281, %v947, 0
        %v1017 = vsel %vm281, %v948, 0
        %v1020 = vsel %vm281, %v949, 0
        %v1023 = vsel %vm281, %v950, 0
        %v1026 = vsel %vm281, %v951, 0
        %v1029 = vsel %vm281, %v952, 0
        %v1032 = vsel %vm281, %v953, 0
        %v1035 = vsel %vm281, %v954, 0
        %v1038 = vsel %vm281, %v955, 0
        %v1041 = vsel %vm281, %v956, 0
        %v1044 = vsel %vm281, %v957, 0
        %v1047 = vsel %vm281, %v958, 0
        %v1050 = vsel %vm281, %v959, 0
        %v1053 = vsel %vm281, %v960, 0
        %v1056 = vsel %vm281, %v961, 0
        %v1059 = vsel %vm281, %v962, 0
        %v1062 = vsel %vm378, %v964, 0
        %1064 = vmatprep.subr.mxu0 0.0
        %1065 = vmatpush1.msra.mxu0 %v1062
        %1066 = vmatprep.subr.mxu0 0.0
        %1067 = vmatpush1.msra.mxu0 0.0
        %1068 = vmatprep.subr.mxu0 0.0
        %1069 = vmatpush1.msra.mxu0 0.0
        %1070 = vmatprep.subr.mxu0 0.0
        %1071 = vmatpush1.msra.mxu0 0.0
        %1072 = vmatprep.subr.mxu0 0.0
        %1073 = vmatpush1.msra.mxu0 0.0
        %1074 = vmatprep.subr.mxu0 0.0
        %1075 = vmatpush1.msra.mxu0 0.0
        %1076 = vmatprep.subr.mxu0 0.0
        %1077 = vmatpush1.msra.mxu0 0.0
        %1078 = vmatprep.subr.mxu0 0.0
        %1079 = vmatpush1.msra.mxu0 0.0
        %1080 = vmatprep.subr.mxu0 0.0
        %1081 = vmatpush1.msra.mxu0 0.0
        %1082 = vmatprep.subr.mxu0 0.0
        %1083 = vmatpush1.msra.mxu0 0.0
        %1084 = vmatprep.subr.mxu0 0.0
        %1085 = vmatpush1.msra.mxu0 0.0
        %1086 = vmatprep.subr.mxu0 0.0
        %1087 = vmatpush1.msra.mxu0 0.0
        %1088 = vmatprep.subr.mxu0 0.0
        %1089 = vmatpush1.msra.mxu0 0.0
        %1090 = vmatprep.subr.mxu0 0.0
        %1091 = vmatpush1.msra.mxu0 0.0
        %1092 = vmatprep.subr.mxu0 0.0
        %1093 = vmatpush1.msra.mxu0 0.0
        %1094 = vmatprep.subr.mxu0 0.0
        %1095 = vmatpush1.msra.mxu0 0.0
        %1096 = vmatprep.subr.mxu0 0.0
        %1097 = vmatpush1.msra.mxu0 0.0
        %1098 = vmatprep.subr.mxu0 0.0
        %1099 = vmatpush1.msra.mxu0 0.0
        %1100 = vmatprep.subr.mxu0 0.0
        %1101 = vmatpush1.msra.mxu0 0.0
        %1102 = vmatprep.subr.mxu0 0.0
        %1103 = vmatpush1.msra.mxu0 0.0
        %1104 = vmatprep.subr.mxu0 0.0
        %1105 = vmatpush1.msra.mxu0 0.0
        %1106 = vmatprep.subr.mxu0 0.0
        %1107 = vmatpush1.msra.mxu0 0.0
        %1108 = vmatprep.subr.mxu0 0.0
        %1109 = vmatpush1.msra.mxu0 0.0
        %1110 = vmatprep.subr.mxu0 0.0
        %1111 = vmatpush1.msra.mxu0 0.0
        %1112 = vmatprep.subr.mxu0 0.0
        %1113 = vmatpush1.msra.mxu0 0.0
        %1114 = vmatprep.subr.mxu0 0.0
        %1115 = vmatpush1.msra.mxu0 0.0
        %1116 = vmatprep.subr.mxu0 0.0
        %1117 = vmatpush1.msra.mxu0 0.0
        %1118 = vmatprep.subr.mxu0 0.0
        %1119 = vmatpush1.msra.mxu0 0.0
        %1120 = vmatprep.subr.mxu0 0.0
        %1121 = vmatpush1.msra.mxu0 0.0
        %1122 = vmatprep.subr.mxu0 0.0
        %1123 = vmatpush1.msra.mxu0 0.0
        %1124 = vmatprep.subr.mxu0 0.0
        %1125 = vmatpush1.msra.mxu0 0.0
        %1126 = vmatprep.subr.mxu0 0.0
        %1127 = vmatpush1.msra.mxu0 0.0
        %1128 = vmatprep.mubr.f32.mxu0 0.0
        %1129 = vmatmul.mubr.f32.gmra.mrb[0].mxu0 %v966
        %v1130 = vpop.f32.mrb[0].mxu0
        %v1131 = vadd.f32 0.0, %v1130
        %v1132 = vpop.f32.mrb[0].mxu0
        %1133 = vmatprep.mubr.f32.mxu0 0.0
        %1134 = vmatmul.mubr.f32.gmra.mrb[0].mxu0 %v969
        %v1135 = vpop.f32.mrb[0].mxu0
        %v1136 = vadd.f32 0.0, %v1135
        %v1137 = vpop.f32.mrb[0].mxu0
        %1138 = vmatprep.mubr.f32.mxu0 0.0
        %1139 = vmatmul.mubr.f32.gmra.mrb[0].mxu0 %v972
        %v1140 = vpop.f32.mrb[0].mxu0
        %v1141 = vadd.f32 0.0, %v1140
        %v1142 = vpop.f32.mrb[0].mxu0
        %1143 = vmatprep.mubr.f32.mxu0 0.0
        %1144 = vmatmul.mubr.f32.gmra.mrb[0].mxu0 %v975
        %v1145 = vpop.f32.mrb[0].mxu0
        %v1146 = vadd.f32 0.0, %v1145
        %v1147 = vpop.f32.mrb[0].mxu0
        %1148 = vmatprep.mubr.f32.mxu0 0.0
        %1149 = vmatmul.mubr.f32.gmra.mrb[0].mxu0 %v978
        %v1150 = vpop.f32.mrb[0].mxu0
        %v1151 = vadd.f32 0.0, %v1150
        %v1152 = vpop.f32.mrb[0].mxu0
        %1153 = vmatprep.mubr.f32.mxu0 0.0
        %1154 = vmatmul.mubr.f32.gmra.mrb[0].mxu0 %v981
        %v1155 = vpop.f32.mrb[0].mxu0
        %v1156 = vadd.f32 0.0, %v1155
        %v1157 = vpop.f32.mrb[0].mxu0
        %1158 = vmatprep.mubr.f32.mxu0 0.0
        %1159 = vmatmul.mubr.f32.gmra.mrb[0].mxu0 %v984
        %v1160 = vpop.f32.mrb[0].mxu0
        %v1161 = vadd.f32 0.0, %v1160
        %v1162 = vpop.f32.mrb[0].mxu0
        %1163 = vmatprep.mubr.f32.mxu0 0.0
        %1164 = vmatmul.mubr.f32.gmra.mrb[0].mxu0 %v987
        %v1165 = vpop.f32.mrb[0].mxu0
        %v1166 = vadd.f32 0.0, %v1165
        %v1167 = vpop.f32.mrb[0].mxu0
        %1168 = vmatprep.mubr.f32.mxu0 0.0
        %1169 = vmatmul.mubr.f32.gmra.mrb[0].mxu0 %v990
        %v1170 = vpop.f32.mrb[0].mxu0
        %v1171 = vadd.f32 0.0, %v1170
        %v1172 = vpop.f32.mrb[0].mxu0
        %1173 = vmatprep.mubr.f32.mxu0 0.0
        %1174 = vmatmul.mubr.f32.gmra.mrb[0].mxu0 %v993
        %v1175 = vpop.f32.mrb[0].mxu0
        %v1176 = vadd.f32 0.0, %v1175
        %v1177 = vpop.f32.mrb[0].mxu0
        %1178 = vmatprep.mubr.f32.mxu0 0.0
        %1179 = vmatmul.mubr.f32.gmra.mrb[0].mxu0 %v996
        %v1180 = vpop.f32.mrb[0].mxu0
        %v1181 = vadd.f32 0.0, %v1180
        %v1182 = vpop.f32.mrb[0].mxu0
        %1183 = vmatprep.mubr.f32.mxu0 0.0
        %1184 = vmatmul.mubr.f32.gmra.mrb[0].mxu0 %v999
        %v1185 = vpop.f32.mrb[0].mxu0
        %v1186 = vadd.f32 0.0, %v1185
        %v1187 = vpop.f32.mrb[0].mxu0
        %1188 = vmatprep.mubr.f32.mxu0 0.0
        %1189 = vmatmul.mubr.f32.gmra.mrb[0].mxu0 %v1002
        %v1190 = vpop.f32.mrb[0].mxu0
        %v1191 = vadd.f32 0.0, %v1190
        %v1192 = vpop.f32.mrb[0].mxu0
        %1193 = vmatprep.mubr.f32.mxu0 0.0
        %1194 = vmatmul.mubr.f32.gmra.mrb[0].mxu0 %v1005
        %v1195 = vpop.f32.mrb[0].mxu0
        %v1196 = vadd.f32 0.0, %v1195
        %v1197 = vpop.f32.mrb[0].mxu0
        %1198 = vmatprep.mubr.f32.mxu0 0.0
        %1199 = vmatmul.mubr.f32.gmra.mrb[0].mxu0 %v1008
        %v1200 = vpop.f32.mrb[0].mxu0
        %v1201 = vadd.f32 0.0, %v1200
        %v1202 = vpop.f32.mrb[0].mxu0
        %1203 = vmatprep.mubr.f32.mxu0 0.0
        %1204 = vmatmul.mubr.f32.gmra.mrb[0].mxu0 %v1011
        %v1205 = vpop.f32.mrb[0].mxu0
        %v1206 = vadd.f32 0.0, %v1205
        %v1207 = vpop.f32.mrb[0].mxu0
        %1208 = vmatprep.mubr.f32.mxu0 0.0
        %1209 = vmatmul.mubr.f32.gmra.mrb[0].mxu0 %v1014
        %v1210 = vpop.f32.mrb[0].mxu0
        %v1211 = vadd.f32 0.0, %v1210
        %v1212 = vpop.f32.mrb[0].mxu0
        %1213 = vmatprep.mubr.f32.mxu0 0.0
        %1214 = vmatmul.mubr.f32.gmra.mrb[0].mxu0 %v1017
        %v1215 = vpop.f32.mrb[0].mxu0
        %v1216 = vadd.f32 0.0, %v1215
        %v1217 = vpop.f32.mrb[0].mxu0
        %1218 = vmatprep.mubr.f32.mxu0 0.0
        %1219 = vmatmul.mubr.f32.gmra.mrb[0].mxu0 %v1020
        %v1220 = vpop.f32.mrb[0].mxu0
        %v1221 = vadd.f32 0.0, %v1220
        %v1222 = vpop.f32.mrb[0].mxu0
        %1223 = vmatprep.mubr.f32.mxu0 0.0
        %1224 = vmatmul.mubr.f32.gmra.mrb[0].mxu0 %v1023
        %v1225 = vpop.f32.mrb[0].mxu0
        %v1226 = vadd.f32 0.0, %v1225
        %v1227 = vpop.f32.mrb[0].mxu0
        %1228 = vmatprep.mubr.f32.mxu0 0.0
        %1229 = vmatmul.mubr.f32.gmra.mrb[0].mxu0 %v1026
        %v1230 = vpop.f32.mrb[0].mxu0
        %v1231 = vadd.f32 0.0, %v1230
        %v1232 = vpop.f32.mrb[0].mxu0
        %1233 = vmatprep.mubr.f32.mxu0 0.0
        %1234 = vmatmul.mubr.f32.gmra.mrb[0].mxu0 %v1029
        %v1235 = vpop.f32.mrb[0].mxu0
        %v1236 = vadd.f32 0.0, %v1235
        %v1237 = vpop.f32.mrb[0].mxu0
        %1238 = vmatprep.mubr.f32.mxu0 0.0
        %1239 = vmatmul.mubr.f32.gmra.mrb[0].mxu0 %v1032
        %v1240 = vpop.f32.mrb[0].mxu0
        %v1241 = vadd.f32 0.0, %v1240
        %v1242 = vpop.f32.mrb[0].mxu0
        %1243 = vmatprep.mubr.f32.mxu0 0.0
        %1244 = vmatmul.mubr.f32.gmra.mrb[0].mxu0 %v1035
        %v1245 = vpop.f32.mrb[0].mxu0
        %v1246 = vadd.f32 0.0, %v1245
        %v1247 = vpop.f32.mrb[0].mxu0
        %1248 = vmatprep.mubr.f32.mxu0 0.0
        %1249 = vmatmul.mubr.f32.gmra.mrb[0].mxu0 %v1038
        %v1250 = vpop.f32.mrb[0].mxu0
        %v1251 = vadd.f32 0.0, %v1250
        %v1252 = vpop.f32.mrb[0].mxu0
        %1253 = vmatprep.mubr.f32.mxu0 0.0
        %1254 = vmatmul.mubr.f32.gmra.mrb[0].mxu0 %v1041
        %v1255 = vpop.f32.mrb[0].mxu0
        %v1256 = vadd.f32 0.0, %v1255
        %v1257 = vpop.f32.mrb[0].mxu0
        %1258 = vmatprep.mubr.f32.mxu0 0.0
        %1259 = vmatmul.mubr.f32.gmra.mrb[0].mxu0 %v1044
        %v1260 = vpop.f32.mrb[0].mxu0
        %v1261 = vadd.f32 0.0, %v1260
        %v1262 = vpop.f32.mrb[0].mxu0
        %1263 = vmatprep.mubr.f32.mxu0 0.0
        %1264 = vmatmul.mubr.f32.gmra.mrb[0].mxu0 %v1047
        %v1265 = vpop.f32.mrb[0].mxu0
        %v1266 = vadd.f32 0.0, %v1265
        %v1267 = vpop.f32.mrb[0].mxu0
        %1268 = vmatprep.mubr.f32.mxu0 0.0
        %1269 = vmatmul.mubr.f32.gmra.mrb[0].mxu0 %v1050
        %v1270 = vpop.f32.mrb[0].mxu0
        %v1271 = vadd.f32 0.0, %v1270
        %v1272 = vpop.f32.mrb[0].mxu0
        %1273 = vmatprep.mubr.f32.mxu0 0.0
        %1274 = vmatmul.mubr.f32.gmra.mrb[0].mxu0 %v1053
        %v1275 = vpop.f32.mrb[0].mxu0
        %v1276 = vadd.f32 0.0, %v1275
        %v1277 = vpop.f32.mrb[0].mxu0
        %1278 = vmatprep.mubr.f32.mxu0 0.0
        %1279 = vmatmul.mubr.f32.gmra.mrb[0].mxu0 %v1056
        %v1280 = vpop.f32.mrb[0].mxu0
        %v1281 = vadd.f32 0.0, %v1280
        %v1282 = vpop.f32.mrb[0].mxu0
        %1283 = vmatprep.mubr.f32.mxu0 0.0
        %1284 = vmatmul.mubr.f32.gmra.mrb[0].mxu0 %v1059
        %v1285 = vpop.f32.mrb[0].mxu0
        %v1286 = vadd.f32 0.0, %v1285
        %v1287 = vpop.f32.mrb[0].mxu0
        %1288 = vdwg.mxu0
        %v1289 = vadd.f32 %v773, %v1131
        %v1290 = vadd.f32 %v778, %v1136
        %v1291 = vadd.f32 %v783, %v1141
        %v1292 = vadd.f32 %v788, %v1146
        %v1293 = vadd.f32 %v793, %v1151
        %v1294 = vadd.f32 %v798, %v1156
        %v1295 = vadd.f32 %v803, %v1161
        %v1296 = vadd.f32 %v808, %v1166
        %v1297 = vadd.f32 %v813, %v1171
        %v1298 = vadd.f32 %v818, %v1176
        %v1299 = vadd.f32 %v823, %v1181
        %v1300 = vadd.f32 %v828, %v1186
        %v1301 = vadd.f32 %v833, %v1191
        %v1302 = vadd.f32 %v838, %v1196
        %v1303 = vadd.f32 %v843, %v1201
        %v1304 = vadd.f32 %v848, %v1206
        %v1305 = vadd.f32 %v853, %v1211
        %v1306 = vadd.f32 %v858, %v1216
        %v1307 = vadd.f32 %v863, %v1221
        %v1308 = vadd.f32 %v868, %v1226
        %v1309 = vadd.f32 %v873, %v1231
        %v1310 = vadd.f32 %v878, %v1236
        %v1311 = vadd.f32 %v883, %v1241
        %v1312 = vadd.f32 %v888, %v1246
        %v1313 = vadd.f32 %v893, %v1251
        %v1314 = vadd.f32 %v898, %v1256
        %v1315 = vadd.f32 %v903, %v1261
        %v1316 = vadd.f32 %v908, %v1266
        %v1317 = vadd.f32 %v913, %v1271
        %v1318 = vadd.f32 %v918, %v1276
        %v1319 = vadd.f32 %v923, %v1281
        %v1320 = vadd.f32 %v928, %v1286
        %s1321 = scalar_lea.vmem %s206, 24
        %v1322 = vld [vmem:[%s1321] sm:$0xff]
        %v1323 = vld [vmem:[%s1321 + $0x8] sm:$0xff]
        %v1324 = vld [vmem:[%s1321 + $0x18] sm:$0xff]
        %v1325 = vld [vmem:[%s1321 + $0x20] sm:$0xff]
        %v1326 = vld [vmem:[%s1321 + $0x30] sm:$0xff]
        %v1327 = vld [vmem:[%s1321 + $0x38] sm:$0xff]
        %v1328 = vld [vmem:[%s1321 + $0x48] sm:$0xff]
        %v1329 = vld [vmem:[%s1321 + $0x50] sm:$0xff]
        %v1330 = vld [vmem:[%s1321 + $0x60] sm:$0xff]
        %v1331 = vld [vmem:[%s1321 + $0x68] sm:$0xff]
        %v1332 = vld [vmem:[%s1321 + $0x78] sm:$0xff]
        %v1333 = vld [vmem:[%s1321 + $0x80] sm:$0xff]
        %v1334 = vld [vmem:[%s1321 + $0x90] sm:$0xff]
        %v1335 = vld [vmem:[%s1321 + $0x98] sm:$0xff]
        %v1336 = vld [vmem:[%s1321 + $0xa8] sm:$0xff]
        %v1337 = vld [vmem:[%s1321 + $0xb0] sm:$0xff]
        %v1338 = vld [vmem:[%s1321 + $0xc0] sm:$0xff]
        %v1339 = vld [vmem:[%s1321 + $0xc8] sm:$0xff]
        %v1340 = vld [vmem:[%s1321 + $0xd8] sm:$0xff]
        %v1341 = vld [vmem:[%s1321 + $0xe0] sm:$0xff]
        %v1342 = vld [vmem:[%s1321 + $0xf0] sm:$0xff]
        %v1343 = vld [vmem:[%s1321 + $0xf8] sm:$0xff]
        %v1344 = vld [vmem:[%s1321 + $0x108] sm:$0xff]
        %v1345 = vld [vmem:[%s1321 + $0x110] sm:$0xff]
        %v1346 = vld [vmem:[%s1321 + $0x120] sm:$0xff]
        %v1347 = vld [vmem:[%s1321 + $0x128] sm:$0xff]
        %v1348 = vld [vmem:[%s1321 + $0x138] sm:$0xff]
        %v1349 = vld [vmem:[%s1321 + $0x140] sm:$0xff]
        %v1350 = vld [vmem:[%s1321 + $0x150] sm:$0xff]
        %v1351 = vld [vmem:[%s1321 + $0x158] sm:$0xff]
        %v1352 = vld [vmem:[%s1321 + $0x168] sm:$0xff]
        %v1353 = vld [vmem:[%s1321 + $0x170] sm:$0xff]
        %s1354 = scalar_lea.vmem %s210, 12
        %v1355 = vld [vmem:[%s1354] sm:$0xf]
        %v1357 = vsel %vm281, %v1322, 0
        %v1360 = vsel %vm281, %v1323, 0
        %v1363 = vsel %vm281, %v1324, 0
        %v1366 = vsel %vm281, %v1325, 0
        %v1369 = vsel %vm281, %v1326, 0
        %v1372 = vsel %vm281, %v1327, 0
        %v1375 = vsel %vm281, %v1328, 0
        %v1378 = vsel %vm281, %v1329, 0
        %v1381 = vsel %vm281, %v1330, 0
        %v1384 = vsel %vm281, %v1331, 0
        %v1387 = vsel %vm281, %v1332, 0
        %v1390 = vsel %vm281, %v1333, 0
        %v1393 = vsel %vm281, %v1334, 0
        %v1396 = vsel %vm281, %v1335, 0
        %v1399 = vsel %vm281, %v1336, 0
        %v1402 = vsel %vm281, %v1337, 0
        %v1405 = vsel %vm281, %v1338, 0
        %v1408 = vsel %vm281, %v1339, 0
        %v1411 = vsel %vm281, %v1340, 0
        %v1414 = vsel %vm281, %v1341, 0
        %v1417 = vsel %vm281, %v1342, 0
        %v1420 = vsel %vm281, %v1343, 0
        %v1423 = vsel %vm281, %v1344, 0
        %v1426 = vsel %vm281, %v1345, 0
        %v1429 = vsel %vm281, %v1346, 0
        %v1432 = vsel %vm281, %v1347, 0
        %v1435 = vsel %vm281, %v1348, 0
        %v1438 = vsel %vm281, %v1349, 0
        %v1441 = vsel %vm281, %v1350, 0
        %v1444 = vsel %vm281, %v1351, 0
        %v1447 = vsel %vm281, %v1352, 0
        %v1450 = vsel %vm281, %v1353, 0
        %v1453 = vsel %vm378, %v1355, 0
        %1455 = vmatprep.subr.mxu0 0.0
        %1456 = vmatpush1.msra.mxu0 %v1453
        %1457 = vmatprep.subr.mxu0 0.0
        %1458 = vmatpush1.msra.mxu0 0.0
        %1459 = vmatprep.subr.mxu0 0.0
        %1460 = vmatpush1.msra.mxu0 0.0
        %1461 = vmatprep.subr.mxu0 0.0
        %1462 = vmatpush1.msra.mxu0 0.0
        %1463 = vmatprep.subr.mxu0 0.0
        %1464 = vmatpush1.msra.mxu0 0.0
        %1465 = vmatprep.subr.mxu0 0.0
        %1466 = vmatpush1.msra.mxu0 0.0
        %1467 = vmatprep.subr.mxu0 0.0
        %1468 = vmatpush1.msra.mxu0 0.0
        %1469 = vmatprep.subr.mxu0 0.0
        %1470 = vmatpush1.msra.mxu0 0.0
        %1471 = vmatprep.subr.mxu0 0.0
        %1472 = vmatpush1.msra.mxu0 0.0
        %1473 = vmatprep.subr.mxu0 0.0
        %1474 = vmatpush1.msra.mxu0 0.0
        %1475 = vmatprep.subr.mxu0 0.0
        %1476 = vmatpush1.msra.mxu0 0.0
        %1477 = vmatprep.subr.mxu0 0.0
        %1478 = vmatpush1.msra.mxu0 0.0
        %1479 = vmatprep.subr.mxu0 0.0
        %1480 = vmatpush1.msra.mxu0 0.0
        %1481 = vmatprep.subr.mxu0 0.0
        %1482 = vmatpush1.msra.mxu0 0.0
        %1483 = vmatprep.subr.mxu0 0.0
        %1484 = vmatpush1.msra.mxu0 0.0
        %1485 = vmatprep.subr.mxu0 0.0
        %1486 = vmatpush1.msra.mxu0 0.0
        %1487 = vmatprep.subr.mxu0 0.0
        %1488 = vmatpush1.msra.mxu0 0.0
        %1489 = vmatprep.subr.mxu0 0.0
        %1490 = vmatpush1.msra.mxu0 0.0
        %1491 = vmatprep.subr.mxu0 0.0
        %1492 = vmatpush1.msra.mxu0 0.0
        %1493 = vmatprep.subr.mxu0 0.0
        %1494 = vmatpush1.msra.mxu0 0.0
        %1495 = vmatprep.subr.mxu0 0.0
        %1496 = vmatpush1.msra.mxu0 0.0
        %1497 = vmatprep.subr.mxu0 0.0
        %1498 = vmatpush1.msra.mxu0 0.0
        %1499 = vmatprep.subr.mxu0 0.0
        %1500 = vmatpush1.msra.mxu0 0.0
        %1501 = vmatprep.subr.mxu0 0.0
        %1502 = vmatpush1.msra.mxu0 0.0
        %1503 = vmatprep.subr.mxu0 0.0
        %1504 = vmatpush1.msra.mxu0 0.0
        %1505 = vmatprep.subr.mxu0 0.0
        %1506 = vmatpush1.msra.mxu0 0.0
        %1507 = vmatprep.subr.mxu0 0.0
        %1508 = vmatpush1.msra.mxu0 0.0
        %1509 = vmatprep.subr.mxu0 0.0
        %1510 = vmatpush1.msra.mxu0 0.0
        %1511 = vmatprep.subr.mxu0 0.0
        %1512 = vmatpush1.msra.mxu0 0.0
        %1513 = vmatprep.subr.mxu0 0.0
        %1514 = vmatpush1.msra.mxu0 0.0
        %1515 = vmatprep.subr.mxu0 0.0
        %1516 = vmatpush1.msra.mxu0 0.0
        %1517 = vmatprep.subr.mxu0 0.0
        %1518 = vmatpush1.msra.mxu0 0.0
        %1519 = vmatprep.mubr.f32.mxu0 0.0
        %1520 = vmatmul.mubr.f32.gmra.mrb[0].mxu0 %v1357
        %v1521 = vpop.f32.mrb[0].mxu0
        %v1522 = vadd.f32 0.0, %v1521
        %v1523 = vpop.f32.mrb[0].mxu0
        %1524 = vmatprep.mubr.f32.mxu0 0.0
        %1525 = vmatmul.mubr.f32.gmra.mrb[0].mxu0 %v1360
        %v1526 = vpop.f32.mrb[0].mxu0
        %v1527 = vadd.f32 0.0, %v1526
        %v1528 = vpop.f32.mrb[0].mxu0
        %1529 = vmatprep.mubr.f32.mxu0 0.0
        %1530 = vmatmul.mubr.f32.gmra.mrb[0].mxu0 %v1363
        %v1531 = vpop.f32.mrb[0].mxu0
        %v1532 = vadd.f32 0.0, %v1531
        %v1533 = vpop.f32.mrb[0].mxu0
        %1534 = vmatprep.mubr.f32.mxu0 0.0
        %1535 = vmatmul.mubr.f32.gmra.mrb[0].mxu0 %v1366
        %v1536 = vpop.f32.mrb[0].mxu0
        %v1537 = vadd.f32 0.0, %v1536
        %v1538 = vpop.f32.mrb[0].mxu0
        %1539 = vmatprep.mubr.f32.mxu0 0.0
        %1540 = vmatmul.mubr.f32.gmra.mrb[0].mxu0 %v1369
        %v1541 = vpop.f32.mrb[0].mxu0
        %v1542 = vadd.f32 0.0, %v1541
        %v1543 = vpop.f32.mrb[0].mxu0
        %1544 = vmatprep.mubr.f32.mxu0 0.0
        %1545 = vmatmul.mubr.f32.gmra.mrb[0].mxu0 %v1372
        %v1546 = vpop.f32.mrb[0].mxu0
        %v1547 = vadd.f32 0.0, %v1546
        %v1548 = vpop.f32.mrb[0].mxu0
        %1549 = vmatprep.mubr.f32.mxu0 0.0
        %1550 = vmatmul.mubr.f32.gmra.mrb[0].mxu0 %v1375
        %v1551 = vpop.f32.mrb[0].mxu0
        %v1552 = vadd.f32 0.0, %v1551
        %v1553 = vpop.f32.mrb[0].mxu0
        %1554 = vmatprep.mubr.f32.mxu0 0.0
        %1555 = vmatmul.mubr.f32.gmra.mrb[0].mxu0 %v1378
        %v1556 = vpop.f32.mrb[0].mxu0
        %v1557 = vadd.f32 0.0, %v1556
        %v1558 = vpop.f32.mrb[0].mxu0
        %1559 = vmatprep.mubr.f32.mxu0 0.0
        %1560 = vmatmul.mubr.f32.gmra.mrb[0].mxu0 %v1381
        %v1561 = vpop.f32.mrb[0].mxu0
        %v1562 = vadd.f32 0.0, %v1561
        %v1563 = vpop.f32.mrb[0].mxu0
        %1564 = vmatprep.mubr.f32.mxu0 0.0
        %1565 = vmatmul.mubr.f32.gmra.mrb[0].mxu0 %v1384
        %v1566 = vpop.f32.mrb[0].mxu0
        %v1567 = vadd.f32 0.0, %v1566
        %v1568 = vpop.f32.mrb[0].mxu0
        %1569 = vmatprep.mubr.f32.mxu0 0.0
        %1570 = vmatmul.mubr.f32.gmra.mrb[0].mxu0 %v1387
        %v1571 = vpop.f32.mrb[0].mxu0
        %v1572 = vadd.f32 0.0, %v1571
        %v1573 = vpop.f32.mrb[0].mxu0
        %1574 = vmatprep.mubr.f32.mxu0 0.0
        %1575 = vmatmul.mubr.f32.gmra.mrb[0].mxu0 %v1390
        %v1576 = vpop.f32.mrb[0].mxu0
        %v1577 = vadd.f32 0.0, %v1576
        %v1578 = vpop.f32.mrb[0].mxu0
        %1579 = vmatprep.mubr.f32.mxu0 0.0
        %1580 = vmatmul.mubr.f32.gmra.mrb[0].mxu0 %v1393
        %v1581 = vpop.f32.mrb[0].mxu0
        %v1582 = vadd.f32 0.0, %v1581
        %v1583 = vpop.f32.mrb[0].mxu0
        %1584 = vmatprep.mubr.f32.mxu0 0.0
        %1585 = vmatmul.mubr.f32.gmra.mrb[0].mxu0 %v1396
        %v1586 = vpop.f32.mrb[0].mxu0
        %v1587 = vadd.f32 0.0, %v1586
        %v1588 = vpop.f32.mrb[0].mxu0
        %1589 = vmatprep.mubr.f32.mxu0 0.0
        %1590 = vmatmul.mubr.f32.gmra.mrb[0].mxu0 %v1399
        %v1591 = vpop.f32.mrb[0].mxu0
        %v1592 = vadd.f32 0.0, %v1591
        %v1593 = vpop.f32.mrb[0].mxu0
        %1594 = vmatprep.mubr.f32.mxu0 0.0
        %1595 = vmatmul.mubr.f32.gmra.mrb[0].mxu0 %v1402
        %v1596 = vpop.f32.mrb[0].mxu0
        %v1597 = vadd.f32 0.0, %v1596
        %v1598 = vpop.f32.mrb[0].mxu0
        %1599 = vmatprep.mubr.f32.mxu0 0.0
        %1600 = vmatmul.mubr.f32.gmra.mrb[0].mxu0 %v1405
        %v1601 = vpop.f32.mrb[0].mxu0
        %v1602 = vadd.f32 0.0, %v1601
        %v1603 = vpop.f32.mrb[0].mxu0
        %1604 = vmatprep.mubr.f32.mxu0 0.0
        %1605 = vmatmul.mubr.f32.gmra.mrb[0].mxu0 %v1408
        %v1606 = vpop.f32.mrb[0].mxu0
        %v1607 = vadd.f32 0.0, %v1606
        %v1608 = vpop.f32.mrb[0].mxu0
        %1609 = vmatprep.mubr.f32.mxu0 0.0
        %1610 = vmatmul.mubr.f32.gmra.mrb[0].mxu0 %v1411
        %v1611 = vpop.f32.mrb[0].mxu0
        %v1612 = vadd.f32 0.0, %v1611
        %v1613 = vpop.f32.mrb[0].mxu0
        %1614 = vmatprep.mubr.f32.mxu0 0.0
        %1615 = vmatmul.mubr.f32.gmra.mrb[0].mxu0 %v1414
        %v1616 = vpop.f32.mrb[0].mxu0
        %v1617 = vadd.f32 0.0, %v1616
        %v1618 = vpop.f32.mrb[0].mxu0
        %1619 = vmatprep.mubr.f32.mxu0 0.0
        %1620 = vmatmul.mubr.f32.gmra.mrb[0].mxu0 %v1417
        %v1621 = vpop.f32.mrb[0].mxu0
        %v1622 = vadd.f32 0.0, %v1621
        %v1623 = vpop.f32.mrb[0].mxu0
        %1624 = vmatprep.mubr.f32.mxu0 0.0
        %1625 = vmatmul.mubr.f32.gmra.mrb[0].mxu0 %v1420
        %v1626 = vpop.f32.mrb[0].mxu0
        %v1627 = vadd.f32 0.0, %v1626
        %v1628 = vpop.f32.mrb[0].mxu0
        %1629 = vmatprep.mubr.f32.mxu0 0.0
        %1630 = vmatmul.mubr.f32.gmra.mrb[0].mxu0 %v1423
        %v1631 = vpop.f32.mrb[0].mxu0
        %v1632 = vadd.f32 0.0, %v1631
        %v1633 = vpop.f32.mrb[0].mxu0
        %1634 = vmatprep.mubr.f32.mxu0 0.0
        %1635 = vmatmul.mubr.f32.gmra.mrb[0].mxu0 %v1426
        %v1636 = vpop.f32.mrb[0].mxu0
        %v1637 = vadd.f32 0.0, %v1636
        %v1638 = vpop.f32.mrb[0].mxu0
        %1639 = vmatprep.mubr.f32.mxu0 0.0
        %1640 = vmatmul.mubr.f32.gmra.mrb[0].mxu0 %v1429
        %v1641 = vpop.f32.mrb[0].mxu0
        %v1642 = vadd.f32 0.0, %v1641
        %v1643 = vpop.f32.mrb[0].mxu0
        %1644 = vmatprep.mubr.f32.mxu0 0.0
        %1645 = vmatmul.mubr.f32.gmra.mrb[0].mxu0 %v1432
        %v1646 = vpop.f32.mrb[0].mxu0
        %v1647 = vadd.f32 0.0, %v1646
        %v1648 = vpop.f32.mrb[0].mxu0
        %1649 = vmatprep.mubr.f32.mxu0 0.0
        %1650 = vmatmul.mubr.f32.gmra.mrb[0].mxu0 %v1435
        %v1651 = vpop.f32.mrb[0].mxu0
        %v1652 = vadd.f32 0.0, %v1651
        %v1653 = vpop.f32.mrb[0].mxu0
        %1654 = vmatprep.mubr.f32.mxu0 0.0
        %1655 = vmatmul.mubr.f32.gmra.mrb[0].mxu0 %v1438
        %v1656 = vpop.f32.mrb[0].mxu0
        %v1657 = vadd.f32 0.0, %v1656
        %v1658 = vpop.f32.mrb[0].mxu0
        %1659 = vmatprep.mubr.f32.mxu0 0.0
        %1660 = vmatmul.mubr.f32.gmra.mrb[0].mxu0 %v1441
        %v1661 = vpop.f32.mrb[0].mxu0
        %v1662 = vadd.f32 0.0, %v1661
        %v1663 = vpop.f32.mrb[0].mxu0
        %1664 = vmatprep.mubr.f32.mxu0 0.0
        %1665 = vmatmul.mubr.f32.gmra.mrb[0].mxu0 %v1444
        %v1666 = vpop.f32.mrb[0].mxu0
        %v1667 = vadd.f32 0.0, %v1666
        %v1668 = vpop.f32.mrb[0].mxu0
        %1669 = vmatprep.mubr.f32.mxu0 0.0
        %1670 = vmatmul.mubr.f32.gmra.mrb[0].mxu0 %v1447
        %v1671 = vpop.f32.mrb[0].mxu0
        %v1672 = vadd.f32 0.0, %v1671
        %v1673 = vpop.f32.mrb[0].mxu0
        %1674 = vmatprep.mubr.f32.mxu0 0.0
        %1675 = vmatmul.mubr.f32.gmra.mrb[0].mxu0 %v1450
        %v1676 = vpop.f32.mrb[0].mxu0
        %v1677 = vadd.f32 0.0, %v1676
        %v1678 = vpop.f32.mrb[0].mxu0
        %1679 = vdwg.mxu0
        %v1680 = vadd.f32 %v1289, %v1522
        %v1681 = vadd.f32 %v1290, %v1527
        %v1682 = vadd.f32 %v1291, %v1532
        %v1683 = vadd.f32 %v1292, %v1537
        %v1684 = vadd.f32 %v1293, %v1542
        %v1685 = vadd.f32 %v1294, %v1547
        %v1686 = vadd.f32 %v1295, %v1552
        %v1687 = vadd.f32 %v1296, %v1557
        %v1688 = vadd.f32 %v1297, %v1562
        %v1689 = vadd.f32 %v1298, %v1567
        %v1690 = vadd.f32 %v1299, %v1572
        %v1691 = vadd.f32 %v1300, %v1577
        %v1692 = vadd.f32 %v1301, %v1582
        %v1693 = vadd.f32 %v1302, %v1587
        %v1694 = vadd.f32 %v1303, %v1592
        %v1695 = vadd.f32 %v1304, %v1597
        %v1696 = vadd.f32 %v1305, %v1602
        %v1697 = vadd.f32 %v1306, %v1607
        %v1698 = vadd.f32 %v1307, %v1612
        %v1699 = vadd.f32 %v1308, %v1617
        %v1700 = vadd.f32 %v1309, %v1622
        %v1701 = vadd.f32 %v1310, %v1627
        %v1702 = vadd.f32 %v1311, %v1632
        %v1703 = vadd.f32 %v1312, %v1637
        %v1704 = vadd.f32 %v1313, %v1642
        %v1705 = vadd.f32 %v1314, %v1647
        %v1706 = vadd.f32 %v1315, %v1652
        %v1707 = vadd.f32 %v1316, %v1657
        %v1708 = vadd.f32 %v1317, %v1662
        %v1709 = vadd.f32 %v1318, %v1667
        %v1710 = vadd.f32 %v1319, %v1672
        %v1711 = vadd.f32 %v1320, %v1677
        %v1712 = vld [vmem:[%s1321 + $0x1] sm:$0xff]
        %v1713 = vld [vmem:[%s1321 + $0x9] sm:$0xff]
        %v1714 = vld [vmem:[%s1321 + $0x19] sm:$0xff]
        %v1715 = vld [vmem:[%s1321 + $0x21] sm:$0xff]
        %v1716 = vld [vmem:[%s1321 + $0x31] sm:$0xff]
        %v1717 = vld [vmem:[%s1321 + $0x39] sm:$0xff]
        %v1718 = vld [vmem:[%s1321 + $0x49] sm:$0xff]
        %v1719 = vld [vmem:[%s1321 + $0x51] sm:$0xff]
        %v1720 = vld [vmem:[%s1321 + $0x61] sm:$0xff]
        %v1721 = vld [vmem:[%s1321 + $0x69] sm:$0xff]
        %v1722 = vld [vmem:[%s1321 + $0x79] sm:$0xff]
        %v1723 = vld [vmem:[%s1321 + $0x81] sm:$0xff]
        %v1724 = vld [vmem:[%s1321 + $0x91] sm:$0xff]
        %v1725 = vld [vmem:[%s1321 + $0x99] sm:$0xff]
        %v1726 = vld [vmem:[%s1321 + $0xa9] sm:$0xff]
        %v1727 = vld [vmem:[%s1321 + $0xb1] sm:$0xff]
        %v1728 = vld [vmem:[%s1321 + $0xc1] sm:$0xff]
        %v1729 = vld [vmem:[%s1321 + $0xc9] sm:$0xff]
        %v1730 = vld [vmem:[%s1321 + $0xd9] sm:$0xff]
        %v1731 = vld [vmem:[%s1321 + $0xe1] sm:$0xff]
        %v1732 = vld [vmem:[%s1321 + $0xf1] sm:$0xff]
        %v1733 = vld [vmem:[%s1321 + $0xf9] sm:$0xff]
        %v1734 = vld [vmem:[%s1321 + $0x109] sm:$0xff]
        %v1735 = vld [vmem:[%s1321 + $0x111] sm:$0xff]
        %v1736 = vld [vmem:[%s1321 + $0x121] sm:$0xff]
        %v1737 = vld [vmem:[%s1321 + $0x129] sm:$0xff]
        %v1738 = vld [vmem:[%s1321 + $0x139] sm:$0xff]
        %v1739 = vld [vmem:[%s1321 + $0x141] sm:$0xff]
        %v1740 = vld [vmem:[%s1321 + $0x151] sm:$0xff]
        %v1741 = vld [vmem:[%s1321 + $0x159] sm:$0xff]
        %v1742 = vld [vmem:[%s1321 + $0x169] sm:$0xff]
        %v1743 = vld [vmem:[%s1321 + $0x171] sm:$0xff]
        %s1744 = scalar_lea.vmem %s210, 16
        %v1745 = vld [vmem:[%s1744] sm:$0xf]
        %v1747 = vsel %vm281, %v1712, 0
        %v1750 = vsel %vm281, %v1713, 0
        %v1753 = vsel %vm281, %v1714, 0
        %v1756 = vsel %vm281, %v1715, 0
        %v1759 = vsel %vm281, %v1716, 0
        %v1762 = vsel %vm281, %v1717, 0
        %v1765 = vsel %vm281, %v1718, 0
        %v1768 = vsel %vm281, %v1719, 0
        %v1771 = vsel %vm281, %v1720, 0
        %v1774 = vsel %vm281, %v1721, 0
        %v1777 = vsel %vm281, %v1722, 0
        %v1780 = vsel %vm281, %v1723, 0
        %v1783 = vsel %vm281, %v1724, 0
        %v1786 = vsel %vm281, %v1725, 0
        %v1789 = vsel %vm281, %v1726, 0
        %v1792 = vsel %vm281, %v1727, 0
        %v1795 = vsel %vm281, %v1728, 0
        %v1798 = vsel %vm281, %v1729, 0
        %v1801 = vsel %vm281, %v1730, 0
        %v1804 = vsel %vm281, %v1731, 0
        %v1807 = vsel %vm281, %v1732, 0
        %v1810 = vsel %vm281, %v1733, 0
        %v1813 = vsel %vm281, %v1734, 0
        %v1816 = vsel %vm281, %v1735, 0
        %v1819 = vsel %vm281, %v1736, 0
        %v1822 = vsel %vm281, %v1737, 0
        %v1825 = vsel %vm281, %v1738, 0
        %v1828 = vsel %vm281, %v1739, 0
        %v1831 = vsel %vm281, %v1740, 0
        %v1834 = vsel %vm281, %v1741, 0
        %v1837 = vsel %vm281, %v1742, 0
        %v1840 = vsel %vm281, %v1743, 0
        %v1843 = vsel %vm378, %v1745, 0
        %1845 = vmatprep.subr.mxu0 0.0
        %1846 = vmatpush1.msra.mxu0 %v1843
        %1847 = vmatprep.subr.mxu0 0.0
        %1848 = vmatpush1.msra.mxu0 0.0
        %1849 = vmatprep.subr.mxu0 0.0
        %1850 = vmatpush1.msra.mxu0 0.0
        %1851 = vmatprep.subr.mxu0 0.0
        %1852 = vmatpush1.msra.mxu0 0.0
        %1853 = vmatprep.subr.mxu0 0.0
        %1854 = vmatpush1.msra.mxu0 0.0
        %1855 = vmatprep.subr.mxu0 0.0
        %1856 = vmatpush1.msra.mxu0 0.0
        %1857 = vmatprep.subr.mxu0 0.0
        %1858 = vmatpush1.msra.mxu0 0.0
        %1859 = vmatprep.subr.mxu0 0.0
        %1860 = vmatpush1.msra.mxu0 0.0
        %1861 = vmatprep.subr.mxu0 0.0
        %1862 = vmatpush1.msra.mxu0 0.0
        %1863 = vmatprep.subr.mxu0 0.0
        %1864 = vmatpush1.msra.mxu0 0.0
        %1865 = vmatprep.subr.mxu0 0.0
        %1866 = vmatpush1.msra.mxu0 0.0
        %1867 = vmatprep.subr.mxu0 0.0
        %1868 = vmatpush1.msra.mxu0 0.0
        %1869 = vmatprep.subr.mxu0 0.0
        %1870 = vmatpush1.msra.mxu0 0.0
        %1871 = vmatprep.subr.mxu0 0.0
        %1872 = vmatpush1.msra.mxu0 0.0
        %1873 = vmatprep.subr.mxu0 0.0
        %1874 = vmatpush1.msra.mxu0 0.0
        %1875 = vmatprep.subr.mxu0 0.0
        %1876 = vmatpush1.msra.mxu0 0.0
        %1877 = vmatprep.subr.mxu0 0.0
        %1878 = vmatpush1.msra.mxu0 0.0
        %1879 = vmatprep.subr.mxu0 0.0
        %1880 = vmatpush1.msra.mxu0 0.0
        %1881 = vmatprep.subr.mxu0 0.0
        %1882 = vmatpush1.msra.mxu0 0.0
        %1883 = vmatprep.subr.mxu0 0.0
        %1884 = vmatpush1.msra.mxu0 0.0
        %1885 = vmatprep.subr.mxu0 0.0
        %1886 = vmatpush1.msra.mxu0 0.0
        %1887 = vmatprep.subr.mxu0 0.0
        %1888 = vmatpush1.msra.mxu0 0.0
        %1889 = vmatprep.subr.mxu0 0.0
        %1890 = vmatpush1.msra.mxu0 0.0
        %1891 = vmatprep.subr.mxu0 0.0
        %1892 = vmatpush1.msra.mxu0 0.0
        %1893 = vmatprep.subr.mxu0 0.0
        %1894 = vmatpush1.msra.mxu0 0.0
        %1895 = vmatprep.subr.mxu0 0.0
        %1896 = vmatpush1.msra.mxu0 0.0
        %1897 = vmatprep.subr.mxu0 0.0
        %1898 = vmatpush1.msra.mxu0 0.0
        %1899 = vmatprep.subr.mxu0 0.0
        %1900 = vmatpush1.msra.mxu0 0.0
        %1901 = vmatprep.subr.mxu0 0.0
        %1902 = vmatpush1.msra.mxu0 0.0
        %1903 = vmatprep.subr.mxu0 0.0
        %1904 = vmatpush1.msra.mxu0 0.0
        %1905 = vmatprep.subr.mxu0 0.0
        %1906 = vmatpush1.msra.mxu0 0.0
        %1907 = vmatprep.subr.mxu0 0.0
        %1908 = vmatpush1.msra.mxu0 0.0
        %1909 = vmatprep.mubr.f32.mxu0 0.0
        %1910 = vmatmul.mubr.f32.gmra.mrb[0].mxu0 %v1747
        %v1911 = vpop.f32.mrb[0].mxu0
        %v1912 = vadd.f32 0.0, %v1911
        %v1913 = vpop.f32.mrb[0].mxu0
        %1914 = vmatprep.mubr.f32.mxu0 0.0
        %1915 = vmatmul.mubr.f32.gmra.mrb[0].mxu0 %v1750
        %v1916 = vpop.f32.mrb[0].mxu0
        %v1917 = vadd.f32 0.0, %v1916
        %v1918 = vpop.f32.mrb[0].mxu0
        %1919 = vmatprep.mubr.f32.mxu0 0.0
        %1920 = vmatmul.mubr.f32.gmra.mrb[0].mxu0 %v1753
        %v1921 = vpop.f32.mrb[0].mxu0
        %v1922 = vadd.f32 0.0, %v1921
        %v1923 = vpop.f32.mrb[0].mxu0
        %1924 = vmatprep.mubr.f32.mxu0 0.0
        %1925 = vmatmul.mubr.f32.gmra.mrb[0].mxu0 %v1756
        %v1926 = vpop.f32.mrb[0].mxu0
        %v1927 = vadd.f32 0.0, %v1926
        %v1928 = vpop.f32.mrb[0].mxu0
        %1929 = vmatprep.mubr.f32.mxu0 0.0
        %1930 = vmatmul.mubr.f32.gmra.mrb[0].mxu0 %v1759
        %v1931 = vpop.f32.mrb[0].mxu0
        %v1932 = vadd.f32 0.0, %v1931
        %v1933 = vpop.f32.mrb[0].mxu0
        %1934 = vmatprep.mubr.f32.mxu0 0.0
        %1935 = vmatmul.mubr.f32.gmra.mrb[0].mxu0 %v1762
        %v1936 = vpop.f32.mrb[0].mxu0
        %v1937 = vadd.f32 0.0, %v1936
        %v1938 = vpop.f32.mrb[0].mxu0
        %1939 = vmatprep.mubr.f32.mxu0 0.0
        %1940 = vmatmul.mubr.f32.gmra.mrb[0].mxu0 %v1765
        %v1941 = vpop.f32.mrb[0].mxu0
        %v1942 = vadd.f32 0.0, %v1941
        %v1943 = vpop.f32.mrb[0].mxu0
        %1944 = vmatprep.mubr.f32.mxu0 0.0
        %1945 = vmatmul.mubr.f32.gmra.mrb[0].mxu0 %v1768
        %v1946 = vpop.f32.mrb[0].mxu0
        %v1947 = vadd.f32 0.0, %v1946
        %v1948 = vpop.f32.mrb[0].mxu0
        %1949 = vmatprep.mubr.f32.mxu0 0.0
        %1950 = vmatmul.mubr.f32.gmra.mrb[0].mxu0 %v1771
        %v1951 = vpop.f32.mrb[0].mxu0
        %v1952 = vadd.f32 0.0, %v1951
        %v1953 = vpop.f32.mrb[0].mxu0
        %1954 = vmatprep.mubr.f32.mxu0 0.0
        %1955 = vmatmul.mubr.f32.gmra.mrb[0].mxu0 %v1774
        %v1956 = vpop.f32.mrb[0].mxu0
        %v1957 = vadd.f32 0.0, %v1956
        %v1958 = vpop.f32.mrb[0].mxu0
        %1959 = vmatprep.mubr.f32.mxu0 0.0
        %1960 = vmatmul.mubr.f32.gmra.mrb[0].mxu0 %v1777
        %v1961 = vpop.f32.mrb[0].mxu0
        %v1962 = vadd.f32 0.0, %v1961
        %v1963 = vpop.f32.mrb[0].mxu0
        %1964 = vmatprep.mubr.f32.mxu0 0.0
        %1965 = vmatmul.mubr.f32.gmra.mrb[0].mxu0 %v1780
        %v1966 = vpop.f32.mrb[0].mxu0
        %v1967 = vadd.f32 0.0, %v1966
        %v1968 = vpop.f32.mrb[0].mxu0
        %1969 = vmatprep.mubr.f32.mxu0 0.0
        %1970 = vmatmul.mubr.f32.gmra.mrb[0].mxu0 %v1783
        %v1971 = vpop.f32.mrb[0].mxu0
        %v1972 = vadd.f32 0.0, %v1971
        %v1973 = vpop.f32.mrb[0].mxu0
        %1974 = vmatprep.mubr.f32.mxu0 0.0
        %1975 = vmatmul.mubr.f32.gmra.mrb[0].mxu0 %v1786
        %v1976 = vpop.f32.mrb[0].mxu0
        %v1977 = vadd.f32 0.0, %v1976
        %v1978 = vpop.f32.mrb[0].mxu0
        %1979 = vmatprep.mubr.f32.mxu0 0.0
        %1980 = vmatmul.mubr.f32.gmra.mrb[0].mxu0 %v1789
        %v1981 = vpop.f32.mrb[0].mxu0
        %v1982 = vadd.f32 0.0, %v1981
        %v1983 = vpop.f32.mrb[0].mxu0
        %1984 = vmatprep.mubr.f32.mxu0 0.0
        %1985 = vmatmul.mubr.f32.gmra.mrb[0].mxu0 %v1792
        %v1986 = vpop.f32.mrb[0].mxu0
        %v1987 = vadd.f32 0.0, %v1986
        %v1988 = vpop.f32.mrb[0].mxu0
        %1989 = vmatprep.mubr.f32.mxu0 0.0
        %1990 = vmatmul.mubr.f32.gmra.mrb[0].mxu0 %v1795
        %v1991 = vpop.f32.mrb[0].mxu0
        %v1992 = vadd.f32 0.0, %v1991
        %v1993 = vpop.f32.mrb[0].mxu0
        %1994 = vmatprep.mubr.f32.mxu0 0.0
        %1995 = vmatmul.mubr.f32.gmra.mrb[0].mxu0 %v1798
        %v1996 = vpop.f32.mrb[0].mxu0
        %v1997 = vadd.f32 0.0, %v1996
        %v1998 = vpop.f32.mrb[0].mxu0
        %1999 = vmatprep.mubr.f32.mxu0 0.0
        %2000 = vmatmul.mubr.f32.gmra.mrb[0].mxu0 %v1801
        %v2001 = vpop.f32.mrb[0].mxu0
        %v2002 = vadd.f32 0.0, %v2001
        %v2003 = vpop.f32.mrb[0].mxu0
        %2004 = vmatprep.mubr.f32.mxu0 0.0
        %2005 = vmatmul.mubr.f32.gmra.mrb[0].mxu0 %v1804
        %v2006 = vpop.f32.mrb[0].mxu0
        %v2007 = vadd.f32 0.0, %v2006
        %v2008 = vpop.f32.mrb[0].mxu0
        %2009 = vmatprep.mubr.f32.mxu0 0.0
        %2010 = vmatmul.mubr.f32.gmra.mrb[0].mxu0 %v1807
        %v2011 = vpop.f32.mrb[0].mxu0
        %v2012 = vadd.f32 0.0, %v2011
        %v2013 = vpop.f32.mrb[0].mxu0
        %2014 = vmatprep.mubr.f32.mxu0 0.0
        %2015 = vmatmul.mubr.f32.gmra.mrb[0].mxu0 %v1810
        %v2016 = vpop.f32.mrb[0].mxu0
        %v2017 = vadd.f32 0.0, %v2016
        %v2018 = vpop.f32.mrb[0].mxu0
        %2019 = vmatprep.mubr.f32.mxu0 0.0
        %2020 = vmatmul.mubr.f32.gmra.mrb[0].mxu0 %v1813
        %v2021 = vpop.f32.mrb[0].mxu0
        %v2022 = vadd.f32 0.0, %v2021
        %v2023 = vpop.f32.mrb[0].mxu0
        %2024 = vmatprep.mubr.f32.mxu0 0.0
        %2025 = vmatmul.mubr.f32.gmra.mrb[0].mxu0 %v1816
        %v2026 = vpop.f32.mrb[0].mxu0
        %v2027 = vadd.f32 0.0, %v2026
        %v2028 = vpop.f32.mrb[0].mxu0
        %2029 = vmatprep.mubr.f32.mxu0 0.0
        %2030 = vmatmul.mubr.f32.gmra.mrb[0].mxu0 %v1819
        %v2031 = vpop.f32.mrb[0].mxu0
        %v2032 = vadd.f32 0.0, %v2031
        %v2033 = vpop.f32.mrb[0].mxu0
        %2034 = vmatprep.mubr.f32.mxu0 0.0
        %2035 = vmatmul.mubr.f32.gmra.mrb[0].mxu0 %v1822
        %v2036 = vpop.f32.mrb[0].mxu0
        %v2037 = vadd.f32 0.0, %v2036
        %v2038 = vpop.f32.mrb[0].mxu0
        %2039 = vmatprep.mubr.f32.mxu0 0.0
        %2040 = vmatmul.mubr.f32.gmra.mrb[0].mxu0 %v1825
        %v2041 = vpop.f32.mrb[0].mxu0
        %v2042 = vadd.f32 0.0, %v2041
        %v2043 = vpop.f32.mrb[0].mxu0
        %2044 = vmatprep.mubr.f32.mxu0 0.0
        %2045 = vmatmul.mubr.f32.gmra.mrb[0].mxu0 %v1828
        %v2046 = vpop.f32.mrb[0].mxu0
        %v2047 = vadd.f32 0.0, %v2046
        %v2048 = vpop.f32.mrb[0].mxu0
        %2049 = vmatprep.mubr.f32.mxu0 0.0
        %2050 = vmatmul.mubr.f32.gmra.mrb[0].mxu0 %v1831
        %v2051 = vpop.f32.mrb[0].mxu0
        %v2052 = vadd.f32 0.0, %v2051
        %v2053 = vpop.f32.mrb[0].mxu0
        %2054 = vmatprep.mubr.f32.mxu0 0.0
        %2055 = vmatmul.mubr.f32.gmra.mrb[0].mxu0 %v1834
        %v2056 = vpop.f32.mrb[0].mxu0
        %v2057 = vadd.f32 0.0, %v2056
        %v2058 = vpop.f32.mrb[0].mxu0
        %2059 = vmatprep.mubr.f32.mxu0 0.0
        %2060 = vmatmul.mubr.f32.gmra.mrb[0].mxu0 %v1837
        %v2061 = vpop.f32.mrb[0].mxu0
        %v2062 = vadd.f32 0.0, %v2061
        %v2063 = vpop.f32.mrb[0].mxu0
        %2064 = vmatprep.mubr.f32.mxu0 0.0
        %2065 = vmatmul.mubr.f32.gmra.mrb[0].mxu0 %v1840
        %v2066 = vpop.f32.mrb[0].mxu0
        %v2067 = vadd.f32 0.0, %v2066
        %v2068 = vpop.f32.mrb[0].mxu0
        %2069 = vdwg.mxu0
        %v2070 = vadd.f32 %v1680, %v1912
        %v2071 = vadd.f32 %v1681, %v1917
        %v2072 = vadd.f32 %v1682, %v1922
        %v2073 = vadd.f32 %v1683, %v1927
        %v2074 = vadd.f32 %v1684, %v1932
        %v2075 = vadd.f32 %v1685, %v1937
        %v2076 = vadd.f32 %v1686, %v1942
        %v2077 = vadd.f32 %v1687, %v1947
        %v2078 = vadd.f32 %v1688, %v1952
        %v2079 = vadd.f32 %v1689, %v1957
        %v2080 = vadd.f32 %v1690, %v1962
        %v2081 = vadd.f32 %v1691, %v1967
        %v2082 = vadd.f32 %v1692, %v1972
        %v2083 = vadd.f32 %v1693, %v1977
        %v2084 = vadd.f32 %v1694, %v1982
        %v2085 = vadd.f32 %v1695, %v1987
        %v2086 = vadd.f32 %v1696, %v1992
        %v2087 = vadd.f32 %v1697, %v1997
        %v2088 = vadd.f32 %v1698, %v2002
        %v2089 = vadd.f32 %v1699, %v2007
        %v2090 = vadd.f32 %v1700, %v2012
        %v2091 = vadd.f32 %v1701, %v2017
        %v2092 = vadd.f32 %v1702, %v2022
        %v2093 = vadd.f32 %v1703, %v2027
        %v2094 = vadd.f32 %v1704, %v2032
        %v2095 = vadd.f32 %v1705, %v2037
        %v2096 = vadd.f32 %v1706, %v2042
        %v2097 = vadd.f32 %v1707, %v2047
        %v2098 = vadd.f32 %v1708, %v2052
        %v2099 = vadd.f32 %v1709, %v2057
        %v2100 = vadd.f32 %v1710, %v2062
        %v2101 = vadd.f32 %v1711, %v2067
        %v2102 = vld [vmem:[%s1321 + $0x2] sm:$0xff]
        %v2103 = vld [vmem:[%s1321 + $0xa] sm:$0xff]
        %v2104 = vld [vmem:[%s1321 + $0x1a] sm:$0xff]
        %v2105 = vld [vmem:[%s1321 + $0x22] sm:$0xff]
        %v2106 = vld [vmem:[%s1321 + $0x32] sm:$0xff]
        %v2107 = vld [vmem:[%s1321 + $0x3a] sm:$0xff]
        %v2108 = vld [vmem:[%s1321 + $0x4a] sm:$0xff]
        %v2109 = vld [vmem:[%s1321 + $0x52] sm:$0xff]
        %v2110 = vld [vmem:[%s1321 + $0x62] sm:$0xff]
        %v2111 = vld [vmem:[%s1321 + $0x6a] sm:$0xff]
        %v2112 = vld [vmem:[%s1321 + $0x7a] sm:$0xff]
        %v2113 = vld [vmem:[%s1321 + $0x82] sm:$0xff]
        %v2114 = vld [vmem:[%s1321 + $0x92] sm:$0xff]
        %v2115 = vld [vmem:[%s1321 + $0x9a] sm:$0xff]
        %v2116 = vld [vmem:[%s1321 + $0xaa] sm:$0xff]
        %v2117 = vld [vmem:[%s1321 + $0xb2] sm:$0xff]
        %v2118 = vld [vmem:[%s1321 + $0xc2] sm:$0xff]
        %v2119 = vld [vmem:[%s1321 + $0xca] sm:$0xff]
        %v2120 = vld [vmem:[%s1321 + $0xda] sm:$0xff]
        %v2121 = vld [vmem:[%s1321 + $0xe2] sm:$0xff]
        %v2122 = vld [vmem:[%s1321 + $0xf2] sm:$0xff]
        %v2123 = vld [vmem:[%s1321 + $0xfa] sm:$0xff]
        %v2124 = vld [vmem:[%s1321 + $0x10a] sm:$0xff]
        %v2125 = vld [vmem:[%s1321 + $0x112] sm:$0xff]
        %v2126 = vld [vmem:[%s1321 + $0x122] sm:$0xff]
        %v2127 = vld [vmem:[%s1321 + $0x12a] sm:$0xff]
        %v2128 = vld [vmem:[%s1321 + $0x13a] sm:$0xff]
        %v2129 = vld [vmem:[%s1321 + $0x142] sm:$0xff]
        %v2130 = vld [vmem:[%s1321 + $0x152] sm:$0xff]
        %v2131 = vld [vmem:[%s1321 + $0x15a] sm:$0xff]
        %v2132 = vld [vmem:[%s1321 + $0x16a] sm:$0xff]
        %v2133 = vld [vmem:[%s1321 + $0x172] sm:$0xff]
        %s2134 = scalar_lea.vmem %s210, 20
        %v2135 = vld [vmem:[%s2134] sm:$0xf]
        %v2137 = vsel %vm281, %v2102, 0
        %v2140 = vsel %vm281, %v2103, 0
        %v2143 = vsel %vm281, %v2104, 0
        %v2146 = vsel %vm281, %v2105, 0
        %v2149 = vsel %vm281, %v2106, 0
        %v2152 = vsel %vm281, %v2107, 0
        %v2155 = vsel %vm281, %v2108, 0
        %v2158 = vsel %vm281, %v2109, 0
        %v2161 = vsel %vm281, %v2110, 0
        %v2164 = vsel %vm281, %v2111, 0
        %v2167 = vsel %vm281, %v2112, 0
        %v2170 = vsel %vm281, %v2113, 0
        %v2173 = vsel %vm281, %v2114, 0
        %v2176 = vsel %vm281, %v2115, 0
        %v2179 = vsel %vm281, %v2116, 0
        %v2182 = vsel %vm281, %v2117, 0
        %v2185 = vsel %vm281, %v2118, 0
        %v2188 = vsel %vm281, %v2119, 0
        %v2191 = vsel %vm281, %v2120, 0
        %v2194 = vsel %vm281, %v2121, 0
        %v2197 = vsel %vm281, %v2122, 0
        %v2200 = vsel %vm281, %v2123, 0
        %v2203 = vsel %vm281, %v2124, 0
        %v2206 = vsel %vm281, %v2125, 0
        %v2209 = vsel %vm281, %v2126, 0
        %v2212 = vsel %vm281, %v2127, 0
        %v2215 = vsel %vm281, %v2128, 0
        %v2218 = vsel %vm281, %v2129, 0
        %v2221 = vsel %vm281, %v2130, 0
        %v2224 = vsel %vm281, %v2131, 0
        %v2227 = vsel %vm281, %v2132, 0
        %v2230 = vsel %vm281, %v2133, 0
        %v2233 = vsel %vm378, %v2135, 0
        %2235 = vmatprep.subr.mxu0 0.0
        %2236 = vmatpush1.msra.mxu0 %v2233
        %2237 = vmatprep.subr.mxu0 0.0
        %2238 = vmatpush1.msra.mxu0 0.0
        %2239 = vmatprep.subr.mxu0 0.0
        %2240 = vmatpush1.msra.mxu0 0.0
        %2241 = vmatprep.subr.mxu0 0.0
        %2242 = vmatpush1.msra.mxu0 0.0
        %2243 = vmatprep.subr.mxu0 0.0
        %2244 = vmatpush1.msra.mxu0 0.0
        %2245 = vmatprep.subr.mxu0 0.0
        %2246 = vmatpush1.msra.mxu0 0.0
        %2247 = vmatprep.subr.mxu0 0.0
        %2248 = vmatpush1.msra.mxu0 0.0
        %2249 = vmatprep.subr.mxu0 0.0
        %2250 = vmatpush1.msra.mxu0 0.0
        %2251 = vmatprep.subr.mxu0 0.0
        %2252 = vmatpush1.msra.mxu0 0.0
        %2253 = vmatprep.subr.mxu0 0.0
        %2254 = vmatpush1.msra.mxu0 0.0
        %2255 = vmatprep.subr.mxu0 0.0
        %2256 = vmatpush1.msra.mxu0 0.0
        %2257 = vmatprep.subr.mxu0 0.0
        %2258 = vmatpush1.msra.mxu0 0.0
        %2259 = vmatprep.subr.mxu0 0.0
        %2260 = vmatpush1.msra.mxu0 0.0
        %2261 = vmatprep.subr.mxu0 0.0
        %2262 = vmatpush1.msra.mxu0 0.0
        %2263 = vmatprep.subr.mxu0 0.0
        %2264 = vmatpush1.msra.mxu0 0.0
        %2265 = vmatprep.subr.mxu0 0.0
        %2266 = vmatpush1.msra.mxu0 0.0
        %2267 = vmatprep.subr.mxu0 0.0
        %2268 = vmatpush1.msra.mxu0 0.0
        %2269 = vmatprep.subr.mxu0 0.0
        %2270 = vmatpush1.msra.mxu0 0.0
        %2271 = vmatprep.subr.mxu0 0.0
        %2272 = vmatpush1.msra.mxu0 0.0
        %2273 = vmatprep.subr.mxu0 0.0
        %2274 = vmatpush1.msra.mxu0 0.0
        %2275 = vmatprep.subr.mxu0 0.0
        %2276 = vmatpush1.msra.mxu0 0.0
        %2277 = vmatprep.subr.mxu0 0.0
        %2278 = vmatpush1.msra.mxu0 0.0
        %2279 = vmatprep.subr.mxu0 0.0
        %2280 = vmatpush1.msra.mxu0 0.0
        %2281 = vmatprep.subr.mxu0 0.0
        %2282 = vmatpush1.msra.mxu0 0.0
        %2283 = vmatprep.subr.mxu0 0.0
        %2284 = vmatpush1.msra.mxu0 0.0
        %2285 = vmatprep.subr.mxu0 0.0
        %2286 = vmatpush1.msra.mxu0 0.0
        %2287 = vmatprep.subr.mxu0 0.0
        %2288 = vmatpush1.msra.mxu0 0.0
        %2289 = vmatprep.subr.mxu0 0.0
        %2290 = vmatpush1.msra.mxu0 0.0
        %2291 = vmatprep.subr.mxu0 0.0
        %2292 = vmatpush1.msra.mxu0 0.0
        %2293 = vmatprep.subr.mxu0 0.0
        %2294 = vmatpush1.msra.mxu0 0.0
        %2295 = vmatprep.subr.mxu0 0.0
        %2296 = vmatpush1.msra.mxu0 0.0
        %2297 = vmatprep.subr.mxu0 0.0
        %2298 = vmatpush1.msra.mxu0 0.0
        %2299 = vmatprep.mubr.f32.mxu0 0.0
        %2300 = vmatmul.mubr.f32.gmra.mrb[0].mxu0 %v2137
        %v2301 = vpop.f32.mrb[0].mxu0
        %v2302 = vadd.f32 0.0, %v2301
        %v2303 = vpop.f32.mrb[0].mxu0
        %2304 = vmatprep.mubr.f32.mxu0 0.0
        %2305 = vmatmul.mubr.f32.gmra.mrb[0].mxu0 %v2140
        %v2306 = vpop.f32.mrb[0].mxu0
        %v2307 = vadd.f32 0.0, %v2306
        %v2308 = vpop.f32.mrb[0].mxu0
        %2309 = vmatprep.mubr.f32.mxu0 0.0
        %2310 = vmatmul.mubr.f32.gmra.mrb[0].mxu0 %v2143
        %v2311 = vpop.f32.mrb[0].mxu0
        %v2312 = vadd.f32 0.0, %v2311
        %v2313 = vpop.f32.mrb[0].mxu0
        %2314 = vmatprep.mubr.f32.mxu0 0.0
        %2315 = vmatmul.mubr.f32.gmra.mrb[0].mxu0 %v2146
        %v2316 = vpop.f32.mrb[0].mxu0
        %v2317 = vadd.f32 0.0, %v2316
        %v2318 = vpop.f32.mrb[0].mxu0
        %2319 = vmatprep.mubr.f32.mxu0 0.0
        %2320 = vmatmul.mubr.f32.gmra.mrb[0].mxu0 %v2149
        %v2321 = vpop.f32.mrb[0].mxu0
        %v2322 = vadd.f32 0.0, %v2321
        %v2323 = vpop.f32.mrb[0].mxu0
        %2324 = vmatprep.mubr.f32.mxu0 0.0
        %2325 = vmatmul.mubr.f32.gmra.mrb[0].mxu0 %v2152
        %v2326 = vpop.f32.mrb[0].mxu0
        %v2327 = vadd.f32 0.0, %v2326
        %v2328 = vpop.f32.mrb[0].mxu0
        %2329 = vmatprep.mubr.f32.mxu0 0.0
        %2330 = vmatmul.mubr.f32.gmra.mrb[0].mxu0 %v2155
        %v2331 = vpop.f32.mrb[0].mxu0
        %v2332 = vadd.f32 0.0, %v2331
        %v2333 = vpop.f32.mrb[0].mxu0
        %2334 = vmatprep.mubr.f32.mxu0 0.0
        %2335 = vmatmul.mubr.f32.gmra.mrb[0].mxu0 %v2158
        %v2336 = vpop.f32.mrb[0].mxu0
        %v2337 = vadd.f32 0.0, %v2336
        %v2338 = vpop.f32.mrb[0].mxu0
        %2339 = vmatprep.mubr.f32.mxu0 0.0
        %2340 = vmatmul.mubr.f32.gmra.mrb[0].mxu0 %v2161
        %v2341 = vpop.f32.mrb[0].mxu0
        %v2342 = vadd.f32 0.0, %v2341
        %v2343 = vpop.f32.mrb[0].mxu0
        %2344 = vmatprep.mubr.f32.mxu0 0.0
        %2345 = vmatmul.mubr.f32.gmra.mrb[0].mxu0 %v2164
        %v2346 = vpop.f32.mrb[0].mxu0
        %v2347 = vadd.f32 0.0, %v2346
        %v2348 = vpop.f32.mrb[0].mxu0
        %2349 = vmatprep.mubr.f32.mxu0 0.0
        %2350 = vmatmul.mubr.f32.gmra.mrb[0].mxu0 %v2167
        %v2351 = vpop.f32.mrb[0].mxu0
        %v2352 = vadd.f32 0.0, %v2351
        %v2353 = vpop.f32.mrb[0].mxu0
        %2354 = vmatprep.mubr.f32.mxu0 0.0
        %2355 = vmatmul.mubr.f32.gmra.mrb[0].mxu0 %v2170
        %v2356 = vpop.f32.mrb[0].mxu0
        %v2357 = vadd.f32 0.0, %v2356
        %v2358 = vpop.f32.mrb[0].mxu0
        %2359 = vmatprep.mubr.f32.mxu0 0.0
        %2360 = vmatmul.mubr.f32.gmra.mrb[0].mxu0 %v2173
        %v2361 = vpop.f32.mrb[0].mxu0
        %v2362 = vadd.f32 0.0, %v2361
        %v2363 = vpop.f32.mrb[0].mxu0
        %2364 = vmatprep.mubr.f32.mxu0 0.0
        %2365 = vmatmul.mubr.f32.gmra.mrb[0].mxu0 %v2176
        %v2366 = vpop.f32.mrb[0].mxu0
        %v2367 = vadd.f32 0.0, %v2366
        %v2368 = vpop.f32.mrb[0].mxu0
        %2369 = vmatprep.mubr.f32.mxu0 0.0
        %2370 = vmatmul.mubr.f32.gmra.mrb[0].mxu0 %v2179
        %v2371 = vpop.f32.mrb[0].mxu0
        %v2372 = vadd.f32 0.0, %v2371
        %v2373 = vpop.f32.mrb[0].mxu0
        %2374 = vmatprep.mubr.f32.mxu0 0.0
        %2375 = vmatmul.mubr.f32.gmra.mrb[0].mxu0 %v2182
        %v2376 = vpop.f32.mrb[0].mxu0
        %v2377 = vadd.f32 0.0, %v2376
        %v2378 = vpop.f32.mrb[0].mxu0
        %2379 = vmatprep.mubr.f32.mxu0 0.0
        %2380 = vmatmul.mubr.f32.gmra.mrb[0].mxu0 %v2185
        %v2381 = vpop.f32.mrb[0].mxu0
        %v2382 = vadd.f32 0.0, %v2381
        %v2383 = vpop.f32.mrb[0].mxu0
        %2384 = vmatprep.mubr.f32.mxu0 0.0
        %2385 = vmatmul.mubr.f32.gmra.mrb[0].mxu0 %v2188
        %v2386 = vpop.f32.mrb[0].mxu0
        %v2387 = vadd.f32 0.0, %v2386
        %v2388 = vpop.f32.mrb[0].mxu0
        %2389 = vmatprep.mubr.f32.mxu0 0.0
        %2390 = vmatmul.mubr.f32.gmra.mrb[0].mxu0 %v2191
        %v2391 = vpop.f32.mrb[0].mxu0
        %v2392 = vadd.f32 0.0, %v2391
        %v2393 = vpop.f32.mrb[0].mxu0
        %2394 = vmatprep.mubr.f32.mxu0 0.0
        %2395 = vmatmul.mubr.f32.gmra.mrb[0].mxu0 %v2194
        %v2396 = vpop.f32.mrb[0].mxu0
        %v2397 = vadd.f32 0.0, %v2396
        %v2398 = vpop.f32.mrb[0].mxu0
        %2399 = vmatprep.mubr.f32.mxu0 0.0
        %2400 = vmatmul.mubr.f32.gmra.mrb[0].mxu0 %v2197
        %v2401 = vpop.f32.mrb[0].mxu0
        %v2402 = vadd.f32 0.0, %v2401
        %v2403 = vpop.f32.mrb[0].mxu0
        %2404 = vmatprep.mubr.f32.mxu0 0.0
        %2405 = vmatmul.mubr.f32.gmra.mrb[0].mxu0 %v2200
        %v2406 = vpop.f32.mrb[0].mxu0
        %v2407 = vadd.f32 0.0, %v2406
        %v2408 = vpop.f32.mrb[0].mxu0
        %2409 = vmatprep.mubr.f32.mxu0 0.0
        %2410 = vmatmul.mubr.f32.gmra.mrb[0].mxu0 %v2203
        %v2411 = vpop.f32.mrb[0].mxu0
        %v2412 = vadd.f32 0.0, %v2411
        %v2413 = vpop.f32.mrb[0].mxu0
        %2414 = vmatprep.mubr.f32.mxu0 0.0
        %2415 = vmatmul.mubr.f32.gmra.mrb[0].mxu0 %v2206
        %v2416 = vpop.f32.mrb[0].mxu0
        %v2417 = vadd.f32 0.0, %v2416
        %v2418 = vpop.f32.mrb[0].mxu0
        %2419 = vmatprep.mubr.f32.mxu0 0.0
        %2420 = vmatmul.mubr.f32.gmra.mrb[0].mxu0 %v2209
        %v2421 = vpop.f32.mrb[0].mxu0
        %v2422 = vadd.f32 0.0, %v2421
        %v2423 = vpop.f32.mrb[0].mxu0
        %2424 = vmatprep.mubr.f32.mxu0 0.0
        %2425 = vmatmul.mubr.f32.gmra.mrb[0].mxu0 %v2212
        %v2426 = vpop.f32.mrb[0].mxu0
        %v2427 = vadd.f32 0.0, %v2426
        %v2428 = vpop.f32.mrb[0].mxu0
        %2429 = vmatprep.mubr.f32.mxu0 0.0
        %2430 = vmatmul.mubr.f32.gmra.mrb[0].mxu0 %v2215
        %v2431 = vpop.f32.mrb[0].mxu0
        %v2432 = vadd.f32 0.0, %v2431
        %v2433 = vpop.f32.mrb[0].mxu0
        %2434 = vmatprep.mubr.f32.mxu0 0.0
        %2435 = vmatmul.mubr.f32.gmra.mrb[0].mxu0 %v2218
        %v2436 = vpop.f32.mrb[0].mxu0
        %v2437 = vadd.f32 0.0, %v2436
        %v2438 = vpop.f32.mrb[0].mxu0
        %2439 = vmatprep.mubr.f32.mxu0 0.0
        %2440 = vmatmul.mubr.f32.gmra.mrb[0].mxu0 %v2221
        %v2441 = vpop.f32.mrb[0].mxu0
        %v2442 = vadd.f32 0.0, %v2441
        %v2443 = vpop.f32.mrb[0].mxu0
        %2444 = vmatprep.mubr.f32.mxu0 0.0
        %2445 = vmatmul.mubr.f32.gmra.mrb[0].mxu0 %v2224
        %v2446 = vpop.f32.mrb[0].mxu0
        %v2447 = vadd.f32 0.0, %v2446
        %v2448 = vpop.f32.mrb[0].mxu0
        %2449 = vmatprep.mubr.f32.mxu0 0.0
        %2450 = vmatmul.mubr.f32.gmra.mrb[0].mxu0 %v2227
        %v2451 = vpop.f32.mrb[0].mxu0
        %v2452 = vadd.f32 0.0, %v2451
        %v2453 = vpop.f32.mrb[0].mxu0
        %2454 = vmatprep.mubr.f32.mxu0 0.0
        %2455 = vmatmul.mubr.f32.gmra.mrb[0].mxu0 %v2230
        %v2456 = vpop.f32.mrb[0].mxu0
        %v2457 = vadd.f32 0.0, %v2456
        %v2458 = vpop.f32.mrb[0].mxu0
        %2459 = vdwg.mxu0
        %v2460 = vadd.f32 %v2070, %v2302
        %v2461 = vadd.f32 %v2071, %v2307
        %v2462 = vadd.f32 %v2072, %v2312
        %v2463 = vadd.f32 %v2073, %v2317
        %v2464 = vadd.f32 %v2074, %v2322
        %v2465 = vadd.f32 %v2075, %v2327
        %v2466 = vadd.f32 %v2076, %v2332
        %v2467 = vadd.f32 %v2077, %v2337
        %v2468 = vadd.f32 %v2078, %v2342
        %v2469 = vadd.f32 %v2079, %v2347
        %v2470 = vadd.f32 %v2080, %v2352
        %v2471 = vadd.f32 %v2081, %v2357
        %v2472 = vadd.f32 %v2082, %v2362
        %v2473 = vadd.f32 %v2083, %v2367
        %v2474 = vadd.f32 %v2084, %v2372
        %v2475 = vadd.f32 %v2085, %v2377
        %v2476 = vadd.f32 %v2086, %v2382
        %v2477 = vadd.f32 %v2087, %v2387
        %v2478 = vadd.f32 %v2088, %v2392
        %v2479 = vadd.f32 %v2089, %v2397
        %v2480 = vadd.f32 %v2090, %v2402
        %v2481 = vadd.f32 %v2091, %v2407
        %v2482 = vadd.f32 %v2092, %v2412
        %v2483 = vadd.f32 %v2093, %v2417
        %v2484 = vadd.f32 %v2094, %v2422
        %v2485 = vadd.f32 %v2095, %v2427
        %v2486 = vadd.f32 %v2096, %v2432
        %v2487 = vadd.f32 %v2097, %v2437
        %v2488 = vadd.f32 %v2098, %v2442
        %v2489 = vadd.f32 %v2099, %v2447
        %v2490 = vadd.f32 %v2100, %v2452
        %v2491 = vadd.f32 %v2101, %v2457
        %s2492 = scalar_lea.vmem %s206, 48
        %v2493 = vld [vmem:[%s2492] sm:$0xff]
        %v2494 = vld [vmem:[%s2492 + $0x8] sm:$0xff]
        %v2495 = vld [vmem:[%s2492 + $0x18] sm:$0xff]
        %v2496 = vld [vmem:[%s2492 + $0x20] sm:$0xff]
        %v2497 = vld [vmem:[%s2492 + $0x30] sm:$0xff]
        %v2498 = vld [vmem:[%s2492 + $0x38] sm:$0xff]
        %v2499 = vld [vmem:[%s2492 + $0x48] sm:$0xff]
        %v2500 = vld [vmem:[%s2492 + $0x50] sm:$0xff]
        %v2501 = vld [vmem:[%s2492 + $0x60] sm:$0xff]
        %v2502 = vld [vmem:[%s2492 + $0x68] sm:$0xff]
        %v2503 = vld [vmem:[%s2492 + $0x78] sm:$0xff]
        %v2504 = vld [vmem:[%s2492 + $0x80] sm:$0xff]
        %v2505 = vld [vmem:[%s2492 + $0x90] sm:$0xff]
        %v2506 = vld [vmem:[%s2492 + $0x98] sm:$0xff]
        %v2507 = vld [vmem:[%s2492 + $0xa8] sm:$0xff]
        %v2508 = vld [vmem:[%s2492 + $0xb0] sm:$0xff]
        %v2509 = vld [vmem:[%s2492 + $0xc0] sm:$0xff]
        %v2510 = vld [vmem:[%s2492 + $0xc8] sm:$0xff]
        %v2511 = vld [vmem:[%s2492 + $0xd8] sm:$0xff]
        %v2512 = vld [vmem:[%s2492 + $0xe0] sm:$0xff]
        %v2513 = vld [vmem:[%s2492 + $0xf0] sm:$0xff]
        %v2514 = vld [vmem:[%s2492 + $0xf8] sm:$0xff]
        %v2515 = vld [vmem:[%s2492 + $0x108] sm:$0xff]
        %v2516 = vld [vmem:[%s2492 + $0x110] sm:$0xff]
        %v2517 = vld [vmem:[%s2492 + $0x120] sm:$0xff]
        %v2518 = vld [vmem:[%s2492 + $0x128] sm:$0xff]
        %v2519 = vld [vmem:[%s2492 + $0x138] sm:$0xff]
        %v2520 = vld [vmem:[%s2492 + $0x140] sm:$0xff]
        %v2521 = vld [vmem:[%s2492 + $0x150] sm:$0xff]
        %v2522 = vld [vmem:[%s2492 + $0x158] sm:$0xff]
        %v2523 = vld [vmem:[%s2492 + $0x168] sm:$0xff]
        %v2524 = vld [vmem:[%s2492 + $0x170] sm:$0xff]
        %s2525 = scalar_lea.vmem %s210, 24
        %v2526 = vld [vmem:[%s2525] sm:$0xf]
        %v2528 = vsel %vm281, %v2493, 0
        %v2531 = vsel %vm281, %v2494, 0
        %v2534 = vsel %vm281, %v2495, 0
        %v2537 = vsel %vm281, %v2496, 0
        %v2540 = vsel %vm281, %v2497, 0
        %v2543 = vsel %vm281, %v2498, 0
        %v2546 = vsel %vm281, %v2499, 0
        %v2549 = vsel %vm281, %v2500, 0
        %v2552 = vsel %vm281, %v2501, 0
        %v2555 = vsel %vm281, %v2502, 0
        %v2558 = vsel %vm281, %v2503, 0
        %v2561 = vsel %vm281, %v2504, 0
        %v2564 = vsel %vm281, %v2505, 0
        %v2567 = vsel %vm281, %v2506, 0
        %v2570 = vsel %vm281, %v2507, 0
        %v2573 = vsel %vm281, %v2508, 0
        %v2576 = vsel %vm281, %v2509, 0
        %v2579 = vsel %vm281, %v2510, 0
        %v2582 = vsel %vm281, %v2511, 0
        %v2585 = vsel %vm281, %v2512, 0
        %v2588 = vsel %vm281, %v2513, 0
        %v2591 = vsel %vm281, %v2514, 0
        %v2594 = vsel %vm281, %v2515, 0
        %v2597 = vsel %vm281, %v2516, 0
        %v2600 = vsel %vm281, %v2517, 0
        %v2603 = vsel %vm281, %v2518, 0
        %v2606 = vsel %vm281, %v2519, 0
        %v2609 = vsel %vm281, %v2520, 0
        %v2612 = vsel %vm281, %v2521, 0
        %v2615 = vsel %vm281, %v2522, 0
        %v2618 = vsel %vm281, %v2523, 0
        %v2621 = vsel %vm281, %v2524, 0
        %v2624 = vsel %vm378, %v2526, 0
        %2626 = vmatprep.subr.mxu0 0.0
        %2627 = vmatpush1.msra.mxu0 %v2624
        %2628 = vmatprep.subr.mxu0 0.0
        %2629 = vmatpush1.msra.mxu0 0.0
        %2630 = vmatprep.subr.mxu0 0.0
        %2631 = vmatpush1.msra.mxu0 0.0
        %2632 = vmatprep.subr.mxu0 0.0
        %2633 = vmatpush1.msra.mxu0 0.0
        %2634 = vmatprep.subr.mxu0 0.0
        %2635 = vmatpush1.msra.mxu0 0.0
        %2636 = vmatprep.subr.mxu0 0.0
        %2637 = vmatpush1.msra.mxu0 0.0
        %2638 = vmatprep.subr.mxu0 0.0
        %2639 = vmatpush1.msra.mxu0 0.0
        %2640 = vmatprep.subr.mxu0 0.0
        %2641 = vmatpush1.msra.mxu0 0.0
        %2642 = vmatprep.subr.mxu0 0.0
        %2643 = vmatpush1.msra.mxu0 0.0
        %2644 = vmatprep.subr.mxu0 0.0
        %2645 = vmatpush1.msra.mxu0 0.0
        %2646 = vmatprep.subr.mxu0 0.0
        %2647 = vmatpush1.msra.mxu0 0.0
        %2648 = vmatprep.subr.mxu0 0.0
        %2649 = vmatpush1.msra.mxu0 0.0
        %2650 = vmatprep.subr.mxu0 0.0
        %2651 = vmatpush1.msra.mxu0 0.0
        %2652 = vmatprep.subr.mxu0 0.0
        %2653 = vmatpush1.msra.mxu0 0.0
        %2654 = vmatprep.subr.mxu0 0.0
        %2655 = vmatpush1.msra.mxu0 0.0
        %2656 = vmatprep.subr.mxu0 0.0
        %2657 = vmatpush1.msra.mxu0 0.0
        %2658 = vmatprep.subr.mxu0 0.0
        %2659 = vmatpush1.msra.mxu0 0.0
        %2660 = vmatprep.subr.mxu0 0.0
        %2661 = vmatpush1.msra.mxu0 0.0
        %2662 = vmatprep.subr.mxu0 0.0
        %2663 = vmatpush1.msra.mxu0 0.0
        %2664 = vmatprep.subr.mxu0 0.0
        %2665 = vmatpush1.msra.mxu0 0.0
        %2666 = vmatprep.subr.mxu0 0.0
        %2667 = vmatpush1.msra.mxu0 0.0
        %2668 = vmatprep.subr.mxu0 0.0
        %2669 = vmatpush1.msra.mxu0 0.0
        %2670 = vmatprep.subr.mxu0 0.0
        %2671 = vmatpush1.msra.mxu0 0.0
        %2672 = vmatprep.subr.mxu0 0.0
        %2673 = vmatpush1.msra.mxu0 0.0
        %2674 = vmatprep.subr.mxu0 0.0
        %2675 = vmatpush1.msra.mxu0 0.0
        %2676 = vmatprep.subr.mxu0 0.0
        %2677 = vmatpush1.msra.mxu0 0.0
        %2678 = vmatprep.subr.mxu0 0.0
        %2679 = vmatpush1.msra.mxu0 0.0
        %2680 = vmatprep.subr.mxu0 0.0
        %2681 = vmatpush1.msra.mxu0 0.0
        %2682 = vmatprep.subr.mxu0 0.0
        %2683 = vmatpush1.msra.mxu0 0.0
        %2684 = vmatprep.subr.mxu0 0.0
        %2685 = vmatpush1.msra.mxu0 0.0
        %2686 = vmatprep.subr.mxu0 0.0
        %2687 = vmatpush1.msra.mxu0 0.0
        %2688 = vmatprep.subr.mxu0 0.0
        %2689 = vmatpush1.msra.mxu0 0.0
        %2690 = vmatprep.mubr.f32.mxu0 0.0
        %2691 = vmatmul.mubr.f32.gmra.mrb[0].mxu0 %v2528
        %v2692 = vpop.f32.mrb[0].mxu0
        %v2693 = vadd.f32 0.0, %v2692
        %v2694 = vpop.f32.mrb[0].mxu0
        %2695 = vmatprep.mubr.f32.mxu0 0.0
        %2696 = vmatmul.mubr.f32.gmra.mrb[0].mxu0 %v2531
        %v2697 = vpop.f32.mrb[0].mxu0
        %v2698 = vadd.f32 0.0, %v2697
        %v2699 = vpop.f32.mrb[0].mxu0
        %2700 = vmatprep.mubr.f32.mxu0 0.0
        %2701 = vmatmul.mubr.f32.gmra.mrb[0].mxu0 %v2534
        %v2702 = vpop.f32.mrb[0].mxu0
        %v2703 = vadd.f32 0.0, %v2702
        %v2704 = vpop.f32.mrb[0].mxu0
        %2705 = vmatprep.mubr.f32.mxu0 0.0
        %2706 = vmatmul.mubr.f32.gmra.mrb[0].mxu0 %v2537
        %v2707 = vpop.f32.mrb[0].mxu0
        %v2708 = vadd.f32 0.0, %v2707
        %v2709 = vpop.f32.mrb[0].mxu0
        %2710 = vmatprep.mubr.f32.mxu0 0.0
        %2711 = vmatmul.mubr.f32.gmra.mrb[0].mxu0 %v2540
        %v2712 = vpop.f32.mrb[0].mxu0
        %v2713 = vadd.f32 0.0, %v2712
        %v2714 = vpop.f32.mrb[0].mxu0
        %2715 = vmatprep.mubr.f32.mxu0 0.0
        %2716 = vmatmul.mubr.f32.gmra.mrb[0].mxu0 %v2543
        %v2717 = vpop.f32.mrb[0].mxu0
        %v2718 = vadd.f32 0.0, %v2717
        %v2719 = vpop.f32.mrb[0].mxu0
        %2720 = vmatprep.mubr.f32.mxu0 0.0
        %2721 = vmatmul.mubr.f32.gmra.mrb[0].mxu0 %v2546
        %v2722 = vpop.f32.mrb[0].mxu0
        %v2723 = vadd.f32 0.0, %v2722
        %v2724 = vpop.f32.mrb[0].mxu0
        %2725 = vmatprep.mubr.f32.mxu0 0.0
        %2726 = vmatmul.mubr.f32.gmra.mrb[0].mxu0 %v2549
        %v2727 = vpop.f32.mrb[0].mxu0
        %v2728 = vadd.f32 0.0, %v2727
        %v2729 = vpop.f32.mrb[0].mxu0
        %2730 = vmatprep.mubr.f32.mxu0 0.0
        %2731 = vmatmul.mubr.f32.gmra.mrb[0].mxu0 %v2552
        %v2732 = vpop.f32.mrb[0].mxu0
        %v2733 = vadd.f32 0.0, %v2732
        %v2734 = vpop.f32.mrb[0].mxu0
        %2735 = vmatprep.mubr.f32.mxu0 0.0
        %2736 = vmatmul.mubr.f32.gmra.mrb[0].mxu0 %v2555
        %v2737 = vpop.f32.mrb[0].mxu0
        %v2738 = vadd.f32 0.0, %v2737
        %v2739 = vpop.f32.mrb[0].mxu0
        %2740 = vmatprep.mubr.f32.mxu0 0.0
        %2741 = vmatmul.mubr.f32.gmra.mrb[0].mxu0 %v2558
        %v2742 = vpop.f32.mrb[0].mxu0
        %v2743 = vadd.f32 0.0, %v2742
        %v2744 = vpop.f32.mrb[0].mxu0
        %2745 = vmatprep.mubr.f32.mxu0 0.0
        %2746 = vmatmul.mubr.f32.gmra.mrb[0].mxu0 %v2561
        %v2747 = vpop.f32.mrb[0].mxu0
        %v2748 = vadd.f32 0.0, %v2747
        %v2749 = vpop.f32.mrb[0].mxu0
        %2750 = vmatprep.mubr.f32.mxu0 0.0
        %2751 = vmatmul.mubr.f32.gmra.mrb[0].mxu0 %v2564
        %v2752 = vpop.f32.mrb[0].mxu0
        %v2753 = vadd.f32 0.0, %v2752
        %v2754 = vpop.f32.mrb[0].mxu0
        %2755 = vmatprep.mubr.f32.mxu0 0.0
        %2756 = vmatmul.mubr.f32.gmra.mrb[0].mxu0 %v2567
        %v2757 = vpop.f32.mrb[0].mxu0
        %v2758 = vadd.f32 0.0, %v2757
        %v2759 = vpop.f32.mrb[0].mxu0
        %2760 = vmatprep.mubr.f32.mxu0 0.0
        %2761 = vmatmul.mubr.f32.gmra.mrb[0].mxu0 %v2570
        %v2762 = vpop.f32.mrb[0].mxu0
        %v2763 = vadd.f32 0.0, %v2762
        %v2764 = vpop.f32.mrb[0].mxu0
        %2765 = vmatprep.mubr.f32.mxu0 0.0
        %2766 = vmatmul.mubr.f32.gmra.mrb[0].mxu0 %v2573
        %v2767 = vpop.f32.mrb[0].mxu0
        %v2768 = vadd.f32 0.0, %v2767
        %v2769 = vpop.f32.mrb[0].mxu0
        %2770 = vmatprep.mubr.f32.mxu0 0.0
        %2771 = vmatmul.mubr.f32.gmra.mrb[0].mxu0 %v2576
        %v2772 = vpop.f32.mrb[0].mxu0
        %v2773 = vadd.f32 0.0, %v2772
        %v2774 = vpop.f32.mrb[0].mxu0
        %2775 = vmatprep.mubr.f32.mxu0 0.0
        %2776 = vmatmul.mubr.f32.gmra.mrb[0].mxu0 %v2579
        %v2777 = vpop.f32.mrb[0].mxu0
        %v2778 = vadd.f32 0.0, %v2777
        %v2779 = vpop.f32.mrb[0].mxu0
        %2780 = vmatprep.mubr.f32.mxu0 0.0
        %2781 = vmatmul.mubr.f32.gmra.mrb[0].mxu0 %v2582
        %v2782 = vpop.f32.mrb[0].mxu0
        %v2783 = vadd.f32 0.0, %v2782
        %v2784 = vpop.f32.mrb[0].mxu0
        %2785 = vmatprep.mubr.f32.mxu0 0.0
        %2786 = vmatmul.mubr.f32.gmra.mrb[0].mxu0 %v2585
        %v2787 = vpop.f32.mrb[0].mxu0
        %v2788 = vadd.f32 0.0, %v2787
        %v2789 = vpop.f32.mrb[0].mxu0
        %2790 = vmatprep.mubr.f32.mxu0 0.0
        %2791 = vmatmul.mubr.f32.gmra.mrb[0].mxu0 %v2588
        %v2792 = vpop.f32.mrb[0].mxu0
        %v2793 = vadd.f32 0.0, %v2792
        %v2794 = vpop.f32.mrb[0].mxu0
        %2795 = vmatprep.mubr.f32.mxu0 0.0
        %2796 = vmatmul.mubr.f32.gmra.mrb[0].mxu0 %v2591
        %v2797 = vpop.f32.mrb[0].mxu0
        %v2798 = vadd.f32 0.0, %v2797
        %v2799 = vpop.f32.mrb[0].mxu0
        %2800 = vmatprep.mubr.f32.mxu0 0.0
        %2801 = vmatmul.mubr.f32.gmra.mrb[0].mxu0 %v2594
        %v2802 = vpop.f32.mrb[0].mxu0
        %v2803 = vadd.f32 0.0, %v2802
        %v2804 = vpop.f32.mrb[0].mxu0
        %2805 = vmatprep.mubr.f32.mxu0 0.0
        %2806 = vmatmul.mubr.f32.gmra.mrb[0].mxu0 %v2597
        %v2807 = vpop.f32.mrb[0].mxu0
        %v2808 = vadd.f32 0.0, %v2807
        %v2809 = vpop.f32.mrb[0].mxu0
        %2810 = vmatprep.mubr.f32.mxu0 0.0
        %2811 = vmatmul.mubr.f32.gmra.mrb[0].mxu0 %v2600
        %v2812 = vpop.f32.mrb[0].mxu0
        %v2813 = vadd.f32 0.0, %v2812
        %v2814 = vpop.f32.mrb[0].mxu0
        %2815 = vmatprep.mubr.f32.mxu0 0.0
        %2816 = vmatmul.mubr.f32.gmra.mrb[0].mxu0 %v2603
        %v2817 = vpop.f32.mrb[0].mxu0
        %v2818 = vadd.f32 0.0, %v2817
        %v2819 = vpop.f32.mrb[0].mxu0
        %2820 = vmatprep.mubr.f32.mxu0 0.0
        %2821 = vmatmul.mubr.f32.gmra.mrb[0].mxu0 %v2606
        %v2822 = vpop.f32.mrb[0].mxu0
        %v2823 = vadd.f32 0.0, %v2822
        %v2824 = vpop.f32.mrb[0].mxu0
        %2825 = vmatprep.mubr.f32.mxu0 0.0
        %2826 = vmatmul.mubr.f32.gmra.mrb[0].mxu0 %v2609
        %v2827 = vpop.f32.mrb[0].mxu0
        %v2828 = vadd.f32 0.0, %v2827
        %v2829 = vpop.f32.mrb[0].mxu0
        %2830 = vmatprep.mubr.f32.mxu0 0.0
        %2831 = vmatmul.mubr.f32.gmra.mrb[0].mxu0 %v2612
        %v2832 = vpop.f32.mrb[0].mxu0
        %v2833 = vadd.f32 0.0, %v2832
        %v2834 = vpop.f32.mrb[0].mxu0
        %2835 = vmatprep.mubr.f32.mxu0 0.0
        %2836 = vmatmul.mubr.f32.gmra.mrb[0].mxu0 %v2615
        %v2837 = vpop.f32.mrb[0].mxu0
        %v2838 = vadd.f32 0.0, %v2837
        %v2839 = vpop.f32.mrb[0].mxu0
        %2840 = vmatprep.mubr.f32.mxu0 0.0
        %2841 = vmatmul.mubr.f32.gmra.mrb[0].mxu0 %v2618
        %v2842 = vpop.f32.mrb[0].mxu0
        %v2843 = vadd.f32 0.0, %v2842
        %v2844 = vpop.f32.mrb[0].mxu0
        %2845 = vmatprep.mubr.f32.mxu0 0.0
        %2846 = vmatmul.mubr.f32.gmra.mrb[0].mxu0 %v2621
        %v2847 = vpop.f32.mrb[0].mxu0
        %v2848 = vadd.f32 0.0, %v2847
        %v2849 = vpop.f32.mrb[0].mxu0
        %2850 = vdwg.mxu0
        %v2851 = vadd.f32 %v2460, %v2693
        %v2852 = vadd.f32 %v2461, %v2698
        %v2853 = vadd.f32 %v2462, %v2703
        %v2854 = vadd.f32 %v2463, %v2708
        %v2855 = vadd.f32 %v2464, %v2713
        %v2856 = vadd.f32 %v2465, %v2718
        %v2857 = vadd.f32 %v2466, %v2723
        %v2858 = vadd.f32 %v2467, %v2728
        %v2859 = vadd.f32 %v2468, %v2733
        %v2860 = vadd.f32 %v2469, %v2738
        %v2861 = vadd.f32 %v2470, %v2743
        %v2862 = vadd.f32 %v2471, %v2748
        %v2863 = vadd.f32 %v2472, %v2753
        %v2864 = vadd.f32 %v2473, %v2758
        %v2865 = vadd.f32 %v2474, %v2763
        %v2866 = vadd.f32 %v2475, %v2768
        %v2867 = vadd.f32 %v2476, %v2773
        %v2868 = vadd.f32 %v2477, %v2778
        %v2869 = vadd.f32 %v2478, %v2783
        %v2870 = vadd.f32 %v2479, %v2788
        %v2871 = vadd.f32 %v2480, %v2793
        %v2872 = vadd.f32 %v2481, %v2798
        %v2873 = vadd.f32 %v2482, %v2803
        %v2874 = vadd.f32 %v2483, %v2808
        %v2875 = vadd.f32 %v2484, %v2813
        %v2876 = vadd.f32 %v2485, %v2818
        %v2877 = vadd.f32 %v2486, %v2823
        %v2878 = vadd.f32 %v2487, %v2828
        %v2879 = vadd.f32 %v2488, %v2833
        %v2880 = vadd.f32 %v2489, %v2838
        %v2881 = vadd.f32 %v2490, %v2843
        %v2882 = vadd.f32 %v2491, %v2848
        %v2883 = vld [vmem:[%s2492 + $0x1] sm:$0xff]
        %v2884 = vld [vmem:[%s2492 + $0x9] sm:$0xff]
        %v2885 = vld [vmem:[%s2492 + $0x19] sm:$0xff]
        %v2886 = vld [vmem:[%s2492 + $0x21] sm:$0xff]
        %v2887 = vld [vmem:[%s2492 + $0x31] sm:$0xff]
        %v2888 = vld [vmem:[%s2492 + $0x39] sm:$0xff]
        %v2889 = vld [vmem:[%s2492 + $0x49] sm:$0xff]
        %v2890 = vld [vmem:[%s2492 + $0x51] sm:$0xff]
        %v2891 = vld [vmem:[%s2492 + $0x61] sm:$0xff]
        %v2892 = vld [vmem:[%s2492 + $0x69] sm:$0xff]
        %v2893 = vld [vmem:[%s2492 + $0x79] sm:$0xff]
        %v2894 = vld [vmem:[%s2492 + $0x81] sm:$0xff]
        %v2895 = vld [vmem:[%s2492 + $0x91] sm:$0xff]
        %v2896 = vld [vmem:[%s2492 + $0x99] sm:$0xff]
        %v2897 = vld [vmem:[%s2492 + $0xa9] sm:$0xff]
        %v2898 = vld [vmem:[%s2492 + $0xb1] sm:$0xff]
        %v2899 = vld [vmem:[%s2492 + $0xc1] sm:$0xff]
        %v2900 = vld [vmem:[%s2492 + $0xc9] sm:$0xff]
        %v2901 = vld [vmem:[%s2492 + $0xd9] sm:$0xff]
        %v2902 = vld [vmem:[%s2492 + $0xe1] sm:$0xff]
        %v2903 = vld [vmem:[%s2492 + $0xf1] sm:$0xff]
        %v2904 = vld [vmem:[%s2492 + $0xf9] sm:$0xff]
        %v2905 = vld [vmem:[%s2492 + $0x109] sm:$0xff]
        %v2906 = vld [vmem:[%s2492 + $0x111] sm:$0xff]
        %v2907 = vld [vmem:[%s2492 + $0x121] sm:$0xff]
        %v2908 = vld [vmem:[%s2492 + $0x129] sm:$0xff]
        %v2909 = vld [vmem:[%s2492 + $0x139] sm:$0xff]
        %v2910 = vld [vmem:[%s2492 + $0x141] sm:$0xff]
        %v2911 = vld [vmem:[%s2492 + $0x151] sm:$0xff]
        %v2912 = vld [vmem:[%s2492 + $0x159] sm:$0xff]
        %v2913 = vld [vmem:[%s2492 + $0x169] sm:$0xff]
        %v2914 = vld [vmem:[%s2492 + $0x171] sm:$0xff]
        %s2915 = scalar_lea.vmem %s210, 28
        %v2916 = vld [vmem:[%s2915] sm:$0xf]
        %v2918 = vsel %vm281, %v2883, 0
        %v2921 = vsel %vm281, %v2884, 0
        %v2924 = vsel %vm281, %v2885, 0
        %v2927 = vsel %vm281, %v2886, 0
        %v2930 = vsel %vm281, %v2887, 0
        %v2933 = vsel %vm281, %v2888, 0
        %v2936 = vsel %vm281, %v2889, 0
        %v2939 = vsel %vm281, %v2890, 0
        %v2942 = vsel %vm281, %v2891, 0
        %v2945 = vsel %vm281, %v2892, 0
        %v2948 = vsel %vm281, %v2893, 0
        %v2951 = vsel %vm281, %v2894, 0
        %v2954 = vsel %vm281, %v2895, 0
        %v2957 = vsel %vm281, %v2896, 0
        %v2960 = vsel %vm281, %v2897, 0
        %v2963 = vsel %vm281, %v2898, 0
        %v2966 = vsel %vm281, %v2899, 0
        %v2969 = vsel %vm281, %v2900, 0
        %v2972 = vsel %vm281, %v2901, 0
        %v2975 = vsel %vm281, %v2902, 0
        %v2978 = vsel %vm281, %v2903, 0
        %v2981 = vsel %vm281, %v2904, 0
        %v2984 = vsel %vm281, %v2905, 0
        %v2987 = vsel %vm281, %v2906, 0
        %v2990 = vsel %vm281, %v2907, 0
        %v2993 = vsel %vm281, %v2908, 0
        %v2996 = vsel %vm281, %v2909, 0
        %v2999 = vsel %vm281, %v2910, 0
        %v3002 = vsel %vm281, %v2911, 0
        %v3005 = vsel %vm281, %v2912, 0
        %v3008 = vsel %vm281, %v2913, 0
        %v3011 = vsel %vm281, %v2914, 0
        %v3014 = vsel %vm378, %v2916, 0
        %3016 = vmatprep.subr.mxu0 0.0
        %3017 = vmatpush1.msra.mxu0 %v3014
        %3018 = vmatprep.subr.mxu0 0.0
        %3019 = vmatpush1.msra.mxu0 0.0
        %3020 = vmatprep.subr.mxu0 0.0
        %3021 = vmatpush1.msra.mxu0 0.0
        %3022 = vmatprep.subr.mxu0 0.0
        %3023 = vmatpush1.msra.mxu0 0.0
        %3024 = vmatprep.subr.mxu0 0.0
        %3025 = vmatpush1.msra.mxu0 0.0
        %3026 = vmatprep.subr.mxu0 0.0
        %3027 = vmatpush1.msra.mxu0 0.0
        %3028 = vmatprep.subr.mxu0 0.0
        %3029 = vmatpush1.msra.mxu0 0.0
        %3030 = vmatprep.subr.mxu0 0.0
        %3031 = vmatpush1.msra.mxu0 0.0
        %3032 = vmatprep.subr.mxu0 0.0
        %3033 = vmatpush1.msra.mxu0 0.0
        %3034 = vmatprep.subr.mxu0 0.0
        %3035 = vmatpush1.msra.mxu0 0.0
        %3036 = vmatprep.subr.mxu0 0.0
        %3037 = vmatpush1.msra.mxu0 0.0
        %3038 = vmatprep.subr.mxu0 0.0
        %3039 = vmatpush1.msra.mxu0 0.0
        %3040 = vmatprep.subr.mxu0 0.0
        %3041 = vmatpush1.msra.mxu0 0.0
        %3042 = vmatprep.subr.mxu0 0.0
        %3043 = vmatpush1.msra.mxu0 0.0
        %3044 = vmatprep.subr.mxu0 0.0
        %3045 = vmatpush1.msra.mxu0 0.0
        %3046 = vmatprep.subr.mxu0 0.0
        %3047 = vmatpush1.msra.mxu0 0.0
        %3048 = vmatprep.subr.mxu0 0.0
        %3049 = vmatpush1.msra.mxu0 0.0
        %3050 = vmatprep.subr.mxu0 0.0
        %3051 = vmatpush1.msra.mxu0 0.0
        %3052 = vmatprep.subr.mxu0 0.0
        %3053 = vmatpush1.msra.mxu0 0.0
        %3054 = vmatprep.subr.mxu0 0.0
        %3055 = vmatpush1.msra.mxu0 0.0
        %3056 = vmatprep.subr.mxu0 0.0
        %3057 = vmatpush1.msra.mxu0 0.0
        %3058 = vmatprep.subr.mxu0 0.0
        %3059 = vmatpush1.msra.mxu0 0.0
        %3060 = vmatprep.subr.mxu0 0.0
        %3061 = vmatpush1.msra.mxu0 0.0
        %3062 = vmatprep.subr.mxu0 0.0
        %3063 = vmatpush1.msra.mxu0 0.0
        %3064 = vmatprep.subr.mxu0 0.0
        %3065 = vmatpush1.msra.mxu0 0.0
        %3066 = vmatprep.subr.mxu0 0.0
        %3067 = vmatpush1.msra.mxu0 0.0
        %3068 = vmatprep.subr.mxu0 0.0
        %3069 = vmatpush1.msra.mxu0 0.0
        %3070 = vmatprep.subr.mxu0 0.0
        %3071 = vmatpush1.msra.mxu0 0.0
        %3072 = vmatprep.subr.mxu0 0.0
        %3073 = vmatpush1.msra.mxu0 0.0
        %3074 = vmatprep.subr.mxu0 0.0
        %3075 = vmatpush1.msra.mxu0 0.0
        %3076 = vmatprep.subr.mxu0 0.0
        %3077 = vmatpush1.msra.mxu0 0.0
        %3078 = vmatprep.subr.mxu0 0.0
        %3079 = vmatpush1.msra.mxu0 0.0
        %3080 = vmatprep.mubr.f32.mxu0 0.0
        %3081 = vmatmul.mubr.f32.gmra.mrb[0].mxu0 %v2918
        %v3082 = vpop.f32.mrb[0].mxu0
        %v3083 = vadd.f32 0.0, %v3082
        %v3084 = vpop.f32.mrb[0].mxu0
        %3085 = vmatprep.mubr.f32.mxu0 0.0
        %3086 = vmatmul.mubr.f32.gmra.mrb[0].mxu0 %v2921
        %v3087 = vpop.f32.mrb[0].mxu0
        %v3088 = vadd.f32 0.0, %v3087
        %v3089 = vpop.f32.mrb[0].mxu0
        %3090 = vmatprep.mubr.f32.mxu0 0.0
        %3091 = vmatmul.mubr.f32.gmra.mrb[0].mxu0 %v2924
        %v3092 = vpop.f32.mrb[0].mxu0
        %v3093 = vadd.f32 0.0, %v3092
        %v3094 = vpop.f32.mrb[0].mxu0
        %3095 = vmatprep.mubr.f32.mxu0 0.0
        %3096 = vmatmul.mubr.f32.gmra.mrb[0].mxu0 %v2927
        %v3097 = vpop.f32.mrb[0].mxu0
        %v3098 = vadd.f32 0.0, %v3097
        %v3099 = vpop.f32.mrb[0].mxu0
        %3100 = vmatprep.mubr.f32.mxu0 0.0
        %3101 = vmatmul.mubr.f32.gmra.mrb[0].mxu0 %v2930
        %v3102 = vpop.f32.mrb[0].mxu0
        %v3103 = vadd.f32 0.0, %v3102
        %v3104 = vpop.f32.mrb[0].mxu0
        %3105 = vmatprep.mubr.f32.mxu0 0.0
        %3106 = vmatmul.mubr.f32.gmra.mrb[0].mxu0 %v2933
        %v3107 = vpop.f32.mrb[0].mxu0
        %v3108 = vadd.f32 0.0, %v3107
        %v3109 = vpop.f32.mrb[0].mxu0
        %3110 = vmatprep.mubr.f32.mxu0 0.0
        %3111 = vmatmul.mubr.f32.gmra.mrb[0].mxu0 %v2936
        %v3112 = vpop.f32.mrb[0].mxu0
        %v3113 = vadd.f32 0.0, %v3112
        %v3114 = vpop.f32.mrb[0].mxu0
        %3115 = vmatprep.mubr.f32.mxu0 0.0
        %3116 = vmatmul.mubr.f32.gmra.mrb[0].mxu0 %v2939
        %v3117 = vpop.f32.mrb[0].mxu0
        %v3118 = vadd.f32 0.0, %v3117
        %v3119 = vpop.f32.mrb[0].mxu0
        %3120 = vmatprep.mubr.f32.mxu0 0.0
        %3121 = vmatmul.mubr.f32.gmra.mrb[0].mxu0 %v2942
        %v3122 = vpop.f32.mrb[0].mxu0
        %v3123 = vadd.f32 0.0, %v3122
        %v3124 = vpop.f32.mrb[0].mxu0
        %3125 = vmatprep.mubr.f32.mxu0 0.0
        %3126 = vmatmul.mubr.f32.gmra.mrb[0].mxu0 %v2945
        %v3127 = vpop.f32.mrb[0].mxu0
        %v3128 = vadd.f32 0.0, %v3127
        %v3129 = vpop.f32.mrb[0].mxu0
        %3130 = vmatprep.mubr.f32.mxu0 0.0
        %3131 = vmatmul.mubr.f32.gmra.mrb[0].mxu0 %v2948
        %v3132 = vpop.f32.mrb[0].mxu0
        %v3133 = vadd.f32 0.0, %v3132
        %v3134 = vpop.f32.mrb[0].mxu0
        %3135 = vmatprep.mubr.f32.mxu0 0.0
        %3136 = vmatmul.mubr.f32.gmra.mrb[0].mxu0 %v2951
        %v3137 = vpop.f32.mrb[0].mxu0
        %v3138 = vadd.f32 0.0, %v3137
        %v3139 = vpop.f32.mrb[0].mxu0
        %3140 = vmatprep.mubr.f32.mxu0 0.0
        %3141 = vmatmul.mubr.f32.gmra.mrb[0].mxu0 %v2954
        %v3142 = vpop.f32.mrb[0].mxu0
        %v3143 = vadd.f32 0.0, %v3142
        %v3144 = vpop.f32.mrb[0].mxu0
        %3145 = vmatprep.mubr.f32.mxu0 0.0
        %3146 = vmatmul.mubr.f32.gmra.mrb[0].mxu0 %v2957
        %v3147 = vpop.f32.mrb[0].mxu0
        %v3148 = vadd.f32 0.0, %v3147
        %v3149 = vpop.f32.mrb[0].mxu0
        %3150 = vmatprep.mubr.f32.mxu0 0.0
        %3151 = vmatmul.mubr.f32.gmra.mrb[0].mxu0 %v2960
        %v3152 = vpop.f32.mrb[0].mxu0
        %v3153 = vadd.f32 0.0, %v3152
        %v3154 = vpop.f32.mrb[0].mxu0
        %3155 = vmatprep.mubr.f32.mxu0 0.0
        %3156 = vmatmul.mubr.f32.gmra.mrb[0].mxu0 %v2963
        %v3157 = vpop.f32.mrb[0].mxu0
        %v3158 = vadd.f32 0.0, %v3157
        %v3159 = vpop.f32.mrb[0].mxu0
        %3160 = vmatprep.mubr.f32.mxu0 0.0
        %3161 = vmatmul.mubr.f32.gmra.mrb[0].mxu0 %v2966
        %v3162 = vpop.f32.mrb[0].mxu0
        %v3163 = vadd.f32 0.0, %v3162
        %v3164 = vpop.f32.mrb[0].mxu0
        %3165 = vmatprep.mubr.f32.mxu0 0.0
        %3166 = vmatmul.mubr.f32.gmra.mrb[0].mxu0 %v2969
        %v3167 = vpop.f32.mrb[0].mxu0
        %v3168 = vadd.f32 0.0, %v3167
        %v3169 = vpop.f32.mrb[0].mxu0
        %3170 = vmatprep.mubr.f32.mxu0 0.0
        %3171 = vmatmul.mubr.f32.gmra.mrb[0].mxu0 %v2972
        %v3172 = vpop.f32.mrb[0].mxu0
        %v3173 = vadd.f32 0.0, %v3172
        %v3174 = vpop.f32.mrb[0].mxu0
        %3175 = vmatprep.mubr.f32.mxu0 0.0
        %3176 = vmatmul.mubr.f32.gmra.mrb[0].mxu0 %v2975
        %v3177 = vpop.f32.mrb[0].mxu0
        %v3178 = vadd.f32 0.0, %v3177
        %v3179 = vpop.f32.mrb[0].mxu0
        %3180 = vmatprep.mubr.f32.mxu0 0.0
        %3181 = vmatmul.mubr.f32.gmra.mrb[0].mxu0 %v2978
        %v3182 = vpop.f32.mrb[0].mxu0
        %v3183 = vadd.f32 0.0, %v3182
        %v3184 = vpop.f32.mrb[0].mxu0
        %3185 = vmatprep.mubr.f32.mxu0 0.0
        %3186 = vmatmul.mubr.f32.gmra.mrb[0].mxu0 %v2981
        %v3187 = vpop.f32.mrb[0].mxu0
        %v3188 = vadd.f32 0.0, %v3187
        %v3189 = vpop.f32.mrb[0].mxu0
        %3190 = vmatprep.mubr.f32.mxu0 0.0
        %3191 = vmatmul.mubr.f32.gmra.mrb[0].mxu0 %v2984
        %v3192 = vpop.f32.mrb[0].mxu0
        %v3193 = vadd.f32 0.0, %v3192
        %v3194 = vpop.f32.mrb[0].mxu0
        %3195 = vmatprep.mubr.f32.mxu0 0.0
        %3196 = vmatmul.mubr.f32.gmra.mrb[0].mxu0 %v2987
        %v3197 = vpop.f32.mrb[0].mxu0
        %v3198 = vadd.f32 0.0, %v3197
        %v3199 = vpop.f32.mrb[0].mxu0
        %3200 = vmatprep.mubr.f32.mxu0 0.0
        %3201 = vmatmul.mubr.f32.gmra.mrb[0].mxu0 %v2990
        %v3202 = vpop.f32.mrb[0].mxu0
        %v3203 = vadd.f32 0.0, %v3202
        %v3204 = vpop.f32.mrb[0].mxu0
        %3205 = vmatprep.mubr.f32.mxu0 0.0
        %3206 = vmatmul.mubr.f32.gmra.mrb[0].mxu0 %v2993
        %v3207 = vpop.f32.mrb[0].mxu0
        %v3208 = vadd.f32 0.0, %v3207
        %v3209 = vpop.f32.mrb[0].mxu0
        %3210 = vmatprep.mubr.f32.mxu0 0.0
        %3211 = vmatmul.mubr.f32.gmra.mrb[0].mxu0 %v2996
        %v3212 = vpop.f32.mrb[0].mxu0
        %v3213 = vadd.f32 0.0, %v3212
        %v3214 = vpop.f32.mrb[0].mxu0
        %3215 = vmatprep.mubr.f32.mxu0 0.0
        %3216 = vmatmul.mubr.f32.gmra.mrb[0].mxu0 %v2999
        %v3217 = vpop.f32.mrb[0].mxu0
        %v3218 = vadd.f32 0.0, %v3217
        %v3219 = vpop.f32.mrb[0].mxu0
        %3220 = vmatprep.mubr.f32.mxu0 0.0
        %3221 = vmatmul.mubr.f32.gmra.mrb[0].mxu0 %v3002
        %v3222 = vpop.f32.mrb[0].mxu0
        %v3223 = vadd.f32 0.0, %v3222
        %v3224 = vpop.f32.mrb[0].mxu0
        %3225 = vmatprep.mubr.f32.mxu0 0.0
        %3226 = vmatmul.mubr.f32.gmra.mrb[0].mxu0 %v3005
        %v3227 = vpop.f32.mrb[0].mxu0
        %v3228 = vadd.f32 0.0, %v3227
        %v3229 = vpop.f32.mrb[0].mxu0
        %3230 = vmatprep.mubr.f32.mxu0 0.0
        %3231 = vmatmul.mubr.f32.gmra.mrb[0].mxu0 %v3008
        %v3232 = vpop.f32.mrb[0].mxu0
        %v3233 = vadd.f32 0.0, %v3232
        %v3234 = vpop.f32.mrb[0].mxu0
        %3235 = vmatprep.mubr.f32.mxu0 0.0
        %3236 = vmatmul.mubr.f32.gmra.mrb[0].mxu0 %v3011
        %v3237 = vpop.f32.mrb[0].mxu0
        %v3238 = vadd.f32 0.0, %v3237
        %v3239 = vpop.f32.mrb[0].mxu0
        %3240 = vdwg.mxu0
        %v3241 = vadd.f32 %v2851, %v3083
        %v3242 = vadd.f32 %v2852, %v3088
        %v3243 = vadd.f32 %v2853, %v3093
        %v3244 = vadd.f32 %v2854, %v3098
        %v3245 = vadd.f32 %v2855, %v3103
        %v3246 = vadd.f32 %v2856, %v3108
        %v3247 = vadd.f32 %v2857, %v3113
        %v3248 = vadd.f32 %v2858, %v3118
        %v3249 = vadd.f32 %v2859, %v3123
        %v3250 = vadd.f32 %v2860, %v3128
        %v3251 = vadd.f32 %v2861, %v3133
        %v3252 = vadd.f32 %v2862, %v3138
        %v3253 = vadd.f32 %v2863, %v3143
        %v3254 = vadd.f32 %v2864, %v3148
        %v3255 = vadd.f32 %v2865, %v3153
        %v3256 = vadd.f32 %v2866, %v3158
        %v3257 = vadd.f32 %v2867, %v3163
        %v3258 = vadd.f32 %v2868, %v3168
        %v3259 = vadd.f32 %v2869, %v3173
        %v3260 = vadd.f32 %v2870, %v3178
        %v3261 = vadd.f32 %v2871, %v3183
        %v3262 = vadd.f32 %v2872, %v3188
        %v3263 = vadd.f32 %v2873, %v3193
        %v3264 = vadd.f32 %v2874, %v3198
        %v3265 = vadd.f32 %v2875, %v3203
        %v3266 = vadd.f32 %v2876, %v3208
        %v3267 = vadd.f32 %v2877, %v3213
        %v3268 = vadd.f32 %v2878, %v3218
        %v3269 = vadd.f32 %v2879, %v3223
        %v3270 = vadd.f32 %v2880, %v3228
        %v3271 = vadd.f32 %v2881, %v3233
        %v3272 = vadd.f32 %v2882, %v3238
        %v3273 = vld [vmem:[%s2492 + $0x2] sm:$0xff]
        %v3274 = vld [vmem:[%s2492 + $0xa] sm:$0xff]
        %v3275 = vld [vmem:[%s2492 + $0x1a] sm:$0xff]
        %v3276 = vld [vmem:[%s2492 + $0x22] sm:$0xff]
        %v3277 = vld [vmem:[%s2492 + $0x32] sm:$0xff]
        %v3278 = vld [vmem:[%s2492 + $0x3a] sm:$0xff]
        %v3279 = vld [vmem:[%s2492 + $0x4a] sm:$0xff]
        %v3280 = vld [vmem:[%s2492 + $0x52] sm:$0xff]
        %v3281 = vld [vmem:[%s2492 + $0x62] sm:$0xff]
        %v3282 = vld [vmem:[%s2492 + $0x6a] sm:$0xff]
        %v3283 = vld [vmem:[%s2492 + $0x7a] sm:$0xff]
        %v3284 = vld [vmem:[%s2492 + $0x82] sm:$0xff]
        %v3285 = vld [vmem:[%s2492 + $0x92] sm:$0xff]
        %v3286 = vld [vmem:[%s2492 + $0x9a] sm:$0xff]
        %v3287 = vld [vmem:[%s2492 + $0xaa] sm:$0xff]
        %v3288 = vld [vmem:[%s2492 + $0xb2] sm:$0xff]
        %v3289 = vld [vmem:[%s2492 + $0xc2] sm:$0xff]
        %v3290 = vld [vmem:[%s2492 + $0xca] sm:$0xff]
        %v3291 = vld [vmem:[%s2492 + $0xda] sm:$0xff]
        %v3292 = vld [vmem:[%s2492 + $0xe2] sm:$0xff]
        %v3293 = vld [vmem:[%s2492 + $0xf2] sm:$0xff]
        %v3294 = vld [vmem:[%s2492 + $0xfa] sm:$0xff]
        %v3295 = vld [vmem:[%s2492 + $0x10a] sm:$0xff]
        %v3296 = vld [vmem:[%s2492 + $0x112] sm:$0xff]
        %v3297 = vld [vmem:[%s2492 + $0x122] sm:$0xff]
        %v3298 = vld [vmem:[%s2492 + $0x12a] sm:$0xff]
        %v3299 = vld [vmem:[%s2492 + $0x13a] sm:$0xff]
        %v3300 = vld [vmem:[%s2492 + $0x142] sm:$0xff]
        %v3301 = vld [vmem:[%s2492 + $0x152] sm:$0xff]
        %v3302 = vld [vmem:[%s2492 + $0x15a] sm:$0xff]
        %v3303 = vld [vmem:[%s2492 + $0x16a] sm:$0xff]
        %v3304 = vld [vmem:[%s2492 + $0x172] sm:$0xff]
        %s3305 = scalar_lea.vmem %s210, 32
        %v3306 = vld [vmem:[%s3305] sm:$0xf]
        %v3308 = vsel %vm281, %v3273, 0
        %v3311 = vsel %vm281, %v3274, 0
        %v3314 = vsel %vm281, %v3275, 0
        %v3317 = vsel %vm281, %v3276, 0
        %v3320 = vsel %vm281, %v3277, 0
        %v3323 = vsel %vm281, %v3278, 0
        %v3326 = vsel %vm281, %v3279, 0
        %v3329 = vsel %vm281, %v3280, 0
        %v3332 = vsel %vm281, %v3281, 0
        %v3335 = vsel %vm281, %v3282, 0
        %v3338 = vsel %vm281, %v3283, 0
        %v3341 = vsel %vm281, %v3284, 0
        %v3344 = vsel %vm281, %v3285, 0
        %v3347 = vsel %vm281, %v3286, 0
        %v3350 = vsel %vm281, %v3287, 0
        %v3353 = vsel %vm281, %v3288, 0
        %v3356 = vsel %vm281, %v3289, 0
        %v3359 = vsel %vm281, %v3290, 0
        %v3362 = vsel %vm281, %v3291, 0
        %v3365 = vsel %vm281, %v3292, 0
        %v3368 = vsel %vm281, %v3293, 0
        %v3371 = vsel %vm281, %v3294, 0
        %v3374 = vsel %vm281, %v3295, 0
        %v3377 = vsel %vm281, %v3296, 0
        %v3380 = vsel %vm281, %v3297, 0
        %v3383 = vsel %vm281, %v3298, 0
        %v3386 = vsel %vm281, %v3299, 0
        %v3389 = vsel %vm281, %v3300, 0
        %v3392 = vsel %vm281, %v3301, 0
        %v3395 = vsel %vm281, %v3302, 0
        %v3398 = vsel %vm281, %v3303, 0
        %v3401 = vsel %vm281, %v3304, 0
        %v3404 = vsel %vm378, %v3306, 0
        %3406 = vmatprep.subr.mxu0 0.0
        %3407 = vmatpush1.msra.mxu0 %v3404
        %3408 = vmatprep.subr.mxu0 0.0
        %3409 = vmatpush1.msra.mxu0 0.0
        %3410 = vmatprep.subr.mxu0 0.0
        %3411 = vmatpush1.msra.mxu0 0.0
        %3412 = vmatprep.subr.mxu0 0.0
        %3413 = vmatpush1.msra.mxu0 0.0
        %3414 = vmatprep.subr.mxu0 0.0
        %3415 = vmatpush1.msra.mxu0 0.0
        %3416 = vmatprep.subr.mxu0 0.0
        %3417 = vmatpush1.msra.mxu0 0.0
        %3418 = vmatprep.subr.mxu0 0.0
        %3419 = vmatpush1.msra.mxu0 0.0
        %3420 = vmatprep.subr.mxu0 0.0
        %3421 = vmatpush1.msra.mxu0 0.0
        %3422 = vmatprep.subr.mxu0 0.0
        %3423 = vmatpush1.msra.mxu0 0.0
        %3424 = vmatprep.subr.mxu0 0.0
        %3425 = vmatpush1.msra.mxu0 0.0
        %3426 = vmatprep.subr.mxu0 0.0
        %3427 = vmatpush1.msra.mxu0 0.0
        %3428 = vmatprep.subr.mxu0 0.0
        %3429 = vmatpush1.msra.mxu0 0.0
        %3430 = vmatprep.subr.mxu0 0.0
        %3431 = vmatpush1.msra.mxu0 0.0
        %3432 = vmatprep.subr.mxu0 0.0
        %3433 = vmatpush1.msra.mxu0 0.0
        %3434 = vmatprep.subr.mxu0 0.0
        %3435 = vmatpush1.msra.mxu0 0.0
        %3436 = vmatprep.subr.mxu0 0.0
        %3437 = vmatpush1.msra.mxu0 0.0
        %3438 = vmatprep.subr.mxu0 0.0
        %3439 = vmatpush1.msra.mxu0 0.0
        %3440 = vmatprep.subr.mxu0 0.0
        %3441 = vmatpush1.msra.mxu0 0.0
        %3442 = vmatprep.subr.mxu0 0.0
        %3443 = vmatpush1.msra.mxu0 0.0
        %3444 = vmatprep.subr.mxu0 0.0
        %3445 = vmatpush1.msra.mxu0 0.0
        %3446 = vmatprep.subr.mxu0 0.0
        %3447 = vmatpush1.msra.mxu0 0.0
        %3448 = vmatprep.subr.mxu0 0.0
        %3449 = vmatpush1.msra.mxu0 0.0
        %3450 = vmatprep.subr.mxu0 0.0
        %3451 = vmatpush1.msra.mxu0 0.0
        %3452 = vmatprep.subr.mxu0 0.0
        %3453 = vmatpush1.msra.mxu0 0.0
        %3454 = vmatprep.subr.mxu0 0.0
        %3455 = vmatpush1.msra.mxu0 0.0
        %3456 = vmatprep.subr.mxu0 0.0
        %3457 = vmatpush1.msra.mxu0 0.0
        %3458 = vmatprep.subr.mxu0 0.0
        %3459 = vmatpush1.msra.mxu0 0.0
        %3460 = vmatprep.subr.mxu0 0.0
        %3461 = vmatpush1.msra.mxu0 0.0
        %3462 = vmatprep.subr.mxu0 0.0
        %3463 = vmatpush1.msra.mxu0 0.0
        %3464 = vmatprep.subr.mxu0 0.0
        %3465 = vmatpush1.msra.mxu0 0.0
        %3466 = vmatprep.subr.mxu0 0.0
        %3467 = vmatpush1.msra.mxu0 0.0
        %3468 = vmatprep.subr.mxu0 0.0
        %3469 = vmatpush1.msra.mxu0 0.0
        %3470 = vmatprep.mubr.f32.mxu0 0.0
        %3471 = vmatmul.mubr.f32.gmra.mrb[0].mxu0 %v3308
        %v3472 = vpop.f32.mrb[0].mxu0
        %v3473 = vadd.f32 0.0, %v3472
        %v3474 = vpop.f32.mrb[0].mxu0
        %3475 = vmatprep.mubr.f32.mxu0 0.0
        %3476 = vmatmul.mubr.f32.gmra.mrb[0].mxu0 %v3311
        %v3477 = vpop.f32.mrb[0].mxu0
        %v3478 = vadd.f32 0.0, %v3477
        %v3479 = vpop.f32.mrb[0].mxu0
        %3480 = vmatprep.mubr.f32.mxu0 0.0
        %3481 = vmatmul.mubr.f32.gmra.mrb[0].mxu0 %v3314
        %v3482 = vpop.f32.mrb[0].mxu0
        %v3483 = vadd.f32 0.0, %v3482
        %v3484 = vpop.f32.mrb[0].mxu0
        %3485 = vmatprep.mubr.f32.mxu0 0.0
        %3486 = vmatmul.mubr.f32.gmra.mrb[0].mxu0 %v3317
        %v3487 = vpop.f32.mrb[0].mxu0
        %v3488 = vadd.f32 0.0, %v3487
        %v3489 = vpop.f32.mrb[0].mxu0
        %3490 = vmatprep.mubr.f32.mxu0 0.0
        %3491 = vmatmul.mubr.f32.gmra.mrb[0].mxu0 %v3320
        %v3492 = vpop.f32.mrb[0].mxu0
        %v3493 = vadd.f32 0.0, %v3492
        %v3494 = vpop.f32.mrb[0].mxu0
        %3495 = vmatprep.mubr.f32.mxu0 0.0
        %3496 = vmatmul.mubr.f32.gmra.mrb[0].mxu0 %v3323
        %v3497 = vpop.f32.mrb[0].mxu0
        %v3498 = vadd.f32 0.0, %v3497
        %v3499 = vpop.f32.mrb[0].mxu0
        %3500 = vmatprep.mubr.f32.mxu0 0.0
        %3501 = vmatmul.mubr.f32.gmra.mrb[0].mxu0 %v3326
        %v3502 = vpop.f32.mrb[0].mxu0
        %v3503 = vadd.f32 0.0, %v3502
        %v3504 = vpop.f32.mrb[0].mxu0
        %3505 = vmatprep.mubr.f32.mxu0 0.0
        %3506 = vmatmul.mubr.f32.gmra.mrb[0].mxu0 %v3329
        %v3507 = vpop.f32.mrb[0].mxu0
        %v3508 = vadd.f32 0.0, %v3507
        %v3509 = vpop.f32.mrb[0].mxu0
        %3510 = vmatprep.mubr.f32.mxu0 0.0
        %3511 = vmatmul.mubr.f32.gmra.mrb[0].mxu0 %v3332
        %v3512 = vpop.f32.mrb[0].mxu0
        %v3513 = vadd.f32 0.0, %v3512
        %v3514 = vpop.f32.mrb[0].mxu0
        %3515 = vmatprep.mubr.f32.mxu0 0.0
        %3516 = vmatmul.mubr.f32.gmra.mrb[0].mxu0 %v3335
        %v3517 = vpop.f32.mrb[0].mxu0
        %v3518 = vadd.f32 0.0, %v3517
        %v3519 = vpop.f32.mrb[0].mxu0
        %3520 = vmatprep.mubr.f32.mxu0 0.0
        %3521 = vmatmul.mubr.f32.gmra.mrb[0].mxu0 %v3338
        %v3522 = vpop.f32.mrb[0].mxu0
        %v3523 = vadd.f32 0.0, %v3522
        %v3524 = vpop.f32.mrb[0].mxu0
        %3525 = vmatprep.mubr.f32.mxu0 0.0
        %3526 = vmatmul.mubr.f32.gmra.mrb[0].mxu0 %v3341
        %v3527 = vpop.f32.mrb[0].mxu0
        %v3528 = vadd.f32 0.0, %v3527
        %v3529 = vpop.f32.mrb[0].mxu0
        %3530 = vmatprep.mubr.f32.mxu0 0.0
        %3531 = vmatmul.mubr.f32.gmra.mrb[0].mxu0 %v3344
        %v3532 = vpop.f32.mrb[0].mxu0
        %v3533 = vadd.f32 0.0, %v3532
        %v3534 = vpop.f32.mrb[0].mxu0
        %3535 = vmatprep.mubr.f32.mxu0 0.0
        %3536 = vmatmul.mubr.f32.gmra.mrb[0].mxu0 %v3347
        %v3537 = vpop.f32.mrb[0].mxu0
        %v3538 = vadd.f32 0.0, %v3537
        %v3539 = vpop.f32.mrb[0].mxu0
        %3540 = vmatprep.mubr.f32.mxu0 0.0
        %3541 = vmatmul.mubr.f32.gmra.mrb[0].mxu0 %v3350
        %v3542 = vpop.f32.mrb[0].mxu0
        %v3543 = vadd.f32 0.0, %v3542
        %v3544 = vpop.f32.mrb[0].mxu0
        %3545 = vmatprep.mubr.f32.mxu0 0.0
        %3546 = vmatmul.mubr.f32.gmra.mrb[0].mxu0 %v3353
        %v3547 = vpop.f32.mrb[0].mxu0
        %v3548 = vadd.f32 0.0, %v3547
        %v3549 = vpop.f32.mrb[0].mxu0
        %3550 = vmatprep.mubr.f32.mxu0 0.0
        %3551 = vmatmul.mubr.f32.gmra.mrb[0].mxu0 %v3356
        %v3552 = vpop.f32.mrb[0].mxu0
        %v3553 = vadd.f32 0.0, %v3552
        %v3554 = vpop.f32.mrb[0].mxu0
        %3555 = vmatprep.mubr.f32.mxu0 0.0
        %3556 = vmatmul.mubr.f32.gmra.mrb[0].mxu0 %v3359
        %v3557 = vpop.f32.mrb[0].mxu0
        %v3558 = vadd.f32 0.0, %v3557
        %v3559 = vpop.f32.mrb[0].mxu0
        %3560 = vmatprep.mubr.f32.mxu0 0.0
        %3561 = vmatmul.mubr.f32.gmra.mrb[0].mxu0 %v3362
        %v3562 = vpop.f32.mrb[0].mxu0
        %v3563 = vadd.f32 0.0, %v3562
        %v3564 = vpop.f32.mrb[0].mxu0
        %3565 = vmatprep.mubr.f32.mxu0 0.0
        %3566 = vmatmul.mubr.f32.gmra.mrb[0].mxu0 %v3365
        %v3567 = vpop.f32.mrb[0].mxu0
        %v3568 = vadd.f32 0.0, %v3567
        %v3569 = vpop.f32.mrb[0].mxu0
        %3570 = vmatprep.mubr.f32.mxu0 0.0
        %3571 = vmatmul.mubr.f32.gmra.mrb[0].mxu0 %v3368
        %v3572 = vpop.f32.mrb[0].mxu0
        %v3573 = vadd.f32 0.0, %v3572
        %v3574 = vpop.f32.mrb[0].mxu0
        %3575 = vmatprep.mubr.f32.mxu0 0.0
        %3576 = vmatmul.mubr.f32.gmra.mrb[0].mxu0 %v3371
        %v3577 = vpop.f32.mrb[0].mxu0
        %v3578 = vadd.f32 0.0, %v3577
        %v3579 = vpop.f32.mrb[0].mxu0
        %3580 = vmatprep.mubr.f32.mxu0 0.0
        %3581 = vmatmul.mubr.f32.gmra.mrb[0].mxu0 %v3374
        %v3582 = vpop.f32.mrb[0].mxu0
        %v3583 = vadd.f32 0.0, %v3582
        %v3584 = vpop.f32.mrb[0].mxu0
        %3585 = vmatprep.mubr.f32.mxu0 0.0
        %3586 = vmatmul.mubr.f32.gmra.mrb[0].mxu0 %v3377
        %v3587 = vpop.f32.mrb[0].mxu0
        %v3588 = vadd.f32 0.0, %v3587
        %v3589 = vpop.f32.mrb[0].mxu0
        %3590 = vmatprep.mubr.f32.mxu0 0.0
        %3591 = vmatmul.mubr.f32.gmra.mrb[0].mxu0 %v3380
        %v3592 = vpop.f32.mrb[0].mxu0
        %v3593 = vadd.f32 0.0, %v3592
        %v3594 = vpop.f32.mrb[0].mxu0
        %3595 = vmatprep.mubr.f32.mxu0 0.0
        %3596 = vmatmul.mubr.f32.gmra.mrb[0].mxu0 %v3383
        %v3597 = vpop.f32.mrb[0].mxu0
        %v3598 = vadd.f32 0.0, %v3597
        %v3599 = vpop.f32.mrb[0].mxu0
        %3600 = vmatprep.mubr.f32.mxu0 0.0
        %3601 = vmatmul.mubr.f32.gmra.mrb[0].mxu0 %v3386
        %v3602 = vpop.f32.mrb[0].mxu0
        %v3603 = vadd.f32 0.0, %v3602
        %v3604 = vpop.f32.mrb[0].mxu0
        %3605 = vmatprep.mubr.f32.mxu0 0.0
        %3606 = vmatmul.mubr.f32.gmra.mrb[0].mxu0 %v3389
        %v3607 = vpop.f32.mrb[0].mxu0
        %v3608 = vadd.f32 0.0, %v3607
        %v3609 = vpop.f32.mrb[0].mxu0
        %3610 = vmatprep.mubr.f32.mxu0 0.0
        %3611 = vmatmul.mubr.f32.gmra.mrb[0].mxu0 %v3392
        %v3612 = vpop.f32.mrb[0].mxu0
        %v3613 = vadd.f32 0.0, %v3612
        %v3614 = vpop.f32.mrb[0].mxu0
        %3615 = vmatprep.mubr.f32.mxu0 0.0
        %3616 = vmatmul.mubr.f32.gmra.mrb[0].mxu0 %v3395
        %v3617 = vpop.f32.mrb[0].mxu0
        %v3618 = vadd.f32 0.0, %v3617
        %v3619 = vpop.f32.mrb[0].mxu0
        %3620 = vmatprep.mubr.f32.mxu0 0.0
        %3621 = vmatmul.mubr.f32.gmra.mrb[0].mxu0 %v3398
        %v3622 = vpop.f32.mrb[0].mxu0
        %v3623 = vadd.f32 0.0, %v3622
        %v3624 = vpop.f32.mrb[0].mxu0
        %3625 = vmatprep.mubr.f32.mxu0 0.0
        %3626 = vmatmul.mubr.f32.gmra.mrb[0].mxu0 %v3401
        %v3627 = vpop.f32.mrb[0].mxu0
        %v3628 = vadd.f32 0.0, %v3627
        %v3629 = vpop.f32.mrb[0].mxu0
        %3630 = vdwg.mxu0
        %v3631 = vadd.f32 %v3241, %v3473
        %v3632 = vadd.f32 %v3242, %v3478
        %v3633 = vadd.f32 %v3243, %v3483
        %v3634 = vadd.f32 %v3244, %v3488
        %v3635 = vadd.f32 %v3245, %v3493
        %v3636 = vadd.f32 %v3246, %v3498
        %v3637 = vadd.f32 %v3247, %v3503
        %v3638 = vadd.f32 %v3248, %v3508
        %v3639 = vadd.f32 %v3249, %v3513
        %v3640 = vadd.f32 %v3250, %v3518
        %v3641 = vadd.f32 %v3251, %v3523
        %v3642 = vadd.f32 %v3252, %v3528
        %v3643 = vadd.f32 %v3253, %v3533
        %v3644 = vadd.f32 %v3254, %v3538
        %v3645 = vadd.f32 %v3255, %v3543
        %v3646 = vadd.f32 %v3256, %v3548
        %v3647 = vadd.f32 %v3257, %v3553
        %v3648 = vadd.f32 %v3258, %v3558
        %v3649 = vadd.f32 %v3259, %v3563
        %v3650 = vadd.f32 %v3260, %v3568
        %v3651 = vadd.f32 %v3261, %v3573
        %v3652 = vadd.f32 %v3262, %v3578
        %v3653 = vadd.f32 %v3263, %v3583
        %v3654 = vadd.f32 %v3264, %v3588
        %v3655 = vadd.f32 %v3265, %v3593
        %v3656 = vadd.f32 %v3266, %v3598
        %v3657 = vadd.f32 %v3267, %v3603
        %v3658 = vadd.f32 %v3268, %v3608
        %v3659 = vadd.f32 %v3269, %v3613
        %v3660 = vadd.f32 %v3270, %v3618
        %v3661 = vadd.f32 %v3271, %v3623
        %v3662 = vadd.f32 %v3272, %v3628
        %v3663 = vld [vmem:[%s213] sm:$0x1]
        %v3665 = vlaneseq
        %v3666 = vshrl.u32 %v3665, 7
        %v3667 = vsub.s32 0, %v3666
        %v3668 = vrot.slane %v3663, %v3667
        %v3670 = vadd.f32 %v3631, %v3668
        %v3671 = vadd.f32 %v3632, %v3668
        %v3672 = vadd.f32 %v3633, %v3668
        %v3673 = vadd.f32 %v3634, %v3668
        %v3674 = vadd.f32 %v3635, %v3668
        %v3675 = vadd.f32 %v3636, %v3668
        %v3676 = vadd.f32 %v3637, %v3668
        %v3677 = vadd.f32 %v3638, %v3668
        %v3678 = vadd.f32 %v3639, %v3668
        %v3679 = vadd.f32 %v3640, %v3668
        %v3680 = vadd.f32 %v3641, %v3668
        %v3681 = vadd.f32 %v3642, %v3668
        %v3682 = vadd.f32 %v3643, %v3668
        %v3683 = vadd.f32 %v3644, %v3668
        %v3684 = vadd.f32 %v3645, %v3668
        %v3685 = vadd.f32 %v3646, %v3668
        %v3686 = vadd.f32 %v3647, %v3668
        %v3687 = vadd.f32 %v3648, %v3668
        %v3688 = vadd.f32 %v3649, %v3668
        %v3689 = vadd.f32 %v3650, %v3668
        %v3690 = vadd.f32 %v3651, %v3668
        %v3691 = vadd.f32 %v3652, %v3668
        %v3692 = vadd.f32 %v3653, %v3668
        %v3693 = vadd.f32 %v3654, %v3668
        %v3694 = vadd.f32 %v3655, %v3668
        %v3695 = vadd.f32 %v3656, %v3668
        %v3696 = vadd.f32 %v3657, %v3668
        %v3697 = vadd.f32 %v3658, %v3668
        %v3698 = vadd.f32 %v3659, %v3668
        %v3699 = vadd.f32 %v3660, %v3668
        %v3700 = vadd.f32 %v3661, %v3668
        %v3701 = vadd.f32 %v3662, %v3668
        %v3702 = vmax.f32 %v3670, 0.0
        %v3703 = vmax.f32 %v3671, 0.0
        %v3704 = vmax.f32 %v3672, 0.0
        %v3705 = vmax.f32 %v3673, 0.0
        %v3706 = vmax.f32 %v3674, 0.0
        %v3707 = vmax.f32 %v3675, 0.0
        %v3708 = vmax.f32 %v3676, 0.0
        %v3709 = vmax.f32 %v3677, 0.0
        %v3710 = vmax.f32 %v3678, 0.0
        %v3711 = vmax.f32 %v3679, 0.0
        %v3712 = vmax.f32 %v3680, 0.0
        %v3713 = vmax.f32 %v3681, 0.0
        %v3714 = vmax.f32 %v3682, 0.0
        %v3715 = vmax.f32 %v3683, 0.0
        %v3716 = vmax.f32 %v3684, 0.0
        %v3717 = vmax.f32 %v3685, 0.0
        %v3718 = vmax.f32 %v3686, 0.0
        %v3719 = vmax.f32 %v3687, 0.0
        %v3720 = vmax.f32 %v3688, 0.0
        %v3721 = vmax.f32 %v3689, 0.0
        %v3722 = vmax.f32 %v3690, 0.0
        %v3723 = vmax.f32 %v3691, 0.0
        %v3724 = vmax.f32 %v3692, 0.0
        %v3725 = vmax.f32 %v3693, 0.0
        %v3726 = vmax.f32 %v3694, 0.0
        %v3727 = vmax.f32 %v3695, 0.0
        %v3728 = vmax.f32 %v3696, 0.0
        %v3729 = vmax.f32 %v3697, 0.0
        %v3730 = vmax.f32 %v3698, 0.0
        %v3731 = vmax.f32 %v3699, 0.0
        %v3732 = vmax.f32 %v3700, 0.0
        %v3733 = vmax.f32 %v3701, 0.0
        %3734 = vst [vmem:[%s201] sm:$0xff] %v3702
        %3735 = vst [vmem:[%s201 + $0x8] sm:$0xff] %v3703
        %3736 = vst [vmem:[%s201 + $0x10] sm:$0xff] %v3704
        %3737 = vst [vmem:[%s201 + $0x18] sm:$0xff] %v3705
        %3738 = vst [vmem:[%s201 + $0x20] sm:$0xff] %v3706
        %3739 = vst [vmem:[%s201 + $0x28] sm:$0xff] %v3707
        %3740 = vst [vmem:[%s201 + $0x30] sm:$0xff] %v3708
        %3741 = vst [vmem:[%s201 + $0x38] sm:$0xff] %v3709
        %3742 = vst [vmem:[%s201 + $0x40] sm:$0xff] %v3710
        %3743 = vst [vmem:[%s201 + $0x48] sm:$0xff] %v3711
        %3744 = vst [vmem:[%s201 + $0x50] sm:$0xff] %v3712
        %3745 = vst [vmem:[%s201 + $0x58] sm:$0xff] %v3713
        %3746 = vst [vmem:[%s201 + $0x60] sm:$0xff] %v3714
        %3747 = vst [vmem:[%s201 + $0x68] sm:$0xff] %v3715
        %3748 = vst [vmem:[%s201 + $0x70] sm:$0xff] %v3716
        %3749 = vst [vmem:[%s201 + $0x78] sm:$0xff] %v3717
        %3750 = vst [vmem:[%s201 + $0x80] sm:$0xff] %v3718
        %3751 = vst [vmem:[%s201 + $0x88] sm:$0xff] %v3719
        %3752 = vst [vmem:[%s201 + $0x90] sm:$0xff] %v3720
        %3753 = vst [vmem:[%s201 + $0x98] sm:$0xff] %v3721
        %3754 = vst [vmem:[%s201 + $0xa0] sm:$0xff] %v3722
        %3755 = vst [vmem:[%s201 + $0xa8] sm:$0xff] %v3723
        %3756 = vst [vmem:[%s201 + $0xb0] sm:$0xff] %v3724
        %3757 = vst [vmem:[%s201 + $0xb8] sm:$0xff] %v3725
        %3758 = vst [vmem:[%s201 + $0xc0] sm:$0xff] %v3726
        %3759 = vst [vmem:[%s201 + $0xc8] sm:$0xff] %v3727
        %3760 = vst [vmem:[%s201 + $0xd0] sm:$0xff] %v3728
        %3761 = vst [vmem:[%s201 + $0xd8] sm:$0xff] %v3729
        %3762 = vst [vmem:[%s201 + $0xe0] sm:$0xff] %v3730
        %3763 = vst [vmem:[%s201 + $0xe8] sm:$0xff] %v3731
        %3764 = vst [vmem:[%s201 + $0xf0] sm:$0xff] %v3732
        %3765 = vst [vmem:[%s201 + $0xf8] sm:$0xff] %v3733
        %s3766 = sand.u32 %s117, 1
        %s3767 = scalar_lea.sflag [#allocation3], %s3766
        %s3768 = sand.u32 %s117, 1
        %s3769 = smul.addr %s3768, 256
        %s3770 = scalar_lea.vmem [#allocation2], %s3769
        // Predicated region
        $region33: #{tpu_custom_call.1} parent=31 // pred_check
          %p3771 = pneg %p127
        $region34: #{tpu_custom_call.1} parent=31 // pred_check_branch
          %3773 = sbr.rel (%p3771) target = $region36
        $region35: #{tpu_custom_call.1} parent=31 // pred_region
          %s3775 = ssub.s32 4096, 4096
          %3776 = vsyncadd %s3767, %s3775
          %s3777 = smul.addr %s21, 32
          %s3778 = sadd.s32 %s22, %s3777
          %s3779 = smul.addr %s3778, 128
          %s3780 = scalar_lea.hbm %s3, %s3779
          %s3781 = sshll.u32 %s3770, 4
          %s3782 = int_to_ptr.vmem [resolvable:$true] %s3781
          %3787 = dma.vmem_to_hbm [thread:$0]  %s3782, 4096, %s3780, %s3767, 128, 128, 8
        $region36: #{tpu_custom_call.1} parent=31 // pred_fallthru
          _
      $region32: #{tpu_custom_call.1} parent=5 // pred_fallthru
        _
      %p3788 = scmp.le.s32.totalorder 2, %s12
      // Predicated region
      $region37: #{tpu_custom_call.1} parent=5 // pred_check
        %p3789 = pneg %p3788
      $region38: #{tpu_custom_call.1} parent=5 // pred_check_branch
        %3791 = sbr.rel (%p3789) target = $region40
      $region39: #{tpu_custom_call.1} parent=5 // pred_region
        %s3792 = ssub.s32 %s12, 2
        // Predicated region
        $region41: #{tpu_custom_call.1} parent=39 // pred_check
          %p3793 = pneg %p133
        $region42: #{tpu_custom_call.1} parent=39 // pred_check_branch
          %3795 = sbr.rel (%p3793) target = $region44
        $region43: #{tpu_custom_call.1} parent=39 // pred_region
          %s3796 = sand.u32 %s118, 1
          %s3797 = scalar_lea.sflag [#allocation3], %s3796
          %s3798 = sand.u32 %s118, 1
          %s3799 = smul.addr %s3798, 256
          %s3800 = scalar_lea.vmem [#allocation2], %s3799
          %3801 = dma.done %s3797, 4096
        $region44: #{tpu_custom_call.1} parent=39 // pred_fallthru
          _
      $region40: #{tpu_custom_call.1} parent=5 // pred_fallthru
        _
    $region6: #{tpu_custom_call.1} parent=1 // loop_footer
      %s16 = sadd.s32 1, %s12
    $region7: #{tpu_custom_call.1} parent=1 // loop_footer_branch
      %11 = sbr.rel target = $region3
    $region8: #{tpu_custom_call.1} parent=1 // loop_exit
      _
    %3802 = vsyncpa [#allocation3], 1
    %s3803 = scalar_lea.sflag [#allocation3], 1
    %3804 = vsyncpa %s3803, 1

</llo_original>
